<compile_context>
chip_gen: v5e
topology: v5e:2x2
jax: 0.10.0
libtpu: 0.0.40
codegen_flags: <defaults>
</compile_context>

<pallas_src>
import functools
import math

import jax
import jax.numpy as jnp
from jax.experimental import pallas as pl
from jax.experimental.pallas import tpu as pltpu


# ---------------------------------------------------------------------------
# Pallas kernel: MH self-attention + self-attend pooling for a block of TB titles.
# ---------------------------------------------------------------------------
def _title_encoder_kernel(
    x_ref,       # (TB, L, E)   word embeddings for this block of titles
    wqkv_ref,    # (E, 3*HD)    fused Wq|Wk|Wv (compute dtype)
    bqkv_ref,    # (1, 3*HD)    fused bq|bk|bv (f32)
    w1_ref,      # (HD, HD)     self-attend hidden proj (compute dtype)
    b1_ref,      # (1, HD)      (f32)
    w2_ref,      # (HD, 1)      self-attend gate (f32)
    b2_ref,      # (1, 1)       (f32)
    out_ref,     # (TB, HD)     pooled representations (f32)
    *,
    heads_num: int,
    head_size: int,
):
    TB, L, E = x_ref.shape
    HD = heads_num * head_size

    x = x_ref[...]                                 # [TB, L, E]
    xf = x.reshape(TB * L, E)

    # --- fused Q/K/V projection: one MXU matmul with M = TB*L, N = 3*HD ---
    qkv = jnp.dot(xf, wqkv_ref[...], preferred_element_type=jnp.float32)
    qkv = qkv + bqkv_ref[...]                      # [TB*L, 3*HD] f32

    q = qkv[:, 0 * HD:1 * HD].reshape(TB, L, HD)
    k = qkv[:, 1 * HD:2 * HD].reshape(TB, L, HD)
    v = qkv[:, 2 * HD:3 * HD].reshape(TB, L, HD)

    inv_sqrt_d = 1.0 / math.sqrt(float(head_size))

    # --- per-head scaled dot-product attention, batched over the TB sequences ---
    ctx = []
    for h in range(heads_num):
        lo = h * head_size
        hi = lo + head_size
        qh = q[:, :, lo:hi]                        # [TB, L, D]
        kh = k[:, :, lo:hi]                        # [TB, L, D]
        vh = v[:, :, lo:hi]                        # [TB, L, D]

        s = jnp.einsum("bqd,bkd->bqk", qh, kh,
                       preferred_element_type=jnp.float32) * inv_sqrt_d
        s = s - jnp.max(s, axis=-1, keepdims=True)
        p = jnp.exp(s)
        p = p * pl.reciprocal(jnp.sum(p, axis=-1, keepdims=True), approx=True)
        ctx.append(jnp.einsum("bqk,bkd->bqd", p, vh,
                              preferred_element_type=jnp.float32))

    # Head concat kept in registers (== torch "unshape"): [TB, L, HD] f32.
    hiddens = jnp.concatenate(ctx, axis=-1)

    # --- SelfAttendLayer: softmax(tanh(h@W1+b1)@w2+b2) over seq, weighted sum ---
    hf = hiddens.reshape(TB * L, HD)
    a = jnp.tanh(jnp.dot(hf.astype(w1_ref.dtype), w1_ref[...],
                         preferred_element_type=jnp.float32) + b1_ref[...])
    g = jnp.dot(a, w2_ref[...], preferred_element_type=jnp.float32) + b2_ref[...]
    g = g.reshape(TB, L, 1)
    g = g - jnp.max(g, axis=1, keepdims=True)
    pw = jnp.exp(g)
    pw = pw * pl.reciprocal(jnp.sum(pw, axis=1, keepdims=True), approx=True)

    out_ref[...] = jnp.sum(pw * hiddens, axis=1).astype(out_ref.dtype)


# ---------------------------------------------------------------------------
# Wrapper: fuse QKV weights, pad batch to a multiple of the block size, launch.
# ---------------------------------------------------------------------------
def title_encoder_attention(embs, params, *, heads_num, head_size,
                            block_b=8, compute_dtype=jnp.float32):
    """embs: [B, L, E] float32 -> reps: [B, heads_num*head_size] float32."""
    B, L, E = embs.shape
    HD = heads_num * head_size

    # Fused QKV weights/biases (one MXU matmul instead of three).
    wqkv = jnp.concatenate([params["wq"], params["wk"], params["wv"]],
                           axis=1).astype(compute_dtype)
    bqkv = jnp.concatenate([params["bq"], params["bk"], params["bv"]],
                           axis=1).astype(jnp.float32)
    w1 = params["w1"].astype(compute_dtype)
    b1 = params["b1"].astype(jnp.float32)
    w2 = params["w2"].astype(jnp.float32)
    b2 = params["b2"].astype(jnp.float32)

    tb = block_b
    Bp = ((B + tb - 1) // tb) * tb
    x = embs.astype(compute_dtype)
    if Bp != B:
        # Zero-padded rows are safe: equal scores -> uniform softmax, no NaNs.
        x = jnp.pad(x, ((0, Bp - B), (0, 0), (0, 0)))

    kernel = functools.partial(
        _title_encoder_kernel, heads_num=heads_num, head_size=head_size
    )

    def rep(shape):  # whole-array block, constant index map (resident weights)
        return pl.BlockSpec(shape, lambda b, _s=shape: tuple(0 for _ in _s))

    out = pl.pallas_call(
        kernel,
        out_shape=jax.ShapeDtypeStruct((Bp, HD), jnp.float32),
        grid_spec=pltpu.PrefetchScalarGridSpec(
            num_scalar_prefetch=0,
            grid=(Bp // tb,),
            in_specs=[
                pl.BlockSpec((tb, L, E), lambda b: (b, 0, 0)),   # embs block
                rep((E, 3 * HD)), rep((1, 3 * HD)),              # Wqkv, bqkv
                rep((HD, HD)), rep((1, HD)),                     # W1, b1
                rep((HD, 1)), rep((1, 1)),                       # w2, b2
            ],
            out_specs=pl.BlockSpec((tb, HD), lambda b: (b, 0)),
        ),
        compiler_params=pltpu.CompilerParams(
            dimension_semantics=("parallel",)),                  # independent batch rows
    )(x, wqkv, bqkv, w1, b1, w2, b2)
    return out[:B]


# ---------------------------------------------------------------------------
# Pure-JAX reference (for correctness check of the kernel).
# ---------------------------------------------------------------------------
def title_encoder_attention_ref(embs, params, *, heads_num, head_size):
    B, L, E = embs.shape
    q = embs @ params["wq"] + params["bq"]
    k = embs @ params["wk"] + params["bk"]
    v = embs @ params["wv"] + params["bv"]
    q = q.reshape(B, L, heads_num, head_size).transpose(0, 2, 1, 3)
    k = k.reshape(B, L, heads_num, head_size).transpose(0, 2, 1, 3)
    v = v.reshape(B, L, heads_num, head_size).transpose(0, 2, 1, 3)
    scores = jnp.einsum("bhqd,bhkd->bhqk", q, k) / math.sqrt(float(head_size))
    probs = jax.nn.softmax(scores, axis=-1)
    hiddens = jnp.einsum("bhqk,bhkd->bhqd", probs, v)
    hiddens = hiddens.transpose(0, 2, 1, 3).reshape(B, L, heads_num * head_size)
    a = jnp.tanh(hiddens @ params["w1"] + params["b1"])
    g = (a @ params["w2"] + params["b2"])[..., 0]          # [B, L]
    p = jax.nn.softmax(g, axis=-1)
    return jnp.einsum("bl,blh->bh", p, hiddens)


# ---------------------------------------------------------------------------
# Full TitleEncoder forward: embedding lookups (glue) + Pallas attention kernel.
# ---------------------------------------------------------------------------
def title_encoder_forward(seqs, title_embedding, word_embedding, params,
                          *, heads_num, head_size, block_b=8,
                          compute_dtype=jnp.float32):
    titles = jnp.take(title_embedding, seqs, axis=0)          # [B, L]
    embs = jnp.take(word_embedding, titles, axis=0)           # [B, L, E]
    # dropout is identity in eval mode.
    return title_encoder_attention(embs, params, heads_num=heads_num,
                                   head_size=head_size, block_b=block_b,
                                   compute_dtype=compute_dtype)


if __name__ == "__main__":
    # --- small, module-consistent config ---
    B = 12           # number of title ids in `seqs` (not a multiple of TB -> tests padding)
    L = 8            # title length (tokens per title)
    E = 32           # word_embedding_size
    HEADS = 4        # transformer.heads_num
    HSZ = 8          # transformer.head_size
    HD = HEADS * HSZ
    VOCAB = 50
    NUM_TITLES = 20
    TB = 8           # titles per grid step

    key = jax.random.PRNGKey(0)
    keys = jax.random.split(key, 16)

    title_embedding = jax.random.randint(keys[0], (NUM_TITLES, L), 0, VOCAB,
                                         dtype=jnp.int32)
    word_embedding = jax.random.normal(keys[1], (VOCAB, E), dtype=jnp.float32) * 0.1

    def lin(kw, kb, fan_in, fan_out):
        bound = 1.0 / math.sqrt(fan_in)
        w = jax.random.uniform(kw, (fan_in, fan_out), jnp.float32, -bound, bound)
        b = jax.random.uniform(kb, (1, fan_out), jnp.float32, -bound, bound)
        return w, b

    wq, bq = lin(keys[2], keys[3], E, HD)
    wk, bk = lin(keys[4], keys[5], E, HD)
    wv, bv = lin(keys[6], keys[7], E, HD)
    w1, b1 = lin(keys[8], keys[9], HD, HD)
    w2, b2 = lin(keys[10], keys[11], HD, 1)
    params = dict(wq=wq, bq=bq, wk=wk, bk=bk, wv=wv, bv=bv,
                  w1=w1, b1=b1, w2=w2, b2=b2)

    seqs = jax.random.randint(keys[12], (B,), 0, NUM_TITLES, dtype=jnp.int32)

    # Reference (pure JAX, f32).
    titles = jnp.take(title_embedding, seqs, axis=0)
    embs = jnp.take(word_embedding, titles, axis=0)
    ref = title_encoder_attention_ref(embs, params, heads_num=HEADS, head_size=HSZ)

    # f32 compute path (tight check).
    reps_f32 = title_encoder_forward(
        seqs, title_embedding, word_embedding, params,
        heads_num=HEADS, head_size=HSZ, block_b=TB, compute_dtype=jnp.float32)
    reps_f32 = jax.block_until_ready(reps_f32)
    assert reps_f32.shape == (B, HD), reps_f32.shape
    err32 = float(jnp.max(jnp.abs(reps_f32 - ref)))
    assert jnp.allclose(reps_f32, ref, rtol=5e-3, atol=5e-3), err32

    # bf16 compute path (MXU-friendly on v6e/v7x); looser tolerance.
    reps_bf16 = title_encoder_forward(
        seqs, title_embedding, word_embedding, params,
        heads_num=HEADS, head_size=HSZ, block_b=TB, compute_dtype=jnp.bfloat16)
    reps_bf16 = jax.block_until_ready(reps_bf16)
    assert reps_bf16.shape == (B, HD), reps_bf16.shape
    err16 = float(jnp.max(jnp.abs(reps_bf16 - ref)))
    assert jnp.allclose(reps_bf16, ref, rtol=3e-2, atol=3e-2), err16

    print("KERNEL_OK")
</pallas_src>

<mosaic_0001>
module attributes {stable_mosaic.version = 11 : i64} {
  func.func @_title_encoder_kernel(%arg0: i32, %arg1: memref<8x8x32xf32, #tpu.memory_space<vmem>>, %arg2: memref<32x96xf32, #tpu.memory_space<vmem>>, %arg3: memref<1x96xf32, #tpu.memory_space<vmem>>, %arg4: memref<32x32xf32, #tpu.memory_space<vmem>>, %arg5: memref<1x32xf32, #tpu.memory_space<vmem>>, %arg6: memref<32x1xf32, #tpu.memory_space<vmem>>, %arg7: memref<1x1xf32, #tpu.memory_space<vmem>>, %arg8: memref<8x32xf32, #tpu.memory_space<vmem>>) attributes {dimension_semantics = [#tpu.dimension_semantics<parallel>], iteration_bounds = array<i64: 2>, scalar_prefetch = 0 : i64, scratch_operands = 0 : i64, tpu.core_type = #tpu.core_type<tc>, window_params = [{transform_indices = @transform_0, window_bounds = array<i64: 8, 8, 32>}, {pipeline_mode = #tpu.pipeline_mode<synchronous>, transform_indices = @transform_1, window_bounds = array<i64: 32, 96>}, {pipeline_mode = #tpu.pipeline_mode<synchronous>, transform_indices = @transform_2, window_bounds = array<i64: 1, 96>}, {pipeline_mode = #tpu.pipeline_mode<synchronous>, transform_indices = @transform_3, window_bounds = array<i64: 32, 32>}, {pipeline_mode = #tpu.pipeline_mode<synchronous>, transform_indices = @transform_4, window_bounds = array<i64: 1, 32>}, {pipeline_mode = #tpu.pipeline_mode<synchronous>, transform_indices = @transform_5, window_bounds = array<i64: 32, 1>}, {pipeline_mode = #tpu.pipeline_mode<synchronous>, transform_indices = @transform_6, window_bounds = array<i64: 1, 1>}, {transform_indices = @transform_7, window_bounds = array<i64: 8, 32>}]} {
    %c0 = arith.constant 0 : index
    %c0_0 = arith.constant 0 : index
    %c0_1 = arith.constant 0 : index
    %0 = vector.load %arg1[%c0, %c0_0, %c0_1] : memref<8x8x32xf32, #tpu.memory_space<vmem>>, vector<8x8x32xf32>
    %1 = vector.shape_cast %0 : vector<8x8x32xf32> to vector<64x32xf32>
    %c0_2 = arith.constant 0 : index
    %c0_3 = arith.constant 0 : index
    %2 = vector.load %arg2[%c0_2, %c0_3] : memref<32x96xf32, #tpu.memory_space<vmem>>, vector<32x96xf32>
    %cst = arith.constant dense<0.000000e+00> : vector<64x96xf32>
    %3 = tpu.matmul %1, %2, %cst {dimension_numbers = #tpu.dot_dimension_numbers<[1], [0], [0], [1], [0, 0, 1, 1], [], []>} : vector<64x32xf32>, vector<32x96xf32>, vector<64x96xf32> -> vector<64x96xf32>
    %c0_4 = arith.constant 0 : index
    %c0_5 = arith.constant 0 : index
    %4 = vector.load %arg3[%c0_4, %c0_5] : memref<1x96xf32, #tpu.memory_space<vmem>>, vector<1x96xf32>
    %5 = vector.broadcast %4 : vector<1x96xf32> to vector<64x96xf32>
    %6 = arith.addf %3, %5 : vector<64x96xf32>
    %7 = vector.extract_strided_slice %6 {offsets = [0, 0], sizes = [64, 32], strides = [1, 1]} : vector<64x96xf32> to vector<64x32xf32>
    %8 = vector.shape_cast %7 : vector<64x32xf32> to vector<8x8x32xf32>
    %9 = vector.extract_strided_slice %6 {offsets = [0, 32], sizes = [64, 32], strides = [1, 1]} : vector<64x96xf32> to vector<64x32xf32>
    %10 = vector.shape_cast %9 : vector<64x32xf32> to vector<8x8x32xf32>
    %11 = vector.extract_strided_slice %6 {offsets = [0, 64], sizes = [64, 32], strides = [1, 1]} : vector<64x96xf32> to vector<64x32xf32>
    %12 = vector.shape_cast %11 : vector<64x32xf32> to vector<8x8x32xf32>
    %13 = vector.extract_strided_slice %8 {offsets = [0, 0, 0], sizes = [8, 8, 8], strides = [1, 1, 1]} : vector<8x8x32xf32> to vector<8x8x8xf32>
    %14 = vector.extract_strided_slice %10 {offsets = [0, 0, 0], sizes = [8, 8, 8], strides = [1, 1, 1]} : vector<8x8x32xf32> to vector<8x8x8xf32>
    %15 = vector.extract_strided_slice %12 {offsets = [0, 0, 0], sizes = [8, 8, 8], strides = [1, 1, 1]} : vector<8x8x32xf32> to vector<8x8x8xf32>
    "tpu.trace_start"() <{level = 10 : i32, message = "bqd,bkd->bqk"}> : () -> ()
    %cst_6 = arith.constant dense<0.000000e+00> : vector<8x8x8xf32>
    %16 = tpu.matmul %13, %14, %cst_6 {dimension_numbers = #tpu.dot_dimension_numbers<[2], [2], [1], [1], [0, 0, 0, 1, 1, 1], [0], [0]>} : vector<8x8x8xf32>, vector<8x8x8xf32>, vector<8x8x8xf32> -> vector<8x8x8xf32>
    "tpu.trace_stop"() : () -> ()
    %cst_7 = arith.constant 0.353553385 : f32
    %17 = vector.broadcast %cst_7 : f32 to vector<8x8x8xf32>
    %18 = arith.mulf %16, %17 : vector<8x8x8xf32>
    %cst_8 = arith.constant dense<0xFF800000> : vector<8x8xf32>
    %19 = vector.multi_reduction <maximumf>, %18, %cst_8 [2] : vector<8x8x8xf32> to vector<8x8xf32>
    %20 = vector.shape_cast %19 : vector<8x8xf32> to vector<8x8x1xf32>
    %21 = vector.broadcast %20 : vector<8x8x1xf32> to vector<8x8x8xf32>
    %22 = arith.subf %18, %21 : vector<8x8x8xf32>
    %23 = math.exp %22 : vector<8x8x8xf32>
    %cst_9 = arith.constant dense<0.000000e+00> : vector<8x8xf32>
    %24 = vector.multi_reduction <add>, %23, %cst_9 [2] : vector<8x8x8xf32> to vector<8x8xf32>
    %25 = vector.shape_cast %24 : vector<8x8xf32> to vector<8x8x1xf32>
    %26 = tpu.reciprocal %25 {approx = true} : vector<8x8x1xf32> -> vector<8x8x1xf32>
    %27 = vector.broadcast %26 : vector<8x8x1xf32> to vector<8x8x8xf32>
    %28 = arith.mulf %23, %27 : vector<8x8x8xf32>
    "tpu.trace_start"() <{level = 10 : i32, message = "bqk,bkd->bqd"}> : () -> ()
    %cst_10 = arith.constant dense<0.000000e+00> : vector<8x8x8xf32>
    %29 = tpu.matmul %28, %15, %cst_10 {dimension_numbers = #tpu.dot_dimension_numbers<[2], [1], [1], [2], [0, 0, 0, 1, 1, 2], [0], [0]>} : vector<8x8x8xf32>, vector<8x8x8xf32>, vector<8x8x8xf32> -> vector<8x8x8xf32>
    "tpu.trace_stop"() : () -> ()
    %30 = vector.extract_strided_slice %8 {offsets = [0, 0, 8], sizes = [8, 8, 8], strides = [1, 1, 1]} : vector<8x8x32xf32> to vector<8x8x8xf32>
    %31 = vector.extract_strided_slice %10 {offsets = [0, 0, 8], sizes = [8, 8, 8], strides = [1, 1, 1]} : vector<8x8x32xf32> to vector<8x8x8xf32>
    %32 = vector.extract_strided_slice %12 {offsets = [0, 0, 8], sizes = [8, 8, 8], strides = [1, 1, 1]} : vector<8x8x32xf32> to vector<8x8x8xf32>
    "tpu.trace_start"() <{level = 10 : i32, message = "bqd,bkd->bqk"}> : () -> ()
    %cst_11 = arith.constant dense<0.000000e+00> : vector<8x8x8xf32>
    %33 = tpu.matmul %30, %31, %cst_11 {dimension_numbers = #tpu.dot_dimension_numbers<[2], [2], [1], [1], [0, 0, 0, 1, 1, 1], [0], [0]>} : vector<8x8x8xf32>, vector<8x8x8xf32>, vector<8x8x8xf32> -> vector<8x8x8xf32>
    "tpu.trace_stop"() : () -> ()
    %cst_12 = arith.constant 0.353553385 : f32
    %34 = vector.broadcast %cst_12 : f32 to vector<8x8x8xf32>
    %35 = arith.mulf %33, %34 : vector<8x8x8xf32>
    %cst_13 = arith.constant dense<0xFF800000> : vector<8x8xf32>
    %36 = vector.multi_reduction <maximumf>, %35, %cst_13 [2] : vector<8x8x8xf32> to vector<8x8xf32>
    %37 = vector.shape_cast %36 : vector<8x8xf32> to vector<8x8x1xf32>
    %38 = vector.broadcast %37 : vector<8x8x1xf32> to vector<8x8x8xf32>
    %39 = arith.subf %35, %38 : vector<8x8x8xf32>
    %40 = math.exp %39 : vector<8x8x8xf32>
    %cst_14 = arith.constant dense<0.000000e+00> : vector<8x8xf32>
    %41 = vector.multi_reduction <add>, %40, %cst_14 [2] : vector<8x8x8xf32> to vector<8x8xf32>
    %42 = vector.shape_cast %41 : vector<8x8xf32> to vector<8x8x1xf32>
    %43 = tpu.reciprocal %42 {approx = true} : vector<8x8x1xf32> -> vector<8x8x1xf32>
    %44 = vector.broadcast %43 : vector<8x8x1xf32> to vector<8x8x8xf32>
    %45 = arith.mulf %40, %44 : vector<8x8x8xf32>
    "tpu.trace_start"() <{level = 10 : i32, message = "bqk,bkd->bqd"}> : () -> ()
    %cst_15 = arith.constant dense<0.000000e+00> : vector<8x8x8xf32>
    %46 = tpu.matmul %45, %32, %cst_15 {dimension_numbers = #tpu.dot_dimension_numbers<[2], [1], [1], [2], [0, 0, 0, 1, 1, 2], [0], [0]>} : vector<8x8x8xf32>, vector<8x8x8xf32>, vector<8x8x8xf32> -> vector<8x8x8xf32>
    "tpu.trace_stop"() : () -> ()
    %47 = vector.extract_strided_slice %8 {offsets = [0, 0, 16], sizes = [8, 8, 8], strides = [1, 1, 1]} : vector<8x8x32xf32> to vector<8x8x8xf32>
    %48 = vector.extract_strided_slice %10 {offsets = [0, 0, 16], sizes = [8, 8, 8], strides = [1, 1, 1]} : vector<8x8x32xf32> to vector<8x8x8xf32>
    %49 = vector.extract_strided_slice %12 {offsets = [0, 0, 16], sizes = [8, 8, 8], strides = [1, 1, 1]} : vector<8x8x32xf32> to vector<8x8x8xf32>
    "tpu.trace_start"() <{level = 10 : i32, message = "bqd,bkd->bqk"}> : () -> ()
    %cst_16 = arith.constant dense<0.000000e+00> : vector<8x8x8xf32>
    %50 = tpu.matmul %47, %48, %cst_16 {dimension_numbers = #tpu.dot_dimension_numbers<[2], [2], [1], [1], [0, 0, 0, 1, 1, 1], [0], [0]>} : vector<8x8x8xf32>, vector<8x8x8xf32>, vector<8x8x8xf32> -> vector<8x8x8xf32>
    "tpu.trace_stop"() : () -> ()
    %cst_17 = arith.constant 0.353553385 : f32
    %51 = vector.broadcast %cst_17 : f32 to vector<8x8x8xf32>
    %52 = arith.mulf %50, %51 : vector<8x8x8xf32>
    %cst_18 = arith.constant dense<0xFF800000> : vector<8x8xf32>
    %53 = vector.multi_reduction <maximumf>, %52, %cst_18 [2] : vector<8x8x8xf32> to vector<8x8xf32>
    %54 = vector.shape_cast %53 : vector<8x8xf32> to vector<8x8x1xf32>
    %55 = vector.broadcast %54 : vector<8x8x1xf32> to vector<8x8x8xf32>
    %56 = arith.subf %52, %55 : vector<8x8x8xf32>
    %57 = math.exp %56 : vector<8x8x8xf32>
    %cst_19 = arith.constant dense<0.000000e+00> : vector<8x8xf32>
    %58 = vector.multi_reduction <add>, %57, %cst_19 [2] : vector<8x8x8xf32> to vector<8x8xf32>
    %59 = vector.shape_cast %58 : vector<8x8xf32> to vector<8x8x1xf32>
    %60 = tpu.reciprocal %59 {approx = true} : vector<8x8x1xf32> -> vector<8x8x1xf32>
    %61 = vector.broadcast %60 : vector<8x8x1xf32> to vector<8x8x8xf32>
    %62 = arith.mulf %57, %61 : vector<8x8x8xf32>
    "tpu.trace_start"() <{level = 10 : i32, message = "bqk,bkd->bqd"}> : () -> ()
    %cst_20 = arith.constant dense<0.000000e+00> : vector<8x8x8xf32>
    %63 = tpu.matmul %62, %49, %cst_20 {dimension_numbers = #tpu.dot_dimension_numbers<[2], [1], [1], [2], [0, 0, 0, 1, 1, 2], [0], [0]>} : vector<8x8x8xf32>, vector<8x8x8xf32>, vector<8x8x8xf32> -> vector<8x8x8xf32>
    "tpu.trace_stop"() : () -> ()
    %64 = vector.extract_strided_slice %8 {offsets = [0, 0, 24], sizes = [8, 8, 8], strides = [1, 1, 1]} : vector<8x8x32xf32> to vector<8x8x8xf32>
    %65 = vector.extract_strided_slice %10 {offsets = [0, 0, 24], sizes = [8, 8, 8], strides = [1, 1, 1]} : vector<8x8x32xf32> to vector<8x8x8xf32>
    %66 = vector.extract_strided_slice %12 {offsets = [0, 0, 24], sizes = [8, 8, 8], strides = [1, 1, 1]} : vector<8x8x32xf32> to vector<8x8x8xf32>
    "tpu.trace_start"() <{level = 10 : i32, message = "bqd,bkd->bqk"}> : () -> ()
    %cst_21 = arith.constant dense<0.000000e+00> : vector<8x8x8xf32>
    %67 = tpu.matmul %64, %65, %cst_21 {dimension_numbers = #tpu.dot_dimension_numbers<[2], [2], [1], [1], [0, 0, 0, 1, 1, 1], [0], [0]>} : vector<8x8x8xf32>, vector<8x8x8xf32>, vector<8x8x8xf32> -> vector<8x8x8xf32>
    "tpu.trace_stop"() : () -> ()
    %cst_22 = arith.constant 0.353553385 : f32
    %68 = vector.broadcast %cst_22 : f32 to vector<8x8x8xf32>
    %69 = arith.mulf %67, %68 : vector<8x8x8xf32>
    %cst_23 = arith.constant dense<0xFF800000> : vector<8x8xf32>
    %70 = vector.multi_reduction <maximumf>, %69, %cst_23 [2] : vector<8x8x8xf32> to vector<8x8xf32>
    %71 = vector.shape_cast %70 : vector<8x8xf32> to vector<8x8x1xf32>
    %72 = vector.broadcast %71 : vector<8x8x1xf32> to vector<8x8x8xf32>
    %73 = arith.subf %69, %72 : vector<8x8x8xf32>
    %74 = math.exp %73 : vector<8x8x8xf32>
    %cst_24 = arith.constant dense<0.000000e+00> : vector<8x8xf32>
    %75 = vector.multi_reduction <add>, %74, %cst_24 [2] : vector<8x8x8xf32> to vector<8x8xf32>
    %76 = vector.shape_cast %75 : vector<8x8xf32> to vector<8x8x1xf32>
    %77 = tpu.reciprocal %76 {approx = true} : vector<8x8x1xf32> -> vector<8x8x1xf32>
    %78 = vector.broadcast %77 : vector<8x8x1xf32> to vector<8x8x8xf32>
    %79 = arith.mulf %74, %78 : vector<8x8x8xf32>
    "tpu.trace_start"() <{level = 10 : i32, message = "bqk,bkd->bqd"}> : () -> ()
    %cst_25 = arith.constant dense<0.000000e+00> : vector<8x8x8xf32>
    %80 = tpu.matmul %79, %66, %cst_25 {dimension_numbers = #tpu.dot_dimension_numbers<[2], [1], [1], [2], [0, 0, 0, 1, 1, 2], [0], [0]>} : vector<8x8x8xf32>, vector<8x8x8xf32>, vector<8x8x8xf32> -> vector<8x8x8xf32>
    "tpu.trace_stop"() : () -> ()
    %81 = tpu.concatenate %29, %46, %63, %80 in 2 : vector<8x8x8xf32>, vector<8x8x8xf32>, vector<8x8x8xf32>, vector<8x8x8xf32> -> vector<8x8x32xf32>
    %82 = vector.shape_cast %81 : vector<8x8x32xf32> to vector<64x32xf32>
    %c0_26 = arith.constant 0 : index
    %c0_27 = arith.constant 0 : index
    %83 = vector.load %arg4[%c0_26, %c0_27] : memref<32x32xf32, #tpu.memory_space<vmem>>, vector<32x32xf32>
    %cst_28 = arith.constant dense<0.000000e+00> : vector<64x32xf32>
    %84 = tpu.matmul %82, %83, %cst_28 {dimension_numbers = #tpu.dot_dimension_numbers<[1], [0], [0], [1], [0, 0, 1, 1], [], []>} : vector<64x32xf32>, vector<32x32xf32>, vector<64x32xf32> -> vector<64x32xf32>
    %c0_29 = arith.constant 0 : index
    %c0_30 = arith.constant 0 : index
    %85 = vector.load %arg5[%c0_29, %c0_30] : memref<1x32xf32, #tpu.memory_space<vmem>>, vector<1x32xf32>
    %86 = vector.broadcast %85 : vector<1x32xf32> to vector<64x32xf32>
    %87 = arith.addf %84, %86 : vector<64x32xf32>
    %88 = math.tanh %87 : vector<64x32xf32>
    %c0_31 = arith.constant 0 : index
    %c0_32 = arith.constant 0 : index
    %89 = vector.load %arg6[%c0_31, %c0_32] : memref<32x1xf32, #tpu.memory_space<vmem>>, vector<32x1xf32>
    %cst_33 = arith.constant dense<0.000000e+00> : vector<64x1xf32>
    %90 = tpu.matmul %88, %89, %cst_33 {dimension_numbers = #tpu.dot_dimension_numbers<[1], [0], [0], [1], [0, 0, 1, 1], [], []>} : vector<64x32xf32>, vector<32x1xf32>, vector<64x1xf32> -> vector<64x1xf32>
    %c0_34 = arith.constant 0 : index
    %c0_35 = arith.constant 0 : index
    %91 = vector.load %arg7[%c0_34, %c0_35] : memref<1x1xf32, #tpu.memory_space<vmem>>, vector<1x1xf32>
    %92 = vector.broadcast %91 : vector<1x1xf32> to vector<64x1xf32>
    %93 = arith.addf %90, %92 : vector<64x1xf32>
    %94 = vector.shape_cast %93 : vector<64x1xf32> to vector<8x8x1xf32>
    %cst_36 = arith.constant dense<0xFF800000> : vector<8x1xf32>
    %95 = vector.multi_reduction <maximumf>, %94, %cst_36 [1] : vector<8x8x1xf32> to vector<8x1xf32>
    %96 = vector.shape_cast %95 : vector<8x1xf32> to vector<8x1x1xf32>
    %97 = vector.broadcast %96 : vector<8x1x1xf32> to vector<8x8x1xf32>
    %98 = arith.subf %94, %97 : vector<8x8x1xf32>
    %99 = math.exp %98 : vector<8x8x1xf32>
    %cst_37 = arith.constant dense<0.000000e+00> : vector<8x1xf32>
    %100 = vector.multi_reduction <add>, %99, %cst_37 [1] : vector<8x8x1xf32> to vector<8x1xf32>
    %101 = vector.shape_cast %100 : vector<8x1xf32> to vector<8x1x1xf32>
    %102 = tpu.reciprocal %101 {approx = true} : vector<8x1x1xf32> -> vector<8x1x1xf32>
    %103 = vector.broadcast %102 : vector<8x1x1xf32> to vector<8x8x1xf32>
    %104 = arith.mulf %99, %103 : vector<8x8x1xf32>
    %105 = vector.broadcast %104 : vector<8x8x1xf32> to vector<8x8x32xf32>
    %106 = arith.mulf %105, %81 : vector<8x8x32xf32>
    %cst_38 = arith.constant dense<0.000000e+00> : vector<8x32xf32>
    %107 = vector.multi_reduction <add>, %106, %cst_38 [1] : vector<8x8x32xf32> to vector<8x32xf32>
    %c0_39 = arith.constant 0 : index
    %c0_40 = arith.constant 0 : index
    %108 = vector.load %arg8[%c0_39, %c0_40] : memref<8x32xf32, #tpu.memory_space<vmem>>, vector<8x32xf32>
    tpu.vector_store %arg8[%c0_39, %c0_40], %107 {strides = array<i32>} : memref<8x32xf32, #tpu.memory_space<vmem>>, vector<8x32xf32>,
    return
  }
  func.func @transform_0(%arg0: i32) -> (i32, i32, i32) {
    %c0_i32 = arith.constant 0 : i32
    %c0_i32_0 = arith.constant 0 : i32
    %c0_i32_1 = arith.constant 0 : i32
    return %arg0, %c0_i32, %c0_i32_0 : i32, i32, i32
  }
  func.func @transform_1(%arg0: i32) -> (i32, i32) {
    %c0_i32 = arith.constant 0 : i32
    %c0_i32_0 = arith.constant 0 : i32
    %c0_i32_1 = arith.constant 0 : i32
    return %c0_i32, %c0_i32_0 : i32, i32
  }
  func.func @transform_2(%arg0: i32) -> (i32, i32) {
    %c0_i32 = arith.constant 0 : i32
    %c0_i32_0 = arith.constant 0 : i32
    %c0_i32_1 = arith.constant 0 : i32
    return %c0_i32, %c0_i32_0 : i32, i32
  }
  func.func @transform_3(%arg0: i32) -> (i32, i32) {
    %c0_i32 = arith.constant 0 : i32
    %c0_i32_0 = arith.constant 0 : i32
    %c0_i32_1 = arith.constant 0 : i32
    return %c0_i32, %c0_i32_0 : i32, i32
  }
  func.func @transform_4(%arg0: i32) -> (i32, i32) {
    %c0_i32 = arith.constant 0 : i32
    %c0_i32_0 = arith.constant 0 : i32
    %c0_i32_1 = arith.constant 0 : i32
    return %c0_i32, %c0_i32_0 : i32, i32
  }
  func.func @transform_5(%arg0: i32) -> (i32, i32) {
    %c0_i32 = arith.constant 0 : i32
    %c0_i32_0 = arith.constant 0 : i32
    %c0_i32_1 = arith.constant 0 : i32
    return %c0_i32, %c0_i32_0 : i32, i32
  }
  func.func @transform_6(%arg0: i32) -> (i32, i32) {
    %c0_i32 = arith.constant 0 : i32
    %c0_i32_0 = arith.constant 0 : i32
    %c0_i32_1 = arith.constant 0 : i32
    return %c0_i32, %c0_i32_0 : i32, i32
  }
  func.func @transform_7(%arg0: i32) -> (i32, i32) {
    %c0_i32 = arith.constant 0 : i32
    %c0_i32_0 = arith.constant 0 : i32
    return %arg0, %c0_i32 : i32, i32
  }
}

</mosaic_0001>

<llo_original>
// kernel: tpu_custom_call.1
$region0: #{tpu_custom_call.1}
  #allocation0 [shape = 'u32[]', space=smem, size = 0x4, offset = 0x4, fixed_abs, tag = 'smem constant byte address 0x4 - core index']
  #allocation1 [shape = 'u32[72,128]{1,0:T(1,128)}', space=vmem, size = 0x9000, scoped, tag = 'internal scratch']
  #allocation2 [shape = 'f32[1,1]{1,0:T(1,128)S(1)}', space=vmem, size = 0x200, scoped, tag = 'scoped memory for tpu_custom_call.1']
  %s0 = inlined_call_operand.hbm [shape: f32[16,8,32], index: 0, kind: input, shape index: {}]
  %s1 = inlined_call_operand.vmem [shape: f32[32,96], index: 1, kind: input, shape index: {}]
  %s2 = inlined_call_operand.vmem [shape: f32[1,96], index: 2, kind: input, shape index: {}]
  %s3 = inlined_call_operand.hbm [shape: f32[32,32], index: 3, kind: input, shape index: {}]
  %s4 = inlined_call_operand.vmem [shape: f32[1,32], index: 4, kind: input, shape index: {}]
  %s5 = inlined_call_operand.vmem [shape: f32[32,1], index: 5, kind: input, shape index: {}]
  %s6 = inlined_call_operand.<no memory space> [shape: f32[1,1], index: 6, kind: input, shape index: {}]
  %s7 = inlined_call_operand.hbm [shape: f32[16,32], index: 7, kind: output, shape index: {}]
  %s8 = sld [smem:[#allocation0]]
  $region69: #{tpu_custom_call.1} parent=0
    _
  %s10 = ssub.s32 1, %s8
  %s11 = scalar_select 0, %s10, %s8
  %v12 = vstv %s6
  %13 = vst [vmem:[#allocation2] sm:$0x1] %v12
  $region1: #{tpu_custom_call.1} parent=0
    #allocation3 [shape = 'u8[65536]{0}', space=vmem, size = 0x10000, scoped, tag = 'input window, operand 0']
    #allocation4 [shape = 's32[2]{0}', space=sflag, size = 0x8, scoped, tag = 'scoped memory for tpu_custom_call.1']
    #allocation5 [shape = 's32[2]{0}', space=sflag, size = 0x8, scoped, tag = 'scoped memory for tpu_custom_call.1']
    #allocation6 [shape = 'u8[16384]{0}', space=vmem, size = 0x4000, scoped, tag = 'input window, operand 3, single buffered']
    #allocation7 [shape = 's32[1]{0}', space=sflag, size = 0x4, scoped, tag = 'scoped memory for tpu_custom_call.1']
    #allocation8 [shape = 'u8[8192]{0}', space=vmem, size = 0x2000, scoped, tag = 'output window, operand 0']
    %14 = vsyncpa [#allocation4], 0
    %s15 = scalar_lea.sflag [#allocation4], 1
    %16 = vsyncpa %s15, 0
    %17 = vsyncpa [#allocation7], 0
    %18 = vsyncpa [#allocation5], 0
    %s19 = scalar_lea.sflag [#allocation5], 1
    %20 = vsyncpa %s19, 0
    loop: start=0, step=1, limit=4
    $region2: #{tpu_custom_call.1} parent=1 // loop_pre_header
      _
    $region3: #{tpu_custom_call.1} parent=1 // loop_header
      %s22 = sphi 0, %s26
      %p23 = scmp.ge.s32.totalorder %s22, 4
      %s32 = sphi 0, %s34
      %s35 = sphi 0, %s32
      %s36 = sphi 0, %s35
      %s52 = sphi 0, %s36
      %s56 = sphi 0, %s56
      %s58 = sphi 0, %s56
      %s59 = sphi 0, %s58
      %s73 = sphi 0, %s59
      %s77 = sphi 0, %s77
      %s79 = sphi 0, %s77
      %s80 = sphi 0, %s79
      %s94 = sphi 0, %s80
      %s98 = sphi 0, %s98
      %s100 = sphi 0, %s98
      %s101 = sphi 0, %s100
      %s115 = sphi 0, %s101
      %s119 = sphi 0, %s119
      %s121 = sphi 0, %s119
      %s122 = sphi 0, %s121
      %s136 = sphi 0, %s122
      %s140 = sphi 0, %s140
      %s142 = sphi 0, %s140
      %s143 = sphi 0, %s142
      %s157 = sphi 0, %s143
      %s161 = sphi 0, %s161
      %s163 = sphi 0, %s161
      %s164 = sphi 0, %s163
      %s178 = sphi 0, %s164
      %s184 = sphi 0, %s186
      %s187 = sphi 0, %s184
      %s188 = sphi 0, %s187
      %s204 = sphi 0, %s188
    $region4: #{tpu_custom_call.1} parent=1 // loop_header_branch
      %25 = sbr.rel (%p23) target = $region8
    $region5: #{tpu_custom_call.1} parent=1 // loop_body
      %s27 = ssub.s32 %s22, 1
      %s28 = ssub.s32 %s22, 2
      %s29 = sadd.s32 %s22, 1
      %s30 = ssub.s32 %s22, %s29
      %p31 = scmp.eq.s32.totalorder %s30, 0
      %s33 = sadd.s32 %s32, 1
      %s34 = scalar_select %p31, %s32, %s33
      %p37 = pneg %p31
      %p38 = scmp.eq.s32.totalorder %s22, 1
      %p39 = por %p37, %p38
      %p40 = scmp.ne.s32.totalorder %s32, %s35
      %p41 = scmp.eq.s32.totalorder %s22, 0
      %p42 = por %p40, %p41
      %p43 = scmp.ne.s32.totalorder %s32, %s35
      %p44 = scmp.eq.s32.totalorder %s27, 1
      %p45 = por %p43, %p44
      %p46 = scmp.ne.s32.totalorder %s35, %s36
      %p47 = scmp.eq.s32.totalorder %s27, 0
      %p48 = por %p46, %p47
      %p49 = scmp.ne.s32.totalorder %s35, %s36
      %p50 = scmp.eq.s32.totalorder %s28, 1
      %p51 = por %p49, %p50
      %p53 = scmp.ne.s32.totalorder %s36, %s52
      %p54 = scmp.eq.s32.totalorder %s28, 0
      %p55 = por %p53, %p54
      %s57 = sadd.s32 %s56, 1
      %p60 = scmp.eq.s32.totalorder %s22, 1
      %p61 = scmp.ne.s32.totalorder %s56, %s58
      %p62 = scmp.eq.s32.totalorder %s22, 0
      %p63 = por %p61, %p62
      %p64 = scmp.ne.s32.totalorder %s56, %s58
      %p65 = scmp.eq.s32.totalorder %s27, 1
      %p66 = por %p64, %p65
      %p67 = scmp.ne.s32.totalorder %s58, %s59
      %p68 = scmp.eq.s32.totalorder %s27, 0
      %p69 = por %p67, %p68
      %p70 = scmp.ne.s32.totalorder %s58, %s59
      %p71 = scmp.eq.s32.totalorder %s28, 1
      %p72 = por %p70, %p71
      %p74 = scmp.ne.s32.totalorder %s59, %s73
      %p75 = scmp.eq.s32.totalorder %s28, 0
      %p76 = por %p74, %p75
      %s78 = sadd.s32 %s77, 1
      %p81 = scmp.eq.s32.totalorder %s22, 1
      %p82 = scmp.ne.s32.totalorder %s77, %s79
      %p83 = scmp.eq.s32.totalorder %s22, 0
      %p84 = por %p82, %p83
      %p85 = scmp.ne.s32.totalorder %s77, %s79
      %p86 = scmp.eq.s32.totalorder %s27, 1
      %p87 = por %p85, %p86
      %p88 = scmp.ne.s32.totalorder %s79, %s80
      %p89 = scmp.eq.s32.totalorder %s27, 0
      %p90 = por %p88, %p89
      %p91 = scmp.ne.s32.totalorder %s79, %s80
      %p92 = scmp.eq.s32.totalorder %s28, 1
      %p93 = por %p91, %p92
      %p95 = scmp.ne.s32.totalorder %s80, %s94
      %p96 = scmp.eq.s32.totalorder %s28, 0
      %p97 = por %p95, %p96
      %s99 = sadd.s32 %s98, 1
      %p102 = scmp.eq.s32.totalorder %s22, 1
      %p103 = scmp.ne.s32.totalorder %s98, %s100
      %p104 = scmp.eq.s32.totalorder %s22, 0
      %p105 = por %p103, %p104
      %p106 = scmp.ne.s32.totalorder %s98, %s100
      %p107 = scmp.eq.s32.totalorder %s27, 1
      %p108 = por %p106, %p107
      %p109 = scmp.ne.s32.totalorder %s100, %s101
      %p110 = scmp.eq.s32.totalorder %s27, 0
      %p111 = por %p109, %p110
      %p112 = scmp.ne.s32.totalorder %s100, %s101
      %p113 = scmp.eq.s32.totalorder %s28, 1
      %p114 = por %p112, %p113
      %p116 = scmp.ne.s32.totalorder %s101, %s115
      %p117 = scmp.eq.s32.totalorder %s28, 0
      %p118 = por %p116, %p117
      %s120 = sadd.s32 %s119, 1
      %p123 = scmp.eq.s32.totalorder %s22, 1
      %p124 = scmp.ne.s32.totalorder %s119, %s121
      %p125 = scmp.eq.s32.totalorder %s22, 0
      %p126 = por %p124, %p125
      %p127 = scmp.ne.s32.totalorder %s119, %s121
      %p128 = scmp.eq.s32.totalorder %s27, 1
      %p129 = por %p127, %p128
      %p130 = scmp.ne.s32.totalorder %s121, %s122
      %p131 = scmp.eq.s32.totalorder %s27, 0
      %p132 = por %p130, %p131
      %p133 = scmp.ne.s32.totalorder %s121, %s122
      %p134 = scmp.eq.s32.totalorder %s28, 1
      %p135 = por %p133, %p134
      %p137 = scmp.ne.s32.totalorder %s122, %s136
      %p138 = scmp.eq.s32.totalorder %s28, 0
      %p139 = por %p137, %p138
      %s141 = sadd.s32 %s140, 1
      %p144 = scmp.eq.s32.totalorder %s22, 1
      %p145 = scmp.ne.s32.totalorder %s140, %s142
      %p146 = scmp.eq.s32.totalorder %s22, 0
      %p147 = por %p145, %p146
      %p148 = scmp.ne.s32.totalorder %s140, %s142
      %p149 = scmp.eq.s32.totalorder %s27, 1
      %p150 = por %p148, %p149
      %p151 = scmp.ne.s32.totalorder %s142, %s143
      %p152 = scmp.eq.s32.totalorder %s27, 0
      %p153 = por %p151, %p152
      %p154 = scmp.ne.s32.totalorder %s142, %s143
      %p155 = scmp.eq.s32.totalorder %s28, 1
      %p156 = por %p154, %p155
      %p158 = scmp.ne.s32.totalorder %s143, %s157
      %p159 = scmp.eq.s32.totalorder %s28, 0
      %p160 = por %p158, %p159
      %s162 = sadd.s32 %s161, 1
      %p165 = scmp.eq.s32.totalorder %s22, 1
      %p166 = scmp.ne.s32.totalorder %s161, %s163
      %p167 = scmp.eq.s32.totalorder %s22, 0
      %p168 = por %p166, %p167
      %p169 = scmp.ne.s32.totalorder %s161, %s163
      %p170 = scmp.eq.s32.totalorder %s27, 1
      %p171 = por %p169, %p170
      %p172 = scmp.ne.s32.totalorder %s163, %s164
      %p173 = scmp.eq.s32.totalorder %s27, 0
      %p174 = por %p172, %p173
      %p175 = scmp.ne.s32.totalorder %s163, %s164
      %p176 = scmp.eq.s32.totalorder %s28, 1
      %p177 = por %p175, %p176
      %p179 = scmp.ne.s32.totalorder %s164, %s178
      %p180 = scmp.eq.s32.totalorder %s28, 0
      %p181 = por %p179, %p180
      %s182 = ssub.s32 %s22, %s29
      %p183 = scmp.eq.s32.totalorder %s182, 0
      %s185 = sadd.s32 %s184, 1
      %s186 = scalar_select %p183, %s184, %s185
      %p189 = pneg %p183
      %p190 = scmp.eq.s32.totalorder %s22, 1
      %p191 = por %p189, %p190
      %p192 = scmp.ne.s32.totalorder %s184, %s187
      %p193 = scmp.eq.s32.totalorder %s22, 0
      %p194 = por %p192, %p193
      %p195 = scmp.ne.s32.totalorder %s184, %s187
      %p196 = scmp.eq.s32.totalorder %s27, 1
      %p197 = por %p195, %p196
      %p198 = scmp.ne.s32.totalorder %s187, %s188
      %p199 = scmp.eq.s32.totalorder %s27, 0
      %p200 = por %p198, %p199
      %p201 = scmp.ne.s32.totalorder %s187, %s188
      %p202 = scmp.eq.s32.totalorder %s28, 1
      %p203 = por %p201, %p202
      %p205 = scmp.ne.s32.totalorder %s188, %s204
      %p206 = scmp.eq.s32.totalorder %s28, 0
      %p207 = por %p205, %p206
      %p208 = scmp.le.s32.totalorder 1, %s22
      %p209 = scmp.lt.s32.totalorder %s22, 3
      %p210 = pnand %p208, %p209
      %p211 = pneg %p210
      // Predicated region
      $region9: #{tpu_custom_call.1} parent=5 // pred_check
        _
      $region10: #{tpu_custom_call.1} parent=5 // pred_check_branch
        %213 = sbr.rel (%p210) target = $region12
      $region11: #{tpu_custom_call.1} parent=5 // pred_region
        %s214 = ssub.s32 %s22, 1
        // Predicated region
        $region13: #{tpu_custom_call.1} parent=11 // pred_check
          %p215 = pneg %p69
        $region14: #{tpu_custom_call.1} parent=11 // pred_check_branch
          %217 = sbr.rel (%p215) target = $region16
        $region15: #{tpu_custom_call.1} parent=11 // pred_region
          _
        $region16: #{tpu_custom_call.1} parent=11 // pred_fallthru
          _
        // Predicated region
        $region17: #{tpu_custom_call.1} parent=11 // pred_check
          %p218 = pneg %p90
        $region18: #{tpu_custom_call.1} parent=11 // pred_check_branch
          %220 = sbr.rel (%p218) target = $region20
        $region19: #{tpu_custom_call.1} parent=11 // pred_region
          _
        $region20: #{tpu_custom_call.1} parent=11 // pred_fallthru
          _
        // Predicated region
        $region21: #{tpu_custom_call.1} parent=11 // pred_check
          %p221 = pneg %p111
        $region22: #{tpu_custom_call.1} parent=11 // pred_check_branch
          %223 = sbr.rel (%p221) target = $region24
        $region23: #{tpu_custom_call.1} parent=11 // pred_region
          %225 = vsyncadd [#allocation7], 0
          %s226 = sshll.u32 %s3, 4
          %s227 = int_to_ptr.hbm [resolvable:$true] %s226
          %s228 = sshll.u32 [#allocation6], 4
          %s229 = int_to_ptr.vmem [resolvable:$true] %s228
          %234 = dma.hbm_to_vmem [thread:$0]  %s227, 512, %s229, [#allocation7], 128, 128, 8
        $region24: #{tpu_custom_call.1} parent=11 // pred_fallthru
          _
        // Predicated region
        $region25: #{tpu_custom_call.1} parent=11 // pred_check
          %p235 = pneg %p132
        $region26: #{tpu_custom_call.1} parent=11 // pred_check_branch
          %237 = sbr.rel (%p235) target = $region28
        $region27: #{tpu_custom_call.1} parent=11 // pred_region
          _
        $region28: #{tpu_custom_call.1} parent=11 // pred_fallthru
          _
        // Predicated region
        $region29: #{tpu_custom_call.1} parent=11 // pred_check
          %p238 = pneg %p153
        $region30: #{tpu_custom_call.1} parent=11 // pred_check_branch
          %240 = sbr.rel (%p238) target = $region32
        $region31: #{tpu_custom_call.1} parent=11 // pred_region
          _
        $region32: #{tpu_custom_call.1} parent=11 // pred_fallthru
          _
        // Predicated region
        $region33: #{tpu_custom_call.1} parent=11 // pred_check
          %p241 = pneg %p174
        $region34: #{tpu_custom_call.1} parent=11 // pred_check_branch
          %243 = sbr.rel (%p241) target = $region36
        $region35: #{tpu_custom_call.1} parent=11 // pred_region
          _
        $region36: #{tpu_custom_call.1} parent=11 // pred_fallthru
          _
      $region12: #{tpu_custom_call.1} parent=5 // pred_fallthru
        _
      %p244 = scmp.lt.s32.totalorder %s22, 2
      // Predicated region
      $region37: #{tpu_custom_call.1} parent=5 // pred_check
        %p245 = pneg %p244
      $region38: #{tpu_custom_call.1} parent=5 // pred_check_branch
        %247 = sbr.rel (%p245) target = $region40
      $region39: #{tpu_custom_call.1} parent=5 // pred_region
        // Predicated region
        $region41: #{tpu_custom_call.1} parent=39 // pred_check
          %p248 = pneg %p42
        $region42: #{tpu_custom_call.1} parent=39 // pred_check_branch
          %250 = sbr.rel (%p248) target = $region44
        $region43: #{tpu_custom_call.1} parent=39 // pred_region
          %s251 = sand.u32 %s32, 1
          %s252 = scalar_lea.sflag [#allocation4], %s251
          %s253 = sand.u32 %s32, 1
          %s254 = smul.addr %s253, 64
          %s255 = scalar_lea.vmem [#allocation3], %s254
          %s256 = smul.u32 8, %s22
          %258 = vsyncadd %s252, 0
          %s259 = smul.addr %s256, 8
          %s260 = scalar_lea.hbm %s0, %s259
          %s261 = sshll.u32 %s260, 4
          %s262 = int_to_ptr.hbm [resolvable:$true] %s261
          %s263 = sshll.u32 %s255, 4
          %s264 = int_to_ptr.vmem [resolvable:$true] %s263
          %269 = dma.hbm_to_vmem [thread:$0]  %s262, 1024, %s264, %s252, 128, 128, 8
        $region44: #{tpu_custom_call.1} parent=39 // pred_fallthru
          _
      $region40: #{tpu_custom_call.1} parent=5 // pred_fallthru
        _
      %p270 = scmp.le.s32.totalorder 1, %s22
      %p271 = scmp.lt.s32.totalorder %s22, 3
      %p272 = pnand %p270, %p271
      %p273 = pneg %p272
      // Predicated region
      $region45: #{tpu_custom_call.1} parent=5 // pred_check
        _
      $region46: #{tpu_custom_call.1} parent=5 // pred_check_branch
        %275 = sbr.rel (%p272) target = $region48
      $region47: #{tpu_custom_call.1} parent=5 // pred_region
        %s276 = ssub.s32 %s22, 1
        %s277 = sand.u32 %s35, 1
        %s278 = scalar_lea.sflag [#allocation4], %s277
        %s279 = sand.u32 %s35, 1
        %s280 = smul.addr %s279, 64
        %s281 = scalar_lea.vmem [#allocation3], %s280
        // Predicated region
        $region49: #{tpu_custom_call.1} parent=47 // pred_check
          %p282 = pneg %p48
        $region50: #{tpu_custom_call.1} parent=47 // pred_check_branch
          %284 = sbr.rel (%p282) target = $region52
        $region51: #{tpu_custom_call.1} parent=47 // pred_region
          %286 = dma.done %s278, 1024
        $region52: #{tpu_custom_call.1} parent=47 // pred_fallthru
          _
        // Predicated region
        $region53: #{tpu_custom_call.1} parent=47 // pred_check
          %p287 = pneg %p111
        $region54: #{tpu_custom_call.1} parent=47 // pred_check_branch
          %289 = sbr.rel (%p287) target = $region56
        $region55: #{tpu_custom_call.1} parent=47 // pred_region
          %291 = dma.done [#allocation7], 512
        $region56: #{tpu_custom_call.1} parent=47 // pred_fallthru
          _
        %s292 = sand.u32 %s35, 1
        %s293 = scalar_lea.sflag [#allocation4], %s292
        %s294 = sand.u32 %s35, 1
        %s295 = smul.addr %s294, 64
        %s296 = scalar_lea.vmem [#allocation3], %s295
        %p297 = pneg %p48
        %p298 = pneg %p45
        %p299 = pneg %p69
        %p300 = pneg %p66
        %p301 = pneg %p90
        %p302 = pneg %p87
        %p303 = pneg %p111
        %p304 = pneg %p108
        %p305 = pneg %p132
        %p306 = pneg %p129
        %p307 = pneg %p153
        %p308 = pneg %p150
        %p309 = pneg %p174
        %p310 = pneg %p171
        %p311 = pneg %p200
        %p312 = pneg %p197
        %s313 = sand.u32 %s187, 1
        %s314 = scalar_lea.sflag [#allocation5], %s313
        %s315 = sand.u32 %s187, 1
        %s316 = smul.addr %s315, 8
        %s317 = scalar_lea.vmem [#allocation8], %s316
        %s318 = smul.u32 8, %s27
        %v319 = vld [vmem:[%s281] sm:$0xff]
        %v320 = vld [vmem:[%s281 + $0x8] sm:$0xff]
        %v321 = vld [vmem:[%s281 + $0x10] sm:$0xff]
        %v322 = vld [vmem:[%s281 + $0x18] sm:$0xff]
        %v323 = vld [vmem:[%s281 + $0x20] sm:$0xff]
        %v324 = vld [vmem:[%s281 + $0x28] sm:$0xff]
        %v325 = vld [vmem:[%s281 + $0x30] sm:$0xff]
        %v326 = vld [vmem:[%s281 + $0x38] sm:$0xff]
        %v327 = vld [vmem:[%s1] sm:$0xff]
        %v328 = vld [vmem:[%s1 + $0x8] sm:$0xff]
        %v329 = vld [vmem:[%s1 + $0x10] sm:$0xff]
        %v330 = vld [vmem:[%s1 + $0x18] sm:$0xff]
        %v331 = vld [vmem:[%s2] sm:$0x1]
        %v333 = vperm.slane %v331, 0
        %vm335 = vcmask 261120
        %v337 = vsel %vm335, %v319, 0
        %v340 = vsel %vm335, %v320, 0
        %v343 = vsel %vm335, %v321, 0
        %v346 = vsel %vm335, %v322, 0
        %v349 = vsel %vm335, %v323, 0
        %v352 = vsel %vm335, %v324, 0
        %v355 = vsel %vm335, %v325, 0
        %v358 = vsel %vm335, %v326, 0
        %360 = vmatpush.msra.mxu0 0.0
        %361 = vmatpush.msra.mxu0 0.0
        %362 = vmatpush.msra.mxu0 0.0
        %363 = vmatpush.msra.mxu0 0.0
        %364 = vmatpush.msra.mxu0 0.0
        %365 = vmatpush.msra.mxu0 0.0
        %366 = vmatpush.msra.mxu0 0.0
        %367 = vmatpush.msra.mxu0 0.0
        %368 = vmatpush.msra.mxu0 0.0
        %369 = vmatpush.msra.mxu0 0.0
        %370 = vmatpush.msra.mxu0 0.0
        %371 = vmatpush.msra.mxu0 0.0
        %372 = vmatpush.msra.mxu0 %v330
        %373 = vmatpush.msra.mxu0 %v329
        %374 = vmatpush.msra.mxu0 %v328
        %375 = vmatpush.msra.mxu0 %v327
        %376 = vmatmul.f32.gmra.mxu0 %v337
        %v377 = vpop.f32.mrf.mxu0
        %v378 = vadd.f32 %v333, %v377
        %379 = vmatmul.f32.gmra.mxu0 %v340
        %v380 = vpop.f32.mrf.mxu0
        %v381 = vadd.f32 %v333, %v380
        %382 = vmatmul.f32.gmra.mxu0 %v343
        %v383 = vpop.f32.mrf.mxu0
        %v384 = vadd.f32 %v333, %v383
        %385 = vmatmul.f32.gmra.mxu0 %v346
        %v386 = vpop.f32.mrf.mxu0
        %v387 = vadd.f32 %v333, %v386
        %388 = vmatmul.f32.gmra.mxu0 %v349
        %v389 = vpop.f32.mrf.mxu0
        %v390 = vadd.f32 %v333, %v389
        %391 = vmatmul.f32.gmra.mxu0 %v352
        %v392 = vpop.f32.mrf.mxu0
        %v393 = vadd.f32 %v333, %v392
        %394 = vmatmul.f32.gmra.mxu0 %v355
        %v395 = vpop.f32.mrf.mxu0
        %v396 = vadd.f32 %v333, %v395
        %397 = vmatmul.f32.gmra.mxu0 %v358
        %v398 = vpop.f32.mrf.mxu0
        %v399 = vadd.f32 %v333, %v398
        %400 = vdwg.mxu0
        %402 = vrot.lane.b32.xlu0 %v378, 96
        %v403 = vpop.permute.xlu0 %402
        %vm404 = vcmask 64512
        %v405 = vsel %vm404, %v378, 0
        %v407 = vsel %vm404, %v403, 0
        %409 = vmatpush.xpose.msra.mxu0 0.0
        %410 = vmatpush.xpose.msra.mxu0 0.0
        %411 = vmatpush.xpose.msra.mxu0 0.0
        %412 = vmatpush.xpose.msra.mxu0 0.0
        %413 = vmatpush.xpose.msra.mxu0 0.0
        %414 = vmatpush.xpose.msra.mxu0 0.0
        %415 = vmatpush.xpose.msra.mxu0 0.0
        %416 = vmatpush.xpose.msra.mxu0 0.0
        %417 = vmatpush.xpose.msra.mxu0 0.0
        %418 = vmatpush.xpose.msra.mxu0 0.0
        %419 = vmatpush.xpose.msra.mxu0 0.0
        %420 = vmatpush.xpose.msra.mxu0 0.0
        %421 = vmatpush.xpose.msra.mxu0 0.0
        %422 = vmatpush.xpose.msra.mxu0 0.0
        %423 = vmatpush.xpose.msra.mxu0 0.0
        %424 = vmatpush.xpose.msra.mxu0 %v407
        %425 = vmatmul.f32.gmra.mxu0 %v405
        %v426 = vpop.f32.mrf.mxu0
        %v427 = vadd.f32 0.0, %v426
        %428 = vdwg.mxu0
        %430 = vrot.lane.b32.xlu0 %v381, 96
        %v431 = vpop.permute.xlu0 %430
        %v432 = vsel %vm404, %v381, 0
        %v434 = vsel %vm404, %v431, 0
        %436 = vmatpush.xpose.msra.mxu0 0.0
        %437 = vmatpush.xpose.msra.mxu0 0.0
        %438 = vmatpush.xpose.msra.mxu0 0.0
        %439 = vmatpush.xpose.msra.mxu0 0.0
        %440 = vmatpush.xpose.msra.mxu0 0.0
        %441 = vmatpush.xpose.msra.mxu0 0.0
        %442 = vmatpush.xpose.msra.mxu0 0.0
        %443 = vmatpush.xpose.msra.mxu0 0.0
        %444 = vmatpush.xpose.msra.mxu0 0.0
        %445 = vmatpush.xpose.msra.mxu0 0.0
        %446 = vmatpush.xpose.msra.mxu0 0.0
        %447 = vmatpush.xpose.msra.mxu0 0.0
        %448 = vmatpush.xpose.msra.mxu0 0.0
        %449 = vmatpush.xpose.msra.mxu0 0.0
        %450 = vmatpush.xpose.msra.mxu0 0.0
        %451 = vmatpush.xpose.msra.mxu0 %v434
        %452 = vmatmul.f32.gmra.mxu0 %v432
        %v453 = vpop.f32.mrf.mxu0
        %v454 = vadd.f32 0.0, %v453
        %455 = vdwg.mxu0
        %457 = vrot.lane.b32.xlu0 %v384, 96
        %v458 = vpop.permute.xlu0 %457
        %v459 = vsel %vm404, %v384, 0
        %v461 = vsel %vm404, %v458, 0
        %463 = vmatpush.xpose.msra.mxu0 0.0
        %464 = vmatpush.xpose.msra.mxu0 0.0
        %465 = vmatpush.xpose.msra.mxu0 0.0
        %466 = vmatpush.xpose.msra.mxu0 0.0
        %467 = vmatpush.xpose.msra.mxu0 0.0
        %468 = vmatpush.xpose.msra.mxu0 0.0
        %469 = vmatpush.xpose.msra.mxu0 0.0
        %470 = vmatpush.xpose.msra.mxu0 0.0
        %471 = vmatpush.xpose.msra.mxu0 0.0
        %472 = vmatpush.xpose.msra.mxu0 0.0
        %473 = vmatpush.xpose.msra.mxu0 0.0
        %474 = vmatpush.xpose.msra.mxu0 0.0
        %475 = vmatpush.xpose.msra.mxu0 0.0
        %476 = vmatpush.xpose.msra.mxu0 0.0
        %477 = vmatpush.xpose.msra.mxu0 0.0
        %478 = vmatpush.xpose.msra.mxu0 %v461
        %479 = vmatmul.f32.gmra.mxu0 %v459
        %v480 = vpop.f32.mrf.mxu0
        %v481 = vadd.f32 0.0, %v480
        %482 = vdwg.mxu0
        %484 = vrot.lane.b32.xlu0 %v387, 96
        %v485 = vpop.permute.xlu0 %484
        %v486 = vsel %vm404, %v387, 0
        %v488 = vsel %vm404, %v485, 0
        %490 = vmatpush.xpose.msra.mxu0 0.0
        %491 = vmatpush.xpose.msra.mxu0 0.0
        %492 = vmatpush.xpose.msra.mxu0 0.0
        %493 = vmatpush.xpose.msra.mxu0 0.0
        %494 = vmatpush.xpose.msra.mxu0 0.0
        %495 = vmatpush.xpose.msra.mxu0 0.0
        %496 = vmatpush.xpose.msra.mxu0 0.0
        %497 = vmatpush.xpose.msra.mxu0 0.0
        %498 = vmatpush.xpose.msra.mxu0 0.0
        %499 = vmatpush.xpose.msra.mxu0 0.0
        %500 = vmatpush.xpose.msra.mxu0 0.0
        %501 = vmatpush.xpose.msra.mxu0 0.0
        %502 = vmatpush.xpose.msra.mxu0 0.0
        %503 = vmatpush.xpose.msra.mxu0 0.0
        %504 = vmatpush.xpose.msra.mxu0 0.0
        %505 = vmatpush.xpose.msra.mxu0 %v488
        %506 = vmatmul.f32.gmra.mxu0 %v486
        %v507 = vpop.f32.mrf.mxu0
        %v508 = vadd.f32 0.0, %v507
        %509 = vdwg.mxu0
        %511 = vrot.lane.b32.xlu0 %v390, 96
        %v512 = vpop.permute.xlu0 %511
        %v513 = vsel %vm404, %v390, 0
        %v515 = vsel %vm404, %v512, 0
        %517 = vmatpush.xpose.msra.mxu0 0.0
        %518 = vmatpush.xpose.msra.mxu0 0.0
        %519 = vmatpush.xpose.msra.mxu0 0.0
        %520 = vmatpush.xpose.msra.mxu0 0.0
        %521 = vmatpush.xpose.msra.mxu0 0.0
        %522 = vmatpush.xpose.msra.mxu0 0.0
        %523 = vmatpush.xpose.msra.mxu0 0.0
        %524 = vmatpush.xpose.msra.mxu0 0.0
        %525 = vmatpush.xpose.msra.mxu0 0.0
        %526 = vmatpush.xpose.msra.mxu0 0.0
        %527 = vmatpush.xpose.msra.mxu0 0.0
        %528 = vmatpush.xpose.msra.mxu0 0.0
        %529 = vmatpush.xpose.msra.mxu0 0.0
        %530 = vmatpush.xpose.msra.mxu0 0.0
        %531 = vmatpush.xpose.msra.mxu0 0.0
        %532 = vmatpush.xpose.msra.mxu0 %v515
        %533 = vmatmul.f32.gmra.mxu0 %v513
        %v534 = vpop.f32.mrf.mxu0
        %v535 = vadd.f32 0.0, %v534
        %536 = vdwg.mxu0
        %538 = vrot.lane.b32.xlu0 %v393, 96
        %v539 = vpop.permute.xlu0 %538
        %v540 = vsel %vm404, %v393, 0
        %v542 = vsel %vm404, %v539, 0
        %544 = vmatpush.xpose.msra.mxu0 0.0
        %545 = vmatpush.xpose.msra.mxu0 0.0
        %546 = vmatpush.xpose.msra.mxu0 0.0
        %547 = vmatpush.xpose.msra.mxu0 0.0
        %548 = vmatpush.xpose.msra.mxu0 0.0
        %549 = vmatpush.xpose.msra.mxu0 0.0
        %550 = vmatpush.xpose.msra.mxu0 0.0
        %551 = vmatpush.xpose.msra.mxu0 0.0
        %552 = vmatpush.xpose.msra.mxu0 0.0
        %553 = vmatpush.xpose.msra.mxu0 0.0
        %554 = vmatpush.xpose.msra.mxu0 0.0
        %555 = vmatpush.xpose.msra.mxu0 0.0
        %556 = vmatpush.xpose.msra.mxu0 0.0
        %557 = vmatpush.xpose.msra.mxu0 0.0
        %558 = vmatpush.xpose.msra.mxu0 0.0
        %559 = vmatpush.xpose.msra.mxu0 %v542
        %560 = vmatmul.f32.gmra.mxu0 %v540
        %v561 = vpop.f32.mrf.mxu0
        %v562 = vadd.f32 0.0, %v561
        %563 = vdwg.mxu0
        %565 = vrot.lane.b32.xlu0 %v396, 96
        %v566 = vpop.permute.xlu0 %565
        %v567 = vsel %vm404, %v396, 0
        %v569 = vsel %vm404, %v566, 0
        %571 = vmatpush.xpose.msra.mxu0 0.0
        %572 = vmatpush.xpose.msra.mxu0 0.0
        %573 = vmatpush.xpose.msra.mxu0 0.0
        %574 = vmatpush.xpose.msra.mxu0 0.0
        %575 = vmatpush.xpose.msra.mxu0 0.0
        %576 = vmatpush.xpose.msra.mxu0 0.0
        %577 = vmatpush.xpose.msra.mxu0 0.0
        %578 = vmatpush.xpose.msra.mxu0 0.0
        %579 = vmatpush.xpose.msra.mxu0 0.0
        %580 = vmatpush.xpose.msra.mxu0 0.0
        %581 = vmatpush.xpose.msra.mxu0 0.0
        %582 = vmatpush.xpose.msra.mxu0 0.0
        %583 = vmatpush.xpose.msra.mxu0 0.0
        %584 = vmatpush.xpose.msra.mxu0 0.0
        %585 = vmatpush.xpose.msra.mxu0 0.0
        %586 = vmatpush.xpose.msra.mxu0 %v569
        %587 = vmatmul.f32.gmra.mxu0 %v567
        %v588 = vpop.f32.mrf.mxu0
        %v589 = vadd.f32 0.0, %v588
        %590 = vdwg.mxu0
        %592 = vrot.lane.b32.xlu0 %v399, 96
        %v593 = vpop.permute.xlu0 %592
        %v594 = vsel %vm404, %v399, 0
        %v596 = vsel %vm404, %v593, 0
        %598 = vmatpush.xpose.msra.mxu0 0.0
        %599 = vmatpush.xpose.msra.mxu0 0.0
        %600 = vmatpush.xpose.msra.mxu0 0.0
        %601 = vmatpush.xpose.msra.mxu0 0.0
        %602 = vmatpush.xpose.msra.mxu0 0.0
        %603 = vmatpush.xpose.msra.mxu0 0.0
        %604 = vmatpush.xpose.msra.mxu0 0.0
        %605 = vmatpush.xpose.msra.mxu0 0.0
        %606 = vmatpush.xpose.msra.mxu0 0.0
        %607 = vmatpush.xpose.msra.mxu0 0.0
        %608 = vmatpush.xpose.msra.mxu0 0.0
        %609 = vmatpush.xpose.msra.mxu0 0.0
        %610 = vmatpush.xpose.msra.mxu0 0.0
        %611 = vmatpush.xpose.msra.mxu0 0.0
        %612 = vmatpush.xpose.msra.mxu0 0.0
        %613 = vmatpush.xpose.msra.mxu0 %v596
        %614 = vmatmul.f32.gmra.mxu0 %v594
        %v615 = vpop.f32.mrf.mxu0
        %v616 = vadd.f32 0.0, %v615
        %617 = vdwg.mxu0
        %v618 = vmul.f32 %v427, 0.35355338
        %v619 = vmul.f32 %v454, 0.35355338
        %v620 = vmul.f32 %v481, 0.35355338
        %v621 = vmul.f32 %v508, 0.35355338
        %v622 = vmul.f32 %v535, 0.35355338
        %v623 = vmul.f32 %v562, 0.35355338
        %v624 = vmul.f32 %v589, 0.35355338
        %v625 = vmul.f32 %v616, 0.35355338
        %v626 = vsel %vm404, %v618, -inf
        %627 = vmax.xlane.f32.xlu0 %v626
        %v628 = vpop.xlane.xlu0 %627
        %v629 = vsel %vm404, %v619, -inf
        %630 = vmax.xlane.f32.xlu0 %v629
        %v631 = vpop.xlane.xlu0 %630
        %v632 = vsel %vm404, %v620, -inf
        %633 = vmax.xlane.f32.xlu0 %v632
        %v634 = vpop.xlane.xlu0 %633
        %v635 = vsel %vm404, %v621, -inf
        %636 = vmax.xlane.f32.xlu0 %v635
        %v637 = vpop.xlane.xlu0 %636
        %v638 = vsel %vm404, %v622, -inf
        %639 = vmax.xlane.f32.xlu0 %v638
        %v640 = vpop.xlane.xlu0 %639
        %v641 = vsel %vm404, %v623, -inf
        %642 = vmax.xlane.f32.xlu0 %v641
        %v643 = vpop.xlane.xlu0 %642
        %v644 = vsel %vm404, %v624, -inf
        %645 = vmax.xlane.f32.xlu0 %v644
        %v646 = vpop.xlane.xlu0 %645
        %v647 = vsel %vm404, %v625, -inf
        %648 = vmax.xlane.f32.xlu0 %v647
        %v649 = vpop.xlane.xlu0 %648
        %v650 = vsub.f32 %v618, %v628
        %v651 = vsub.f32 %v619, %v631
        %v652 = vsub.f32 %v620, %v634
        %v653 = vsub.f32 %v621, %v637
        %v654 = vsub.f32 %v622, %v640
        %v655 = vsub.f32 %v623, %v643
        %v656 = vsub.f32 %v624, %v646
        %v657 = vsub.f32 %v625, %v649
        %v658 = vmul.f32 %v650, 1.442695
        %v659 = vpow.pop %v658
        %v660 = vmul.f32 %v651, 1.442695
        %v661 = vpow.pop %v660
        %v662 = vmul.f32 %v652, 1.442695
        %v663 = vpow.pop %v662
        %v664 = vmul.f32 %v653, 1.442695
        %v665 = vpow.pop %v664
        %v666 = vmul.f32 %v654, 1.442695
        %v667 = vpow.pop %v666
        %v668 = vmul.f32 %v655, 1.442695
        %v669 = vpow.pop %v668
        %v670 = vmul.f32 %v656, 1.442695
        %v671 = vpow.pop %v670
        %v672 = vmul.f32 %v657, 1.442695
        %v673 = vpow.pop %v672
        %v674 = vsel %vm404, %v659, 0.0
        %675 = vadd.xlane.f32.xlu0 %v674
        %v676 = vpop.xlane.xlu0 %675
        %v677 = vsel %vm404, %v661, 0.0
        %678 = vadd.xlane.f32.xlu0 %v677
        %v679 = vpop.xlane.xlu0 %678
        %v680 = vsel %vm404, %v663, 0.0
        %681 = vadd.xlane.f32.xlu0 %v680
        %v682 = vpop.xlane.xlu0 %681
        %v683 = vsel %vm404, %v665, 0.0
        %684 = vadd.xlane.f32.xlu0 %v683
        %v685 = vpop.xlane.xlu0 %684
        %v686 = vsel %vm404, %v667, 0.0
        %687 = vadd.xlane.f32.xlu0 %v686
        %v688 = vpop.xlane.xlu0 %687
        %v689 = vsel %vm404, %v669, 0.0
        %690 = vadd.xlane.f32.xlu0 %v689
        %v691 = vpop.xlane.xlu0 %690
        %v692 = vsel %vm404, %v671, 0.0
        %693 = vadd.xlane.f32.xlu0 %v692
        %v694 = vpop.xlane.xlu0 %693
        %v695 = vsel %vm404, %v673, 0.0
        %696 = vadd.xlane.f32.xlu0 %v695
        %v697 = vpop.xlane.xlu0 %696
        %v698 = vrcp.pop %v676
        %v699 = vrcp.pop %v679
        %v700 = vrcp.pop %v682
        %v701 = vrcp.pop %v685
        %v702 = vrcp.pop %v688
        %v703 = vrcp.pop %v691
        %v704 = vrcp.pop %v694
        %v705 = vrcp.pop %v697
        %v706 = vmul.f32 %v659, %v698
        %v707 = vmul.f32 %v661, %v699
        %v708 = vmul.f32 %v663, %v700
        %v709 = vmul.f32 %v665, %v701
        %v710 = vmul.f32 %v667, %v702
        %v711 = vmul.f32 %v669, %v703
        %v712 = vmul.f32 %v671, %v704
        %v713 = vmul.f32 %v673, %v705
        %714 = vrot.lane.b32.xlu0 %v378, 64
        %v715 = vpop.permute.xlu0 %714
        %v718 = vsel %vm404, %v706, 0
        %720 = vmatpush.msra.mxu0 0.0
        %721 = vmatpush.msra.mxu0 0.0
        %722 = vmatpush.msra.mxu0 0.0
        %723 = vmatpush.msra.mxu0 0.0
        %724 = vmatpush.msra.mxu0 0.0
        %725 = vmatpush.msra.mxu0 0.0
        %726 = vmatpush.msra.mxu0 0.0
        %727 = vmatpush.msra.mxu0 0.0
        %728 = vmatpush.msra.mxu0 0.0
        %729 = vmatpush.msra.mxu0 0.0
        %730 = vmatpush.msra.mxu0 0.0
        %731 = vmatpush.msra.mxu0 0.0
        %732 = vmatpush.msra.mxu0 0.0
        %733 = vmatpush.msra.mxu0 0.0
        %734 = vmatpush.msra.mxu0 0.0
        %735 = vmatpush.msra.mxu0 %v715
        %736 = vmatmul.f32.gmra.mxu0 %v718
        %v737 = vpop.f32.mrf.mxu0
        %v738 = vadd.f32 0.0, %v737
        %739 = vdwg.mxu0
        %740 = vrot.lane.b32.xlu0 %v381, 64
        %v741 = vpop.permute.xlu0 %740
        %v744 = vsel %vm404, %v707, 0
        %746 = vmatpush.msra.mxu0 0.0
        %747 = vmatpush.msra.mxu0 0.0
        %748 = vmatpush.msra.mxu0 0.0
        %749 = vmatpush.msra.mxu0 0.0
        %750 = vmatpush.msra.mxu0 0.0
        %751 = vmatpush.msra.mxu0 0.0
        %752 = vmatpush.msra.mxu0 0.0
        %753 = vmatpush.msra.mxu0 0.0
        %754 = vmatpush.msra.mxu0 0.0
        %755 = vmatpush.msra.mxu0 0.0
        %756 = vmatpush.msra.mxu0 0.0
        %757 = vmatpush.msra.mxu0 0.0
        %758 = vmatpush.msra.mxu0 0.0
        %759 = vmatpush.msra.mxu0 0.0
        %760 = vmatpush.msra.mxu0 0.0
        %761 = vmatpush.msra.mxu0 %v741
        %762 = vmatmul.f32.gmra.mxu0 %v744
        %v763 = vpop.f32.mrf.mxu0
        %v764 = vadd.f32 0.0, %v763
        %765 = vdwg.mxu0
        %766 = vrot.lane.b32.xlu0 %v384, 64
        %v767 = vpop.permute.xlu0 %766
        %v770 = vsel %vm404, %v708, 0
        %772 = vmatpush.msra.mxu0 0.0
        %773 = vmatpush.msra.mxu0 0.0
        %774 = vmatpush.msra.mxu0 0.0
        %775 = vmatpush.msra.mxu0 0.0
        %776 = vmatpush.msra.mxu0 0.0
        %777 = vmatpush.msra.mxu0 0.0
        %778 = vmatpush.msra.mxu0 0.0
        %779 = vmatpush.msra.mxu0 0.0
        %780 = vmatpush.msra.mxu0 0.0
        %781 = vmatpush.msra.mxu0 0.0
        %782 = vmatpush.msra.mxu0 0.0
        %783 = vmatpush.msra.mxu0 0.0
        %784 = vmatpush.msra.mxu0 0.0
        %785 = vmatpush.msra.mxu0 0.0
        %786 = vmatpush.msra.mxu0 0.0
        %787 = vmatpush.msra.mxu0 %v767
        %788 = vmatmul.f32.gmra.mxu0 %v770
        %v789 = vpop.f32.mrf.mxu0
        %v790 = vadd.f32 0.0, %v789
        %791 = vdwg.mxu0
        %792 = vrot.lane.b32.xlu0 %v387, 64
        %v793 = vpop.permute.xlu0 %792
        %v796 = vsel %vm404, %v709, 0
        %798 = vmatpush.msra.mxu0 0.0
        %799 = vmatpush.msra.mxu0 0.0
        %800 = vmatpush.msra.mxu0 0.0
        %801 = vmatpush.msra.mxu0 0.0
        %802 = vmatpush.msra.mxu0 0.0
        %803 = vmatpush.msra.mxu0 0.0
        %804 = vmatpush.msra.mxu0 0.0
        %805 = vmatpush.msra.mxu0 0.0
        %806 = vmatpush.msra.mxu0 0.0
        %807 = vmatpush.msra.mxu0 0.0
        %808 = vmatpush.msra.mxu0 0.0
        %809 = vmatpush.msra.mxu0 0.0
        %810 = vmatpush.msra.mxu0 0.0
        %811 = vmatpush.msra.mxu0 0.0
        %812 = vmatpush.msra.mxu0 0.0
        %813 = vmatpush.msra.mxu0 %v793
        %814 = vmatmul.f32.gmra.mxu0 %v796
        %v815 = vpop.f32.mrf.mxu0
        %v816 = vadd.f32 0.0, %v815
        %817 = vdwg.mxu0
        %818 = vrot.lane.b32.xlu0 %v390, 64
        %v819 = vpop.permute.xlu0 %818
        %v822 = vsel %vm404, %v710, 0
        %824 = vmatpush.msra.mxu0 0.0
        %825 = vmatpush.msra.mxu0 0.0
        %826 = vmatpush.msra.mxu0 0.0
        %827 = vmatpush.msra.mxu0 0.0
        %828 = vmatpush.msra.mxu0 0.0
        %829 = vmatpush.msra.mxu0 0.0
        %830 = vmatpush.msra.mxu0 0.0
        %831 = vmatpush.msra.mxu0 0.0
        %832 = vmatpush.msra.mxu0 0.0
        %833 = vmatpush.msra.mxu0 0.0
        %834 = vmatpush.msra.mxu0 0.0
        %835 = vmatpush.msra.mxu0 0.0
        %836 = vmatpush.msra.mxu0 0.0
        %837 = vmatpush.msra.mxu0 0.0
        %838 = vmatpush.msra.mxu0 0.0
        %839 = vmatpush.msra.mxu0 %v819
        %840 = vmatmul.f32.gmra.mxu0 %v822
        %v841 = vpop.f32.mrf.mxu0
        %v842 = vadd.f32 0.0, %v841
        %843 = vdwg.mxu0
        %844 = vrot.lane.b32.xlu0 %v393, 64
        %v845 = vpop.permute.xlu0 %844
        %v848 = vsel %vm404, %v711, 0
        %850 = vmatpush.msra.mxu0 0.0
        %851 = vmatpush.msra.mxu0 0.0
        %852 = vmatpush.msra.mxu0 0.0
        %853 = vmatpush.msra.mxu0 0.0
        %854 = vmatpush.msra.mxu0 0.0
        %855 = vmatpush.msra.mxu0 0.0
        %856 = vmatpush.msra.mxu0 0.0
        %857 = vmatpush.msra.mxu0 0.0
        %858 = vmatpush.msra.mxu0 0.0
        %859 = vmatpush.msra.mxu0 0.0
        %860 = vmatpush.msra.mxu0 0.0
        %861 = vmatpush.msra.mxu0 0.0
        %862 = vmatpush.msra.mxu0 0.0
        %863 = vmatpush.msra.mxu0 0.0
        %864 = vmatpush.msra.mxu0 0.0
        %865 = vmatpush.msra.mxu0 %v845
        %866 = vmatmul.f32.gmra.mxu0 %v848
        %v867 = vpop.f32.mrf.mxu0
        %v868 = vadd.f32 0.0, %v867
        %869 = vdwg.mxu0
        %870 = vrot.lane.b32.xlu0 %v396, 64
        %v871 = vpop.permute.xlu0 %870
        %v874 = vsel %vm404, %v712, 0
        %876 = vmatpush.msra.mxu0 0.0
        %877 = vmatpush.msra.mxu0 0.0
        %878 = vmatpush.msra.mxu0 0.0
        %879 = vmatpush.msra.mxu0 0.0
        %880 = vmatpush.msra.mxu0 0.0
        %881 = vmatpush.msra.mxu0 0.0
        %882 = vmatpush.msra.mxu0 0.0
        %883 = vmatpush.msra.mxu0 0.0
        %884 = vmatpush.msra.mxu0 0.0
        %885 = vmatpush.msra.mxu0 0.0
        %886 = vmatpush.msra.mxu0 0.0
        %887 = vmatpush.msra.mxu0 0.0
        %888 = vmatpush.msra.mxu0 0.0
        %889 = vmatpush.msra.mxu0 0.0
        %890 = vmatpush.msra.mxu0 0.0
        %891 = vmatpush.msra.mxu0 %v871
        %892 = vmatmul.f32.gmra.mxu0 %v874
        %v893 = vpop.f32.mrf.mxu0
        %v894 = vadd.f32 0.0, %v893
        %895 = vdwg.mxu0
        %896 = vrot.lane.b32.xlu0 %v399, 64
        %v897 = vpop.permute.xlu0 %896
        %v900 = vsel %vm404, %v713, 0
        %902 = vmatpush.msra.mxu0 0.0
        %903 = vmatpush.msra.mxu0 0.0
        %904 = vmatpush.msra.mxu0 0.0
        %905 = vmatpush.msra.mxu0 0.0
        %906 = vmatpush.msra.mxu0 0.0
        %907 = vmatpush.msra.mxu0 0.0
        %908 = vmatpush.msra.mxu0 0.0
        %909 = vmatpush.msra.mxu0 0.0
        %910 = vmatpush.msra.mxu0 0.0
        %911 = vmatpush.msra.mxu0 0.0
        %912 = vmatpush.msra.mxu0 0.0
        %913 = vmatpush.msra.mxu0 0.0
        %914 = vmatpush.msra.mxu0 0.0
        %915 = vmatpush.msra.mxu0 0.0
        %916 = vmatpush.msra.mxu0 0.0
        %917 = vmatpush.msra.mxu0 %v897
        %918 = vmatmul.f32.gmra.mxu0 %v900
        %v919 = vpop.f32.mrf.mxu0
        %v920 = vadd.f32 0.0, %v919
        %921 = vdwg.mxu0
        %922 = vrot.lane.b32.xlu0 %v378, 120
        %v923 = vpop.permute.xlu0 %922
        %924 = vrot.lane.b32.xlu0 %v378, 88
        %v925 = vpop.permute.xlu0 %924
        %v926 = vsel %vm404, %v923, 0
        %v928 = vsel %vm404, %v925, 0
        %930 = vmatpush.xpose.msra.mxu0 0.0
        %931 = vmatpush.xpose.msra.mxu0 0.0
        %932 = vmatpush.xpose.msra.mxu0 0.0
        %933 = vmatpush.xpose.msra.mxu0 0.0
        %934 = vmatpush.xpose.msra.mxu0 0.0
        %935 = vmatpush.xpose.msra.mxu0 0.0
        %936 = vmatpush.xpose.msra.mxu0 0.0
        %937 = vmatpush.xpose.msra.mxu0 0.0
        %938 = vmatpush.xpose.msra.mxu0 0.0
        %939 = vmatpush.xpose.msra.mxu0 0.0
        %940 = vmatpush.xpose.msra.mxu0 0.0
        %941 = vmatpush.xpose.msra.mxu0 0.0
        %942 = vmatpush.xpose.msra.mxu0 0.0
        %943 = vmatpush.xpose.msra.mxu0 0.0
        %944 = vmatpush.xpose.msra.mxu0 0.0
        %945 = vmatpush.xpose.msra.mxu0 %v928
        %946 = vmatmul.f32.gmra.mxu0 %v926
        %v947 = vpop.f32.mrf.mxu0
        %v948 = vadd.f32 0.0, %v947
        %949 = vdwg.mxu0
        %950 = vrot.lane.b32.xlu0 %v381, 120
        %v951 = vpop.permute.xlu0 %950
        %952 = vrot.lane.b32.xlu0 %v381, 88
        %v953 = vpop.permute.xlu0 %952
        %v954 = vsel %vm404, %v951, 0
        %v956 = vsel %vm404, %v953, 0
        %958 = vmatpush.xpose.msra.mxu0 0.0
        %959 = vmatpush.xpose.msra.mxu0 0.0
        %960 = vmatpush.xpose.msra.mxu0 0.0
        %961 = vmatpush.xpose.msra.mxu0 0.0
        %962 = vmatpush.xpose.msra.mxu0 0.0
        %963 = vmatpush.xpose.msra.mxu0 0.0
        %964 = vmatpush.xpose.msra.mxu0 0.0
        %965 = vmatpush.xpose.msra.mxu0 0.0
        %966 = vmatpush.xpose.msra.mxu0 0.0
        %967 = vmatpush.xpose.msra.mxu0 0.0
        %968 = vmatpush.xpose.msra.mxu0 0.0
        %969 = vmatpush.xpose.msra.mxu0 0.0
        %970 = vmatpush.xpose.msra.mxu0 0.0
        %971 = vmatpush.xpose.msra.mxu0 0.0
        %972 = vmatpush.xpose.msra.mxu0 0.0
        %973 = vmatpush.xpose.msra.mxu0 %v956
        %974 = vmatmul.f32.gmra.mxu0 %v954
        %v975 = vpop.f32.mrf.mxu0
        %v976 = vadd.f32 0.0, %v975
        %977 = vdwg.mxu0
        %978 = vrot.lane.b32.xlu0 %v384, 120
        %v979 = vpop.permute.xlu0 %978
        %980 = vrot.lane.b32.xlu0 %v384, 88
        %v981 = vpop.permute.xlu0 %980
        %v982 = vsel %vm404, %v979, 0
        %v984 = vsel %vm404, %v981, 0
        %986 = vmatpush.xpose.msra.mxu0 0.0
        %987 = vmatpush.xpose.msra.mxu0 0.0
        %988 = vmatpush.xpose.msra.mxu0 0.0
        %989 = vmatpush.xpose.msra.mxu0 0.0
        %990 = vmatpush.xpose.msra.mxu0 0.0
        %991 = vmatpush.xpose.msra.mxu0 0.0
        %992 = vmatpush.xpose.msra.mxu0 0.0
        %993 = vmatpush.xpose.msra.mxu0 0.0
        %994 = vmatpush.xpose.msra.mxu0 0.0
        %995 = vmatpush.xpose.msra.mxu0 0.0
        %996 = vmatpush.xpose.msra.mxu0 0.0
        %997 = vmatpush.xpose.msra.mxu0 0.0
        %998 = vmatpush.xpose.msra.mxu0 0.0
        %999 = vmatpush.xpose.msra.mxu0 0.0
        %1000 = vmatpush.xpose.msra.mxu0 0.0
        %1001 = vmatpush.xpose.msra.mxu0 %v984
        %1002 = vmatmul.f32.gmra.mxu0 %v982
        %v1003 = vpop.f32.mrf.mxu0
        %v1004 = vadd.f32 0.0, %v1003
        %1005 = vdwg.mxu0
        %1006 = vrot.lane.b32.xlu0 %v387, 120
        %v1007 = vpop.permute.xlu0 %1006
        %1008 = vrot.lane.b32.xlu0 %v387, 88
        %v1009 = vpop.permute.xlu0 %1008
        %v1010 = vsel %vm404, %v1007, 0
        %v1012 = vsel %vm404, %v1009, 0
        %1014 = vmatpush.xpose.msra.mxu0 0.0
        %1015 = vmatpush.xpose.msra.mxu0 0.0
        %1016 = vmatpush.xpose.msra.mxu0 0.0
        %1017 = vmatpush.xpose.msra.mxu0 0.0
        %1018 = vmatpush.xpose.msra.mxu0 0.0
        %1019 = vmatpush.xpose.msra.mxu0 0.0
        %1020 = vmatpush.xpose.msra.mxu0 0.0
        %1021 = vmatpush.xpose.msra.mxu0 0.0
        %1022 = vmatpush.xpose.msra.mxu0 0.0
        %1023 = vmatpush.xpose.msra.mxu0 0.0
        %1024 = vmatpush.xpose.msra.mxu0 0.0
        %1025 = vmatpush.xpose.msra.mxu0 0.0
        %1026 = vmatpush.xpose.msra.mxu0 0.0
        %1027 = vmatpush.xpose.msra.mxu0 0.0
        %1028 = vmatpush.xpose.msra.mxu0 0.0
        %1029 = vmatpush.xpose.msra.mxu0 %v1012
        %1030 = vmatmul.f32.gmra.mxu0 %v1010
        %v1031 = vpop.f32.mrf.mxu0
        %v1032 = vadd.f32 0.0, %v1031
        %1033 = vdwg.mxu0
        %1034 = vrot.lane.b32.xlu0 %v390, 120
        %v1035 = vpop.permute.xlu0 %1034
        %1036 = vrot.lane.b32.xlu0 %v390, 88
        %v1037 = vpop.permute.xlu0 %1036
        %v1038 = vsel %vm404, %v1035, 0
        %v1040 = vsel %vm404, %v1037, 0
        %1042 = vmatpush.xpose.msra.mxu0 0.0
        %1043 = vmatpush.xpose.msra.mxu0 0.0
        %1044 = vmatpush.xpose.msra.mxu0 0.0
        %1045 = vmatpush.xpose.msra.mxu0 0.0
        %1046 = vmatpush.xpose.msra.mxu0 0.0
        %1047 = vmatpush.xpose.msra.mxu0 0.0
        %1048 = vmatpush.xpose.msra.mxu0 0.0
        %1049 = vmatpush.xpose.msra.mxu0 0.0
        %1050 = vmatpush.xpose.msra.mxu0 0.0
        %1051 = vmatpush.xpose.msra.mxu0 0.0
        %1052 = vmatpush.xpose.msra.mxu0 0.0
        %1053 = vmatpush.xpose.msra.mxu0 0.0
        %1054 = vmatpush.xpose.msra.mxu0 0.0
        %1055 = vmatpush.xpose.msra.mxu0 0.0
        %1056 = vmatpush.xpose.msra.mxu0 0.0
        %1057 = vmatpush.xpose.msra.mxu0 %v1040
        %1058 = vmatmul.f32.gmra.mxu0 %v1038
        %v1059 = vpop.f32.mrf.mxu0
        %v1060 = vadd.f32 0.0, %v1059
        %1061 = vdwg.mxu0
        %1062 = vrot.lane.b32.xlu0 %v393, 120
        %v1063 = vpop.permute.xlu0 %1062
        %1064 = vrot.lane.b32.xlu0 %v393, 88
        %v1065 = vpop.permute.xlu0 %1064
        %v1066 = vsel %vm404, %v1063, 0
        %v1068 = vsel %vm404, %v1065, 0
        %1070 = vmatpush.xpose.msra.mxu0 0.0
        %1071 = vmatpush.xpose.msra.mxu0 0.0
        %1072 = vmatpush.xpose.msra.mxu0 0.0
        %1073 = vmatpush.xpose.msra.mxu0 0.0
        %1074 = vmatpush.xpose.msra.mxu0 0.0
        %1075 = vmatpush.xpose.msra.mxu0 0.0
        %1076 = vmatpush.xpose.msra.mxu0 0.0
        %1077 = vmatpush.xpose.msra.mxu0 0.0
        %1078 = vmatpush.xpose.msra.mxu0 0.0
        %1079 = vmatpush.xpose.msra.mxu0 0.0
        %1080 = vmatpush.xpose.msra.mxu0 0.0
        %1081 = vmatpush.xpose.msra.mxu0 0.0
        %1082 = vmatpush.xpose.msra.mxu0 0.0
        %1083 = vmatpush.xpose.msra.mxu0 0.0
        %1084 = vmatpush.xpose.msra.mxu0 0.0
        %1085 = vmatpush.xpose.msra.mxu0 %v1068
        %1086 = vmatmul.f32.gmra.mxu0 %v1066
        %v1087 = vpop.f32.mrf.mxu0
        %v1088 = vadd.f32 0.0, %v1087
        %1089 = vdwg.mxu0
        %1090 = vrot.lane.b32.xlu0 %v396, 120
        %v1091 = vpop.permute.xlu0 %1090
        %1092 = vrot.lane.b32.xlu0 %v396, 88
        %v1093 = vpop.permute.xlu0 %1092
        %v1094 = vsel %vm404, %v1091, 0
        %v1096 = vsel %vm404, %v1093, 0
        %1098 = vmatpush.xpose.msra.mxu0 0.0
        %1099 = vmatpush.xpose.msra.mxu0 0.0
        %1100 = vmatpush.xpose.msra.mxu0 0.0
        %1101 = vmatpush.xpose.msra.mxu0 0.0
        %1102 = vmatpush.xpose.msra.mxu0 0.0
        %1103 = vmatpush.xpose.msra.mxu0 0.0
        %1104 = vmatpush.xpose.msra.mxu0 0.0
        %1105 = vmatpush.xpose.msra.mxu0 0.0
        %1106 = vmatpush.xpose.msra.mxu0 0.0
        %1107 = vmatpush.xpose.msra.mxu0 0.0
        %1108 = vmatpush.xpose.msra.mxu0 0.0
        %1109 = vmatpush.xpose.msra.mxu0 0.0
        %1110 = vmatpush.xpose.msra.mxu0 0.0
        %1111 = vmatpush.xpose.msra.mxu0 0.0
        %1112 = vmatpush.xpose.msra.mxu0 0.0
        %1113 = vmatpush.xpose.msra.mxu0 %v1096
        %1114 = vmatmul.f32.gmra.mxu0 %v1094
        %v1115 = vpop.f32.mrf.mxu0
        %v1116 = vadd.f32 0.0, %v1115
        %1117 = vdwg.mxu0
        %1118 = vrot.lane.b32.xlu0 %v399, 120
        %v1119 = vpop.permute.xlu0 %1118
        %1120 = vrot.lane.b32.xlu0 %v399, 88
        %v1121 = vpop.permute.xlu0 %1120
        %v1122 = vsel %vm404, %v1119, 0
        %v1124 = vsel %vm404, %v1121, 0
        %1126 = vmatpush.xpose.msra.mxu0 0.0
        %1127 = vmatpush.xpose.msra.mxu0 0.0
        %1128 = vmatpush.xpose.msra.mxu0 0.0
        %1129 = vmatpush.xpose.msra.mxu0 0.0
        %1130 = vmatpush.xpose.msra.mxu0 0.0
        %1131 = vmatpush.xpose.msra.mxu0 0.0
        %1132 = vmatpush.xpose.msra.mxu0 0.0
        %1133 = vmatpush.xpose.msra.mxu0 0.0
        %1134 = vmatpush.xpose.msra.mxu0 0.0
        %1135 = vmatpush.xpose.msra.mxu0 0.0
        %1136 = vmatpush.xpose.msra.mxu0 0.0
        %1137 = vmatpush.xpose.msra.mxu0 0.0
        %1138 = vmatpush.xpose.msra.mxu0 0.0
        %1139 = vmatpush.xpose.msra.mxu0 0.0
        %1140 = vmatpush.xpose.msra.mxu0 0.0
        %1141 = vmatpush.xpose.msra.mxu0 %v1124
        %1142 = vmatmul.f32.gmra.mxu0 %v1122
        %v1143 = vpop.f32.mrf.mxu0
        %v1144 = vadd.f32 0.0, %v1143
        %1145 = vdwg.mxu0
        %v1146 = vmul.f32 %v948, 0.35355338
        %v1147 = vmul.f32 %v976, 0.35355338
        %v1148 = vmul.f32 %v1004, 0.35355338
        %v1149 = vmul.f32 %v1032, 0.35355338
        %v1150 = vmul.f32 %v1060, 0.35355338
        %v1151 = vmul.f32 %v1088, 0.35355338
        %v1152 = vmul.f32 %v1116, 0.35355338
        %v1153 = vmul.f32 %v1144, 0.35355338
        %v1154 = vsel %vm404, %v1146, -inf
        %1155 = vmax.xlane.f32.xlu0 %v1154
        %v1156 = vpop.xlane.xlu0 %1155
        %v1157 = vsel %vm404, %v1147, -inf
        %1158 = vmax.xlane.f32.xlu0 %v1157
        %v1159 = vpop.xlane.xlu0 %1158
        %v1160 = vsel %vm404, %v1148, -inf
        %1161 = vmax.xlane.f32.xlu0 %v1160
        %v1162 = vpop.xlane.xlu0 %1161
        %v1163 = vsel %vm404, %v1149, -inf
        %1164 = vmax.xlane.f32.xlu0 %v1163
        %v1165 = vpop.xlane.xlu0 %1164
        %v1166 = vsel %vm404, %v1150, -inf
        %1167 = vmax.xlane.f32.xlu0 %v1166
        %v1168 = vpop.xlane.xlu0 %1167
        %v1169 = vsel %vm404, %v1151, -inf
        %1170 = vmax.xlane.f32.xlu0 %v1169
        %v1171 = vpop.xlane.xlu0 %1170
        %v1172 = vsel %vm404, %v1152, -inf
        %1173 = vmax.xlane.f32.xlu0 %v1172
        %v1174 = vpop.xlane.xlu0 %1173
        %v1175 = vsel %vm404, %v1153, -inf
        %1176 = vmax.xlane.f32.xlu0 %v1175
        %v1177 = vpop.xlane.xlu0 %1176
        %v1178 = vsub.f32 %v1146, %v1156
        %v1179 = vsub.f32 %v1147, %v1159
        %v1180 = vsub.f32 %v1148, %v1162
        %v1181 = vsub.f32 %v1149, %v1165
        %v1182 = vsub.f32 %v1150, %v1168
        %v1183 = vsub.f32 %v1151, %v1171
        %v1184 = vsub.f32 %v1152, %v1174
        %v1185 = vsub.f32 %v1153, %v1177
        %v1186 = vmul.f32 %v1178, 1.442695
        %v1187 = vpow.pop %v1186
        %v1188 = vmul.f32 %v1179, 1.442695
        %v1189 = vpow.pop %v1188
        %v1190 = vmul.f32 %v1180, 1.442695
        %v1191 = vpow.pop %v1190
        %v1192 = vmul.f32 %v1181, 1.442695
        %v1193 = vpow.pop %v1192
        %v1194 = vmul.f32 %v1182, 1.442695
        %v1195 = vpow.pop %v1194
        %v1196 = vmul.f32 %v1183, 1.442695
        %v1197 = vpow.pop %v1196
        %v1198 = vmul.f32 %v1184, 1.442695
        %v1199 = vpow.pop %v1198
        %v1200 = vmul.f32 %v1185, 1.442695
        %v1201 = vpow.pop %v1200
        %v1202 = vsel %vm404, %v1187, 0.0
        %1203 = vadd.xlane.f32.xlu0 %v1202
        %v1204 = vpop.xlane.xlu0 %1203
        %v1205 = vsel %vm404, %v1189, 0.0
        %1206 = vadd.xlane.f32.xlu0 %v1205
        %v1207 = vpop.xlane.xlu0 %1206
        %v1208 = vsel %vm404, %v1191, 0.0
        %1209 = vadd.xlane.f32.xlu0 %v1208
        %v1210 = vpop.xlane.xlu0 %1209
        %v1211 = vsel %vm404, %v1193, 0.0
        %1212 = vadd.xlane.f32.xlu0 %v1211
        %v1213 = vpop.xlane.xlu0 %1212
        %v1214 = vsel %vm404, %v1195, 0.0
        %1215 = vadd.xlane.f32.xlu0 %v1214
        %v1216 = vpop.xlane.xlu0 %1215
        %v1217 = vsel %vm404, %v1197, 0.0
        %1218 = vadd.xlane.f32.xlu0 %v1217
        %v1219 = vpop.xlane.xlu0 %1218
        %v1220 = vsel %vm404, %v1199, 0.0
        %1221 = vadd.xlane.f32.xlu0 %v1220
        %v1222 = vpop.xlane.xlu0 %1221
        %v1223 = vsel %vm404, %v1201, 0.0
        %1224 = vadd.xlane.f32.xlu0 %v1223
        %v1225 = vpop.xlane.xlu0 %1224
        %v1226 = vrcp.pop %v1204
        %v1227 = vrcp.pop %v1207
        %v1228 = vrcp.pop %v1210
        %v1229 = vrcp.pop %v1213
        %v1230 = vrcp.pop %v1216
        %v1231 = vrcp.pop %v1219
        %v1232 = vrcp.pop %v1222
        %v1233 = vrcp.pop %v1225
        %v1234 = vmul.f32 %v1187, %v1226
        %v1235 = vmul.f32 %v1189, %v1227
        %v1236 = vmul.f32 %v1191, %v1228
        %v1237 = vmul.f32 %v1193, %v1229
        %v1238 = vmul.f32 %v1195, %v1230
        %v1239 = vmul.f32 %v1197, %v1231
        %v1240 = vmul.f32 %v1199, %v1232
        %v1241 = vmul.f32 %v1201, %v1233
        %1242 = vrot.lane.b32.xlu0 %v378, 56
        %v1243 = vpop.permute.xlu0 %1242
        %v1246 = vsel %vm404, %v1234, 0
        %1248 = vmatpush.msra.mxu0 0.0
        %1249 = vmatpush.msra.mxu0 0.0
        %1250 = vmatpush.msra.mxu0 0.0
        %1251 = vmatpush.msra.mxu0 0.0
        %1252 = vmatpush.msra.mxu0 0.0
        %1253 = vmatpush.msra.mxu0 0.0
        %1254 = vmatpush.msra.mxu0 0.0
        %1255 = vmatpush.msra.mxu0 0.0
        %1256 = vmatpush.msra.mxu0 0.0
        %1257 = vmatpush.msra.mxu0 0.0
        %1258 = vmatpush.msra.mxu0 0.0
        %1259 = vmatpush.msra.mxu0 0.0
        %1260 = vmatpush.msra.mxu0 0.0
        %1261 = vmatpush.msra.mxu0 0.0
        %1262 = vmatpush.msra.mxu0 0.0
        %1263 = vmatpush.msra.mxu0 %v1243
        %1264 = vmatmul.f32.gmra.mxu0 %v1246
        %v1265 = vpop.f32.mrf.mxu0
        %v1266 = vadd.f32 0.0, %v1265
        %1267 = vdwg.mxu0
        %1268 = vrot.lane.b32.xlu0 %v381, 56
        %v1269 = vpop.permute.xlu0 %1268
        %v1272 = vsel %vm404, %v1235, 0
        %1274 = vmatpush.msra.mxu0 0.0
        %1275 = vmatpush.msra.mxu0 0.0
        %1276 = vmatpush.msra.mxu0 0.0
        %1277 = vmatpush.msra.mxu0 0.0
        %1278 = vmatpush.msra.mxu0 0.0
        %1279 = vmatpush.msra.mxu0 0.0
        %1280 = vmatpush.msra.mxu0 0.0
        %1281 = vmatpush.msra.mxu0 0.0
        %1282 = vmatpush.msra.mxu0 0.0
        %1283 = vmatpush.msra.mxu0 0.0
        %1284 = vmatpush.msra.mxu0 0.0
        %1285 = vmatpush.msra.mxu0 0.0
        %1286 = vmatpush.msra.mxu0 0.0
        %1287 = vmatpush.msra.mxu0 0.0
        %1288 = vmatpush.msra.mxu0 0.0
        %1289 = vmatpush.msra.mxu0 %v1269
        %1290 = vmatmul.f32.gmra.mxu0 %v1272
        %v1291 = vpop.f32.mrf.mxu0
        %v1292 = vadd.f32 0.0, %v1291
        %1293 = vdwg.mxu0
        %1294 = vrot.lane.b32.xlu0 %v384, 56
        %v1295 = vpop.permute.xlu0 %1294
        %v1298 = vsel %vm404, %v1236, 0
        %1300 = vmatpush.msra.mxu0 0.0
        %1301 = vmatpush.msra.mxu0 0.0
        %1302 = vmatpush.msra.mxu0 0.0
        %1303 = vmatpush.msra.mxu0 0.0
        %1304 = vmatpush.msra.mxu0 0.0
        %1305 = vmatpush.msra.mxu0 0.0
        %1306 = vmatpush.msra.mxu0 0.0
        %1307 = vmatpush.msra.mxu0 0.0
        %1308 = vmatpush.msra.mxu0 0.0
        %1309 = vmatpush.msra.mxu0 0.0
        %1310 = vmatpush.msra.mxu0 0.0
        %1311 = vmatpush.msra.mxu0 0.0
        %1312 = vmatpush.msra.mxu0 0.0
        %1313 = vmatpush.msra.mxu0 0.0
        %1314 = vmatpush.msra.mxu0 0.0
        %1315 = vmatpush.msra.mxu0 %v1295
        %1316 = vmatmul.f32.gmra.mxu0 %v1298
        %v1317 = vpop.f32.mrf.mxu0
        %v1318 = vadd.f32 0.0, %v1317
        %1319 = vdwg.mxu0
        %1320 = vrot.lane.b32.xlu0 %v387, 56
        %v1321 = vpop.permute.xlu0 %1320
        %v1324 = vsel %vm404, %v1237, 0
        %1326 = vmatpush.msra.mxu0 0.0
        %1327 = vmatpush.msra.mxu0 0.0
        %1328 = vmatpush.msra.mxu0 0.0
        %1329 = vmatpush.msra.mxu0 0.0
        %1330 = vmatpush.msra.mxu0 0.0
        %1331 = vmatpush.msra.mxu0 0.0
        %1332 = vmatpush.msra.mxu0 0.0
        %1333 = vmatpush.msra.mxu0 0.0
        %1334 = vmatpush.msra.mxu0 0.0
        %1335 = vmatpush.msra.mxu0 0.0
        %1336 = vmatpush.msra.mxu0 0.0
        %1337 = vmatpush.msra.mxu0 0.0
        %1338 = vmatpush.msra.mxu0 0.0
        %1339 = vmatpush.msra.mxu0 0.0
        %1340 = vmatpush.msra.mxu0 0.0
        %1341 = vmatpush.msra.mxu0 %v1321
        %1342 = vmatmul.f32.gmra.mxu0 %v1324
        %v1343 = vpop.f32.mrf.mxu0
        %v1344 = vadd.f32 0.0, %v1343
        %1345 = vdwg.mxu0
        %1346 = vrot.lane.b32.xlu0 %v390, 56
        %v1347 = vpop.permute.xlu0 %1346
        %v1350 = vsel %vm404, %v1238, 0
        %1352 = vmatpush.msra.mxu0 0.0
        %1353 = vmatpush.msra.mxu0 0.0
        %1354 = vmatpush.msra.mxu0 0.0
        %1355 = vmatpush.msra.mxu0 0.0
        %1356 = vmatpush.msra.mxu0 0.0
        %1357 = vmatpush.msra.mxu0 0.0
        %1358 = vmatpush.msra.mxu0 0.0
        %1359 = vmatpush.msra.mxu0 0.0
        %1360 = vmatpush.msra.mxu0 0.0
        %1361 = vmatpush.msra.mxu0 0.0
        %1362 = vmatpush.msra.mxu0 0.0
        %1363 = vmatpush.msra.mxu0 0.0
        %1364 = vmatpush.msra.mxu0 0.0
        %1365 = vmatpush.msra.mxu0 0.0
        %1366 = vmatpush.msra.mxu0 0.0
        %1367 = vmatpush.msra.mxu0 %v1347
        %1368 = vmatmul.f32.gmra.mxu0 %v1350
        %v1369 = vpop.f32.mrf.mxu0
        %v1370 = vadd.f32 0.0, %v1369
        %1371 = vdwg.mxu0
        %1372 = vrot.lane.b32.xlu0 %v393, 56
        %v1373 = vpop.permute.xlu0 %1372
        %v1376 = vsel %vm404, %v1239, 0
        %1378 = vmatpush.msra.mxu0 0.0
        %1379 = vmatpush.msra.mxu0 0.0
        %1380 = vmatpush.msra.mxu0 0.0
        %1381 = vmatpush.msra.mxu0 0.0
        %1382 = vmatpush.msra.mxu0 0.0
        %1383 = vmatpush.msra.mxu0 0.0
        %1384 = vmatpush.msra.mxu0 0.0
        %1385 = vmatpush.msra.mxu0 0.0
        %1386 = vmatpush.msra.mxu0 0.0
        %1387 = vmatpush.msra.mxu0 0.0
        %1388 = vmatpush.msra.mxu0 0.0
        %1389 = vmatpush.msra.mxu0 0.0
        %1390 = vmatpush.msra.mxu0 0.0
        %1391 = vmatpush.msra.mxu0 0.0
        %1392 = vmatpush.msra.mxu0 0.0
        %1393 = vmatpush.msra.mxu0 %v1373
        %1394 = vmatmul.f32.gmra.mxu0 %v1376
        %v1395 = vpop.f32.mrf.mxu0
        %v1396 = vadd.f32 0.0, %v1395
        %1397 = vdwg.mxu0
        %1398 = vrot.lane.b32.xlu0 %v396, 56
        %v1399 = vpop.permute.xlu0 %1398
        %v1402 = vsel %vm404, %v1240, 0
        %1404 = vmatpush.msra.mxu0 0.0
        %1405 = vmatpush.msra.mxu0 0.0
        %1406 = vmatpush.msra.mxu0 0.0
        %1407 = vmatpush.msra.mxu0 0.0
        %1408 = vmatpush.msra.mxu0 0.0
        %1409 = vmatpush.msra.mxu0 0.0
        %1410 = vmatpush.msra.mxu0 0.0
        %1411 = vmatpush.msra.mxu0 0.0
        %1412 = vmatpush.msra.mxu0 0.0
        %1413 = vmatpush.msra.mxu0 0.0
        %1414 = vmatpush.msra.mxu0 0.0
        %1415 = vmatpush.msra.mxu0 0.0
        %1416 = vmatpush.msra.mxu0 0.0
        %1417 = vmatpush.msra.mxu0 0.0
        %1418 = vmatpush.msra.mxu0 0.0
        %1419 = vmatpush.msra.mxu0 %v1399
        %1420 = vmatmul.f32.gmra.mxu0 %v1402
        %v1421 = vpop.f32.mrf.mxu0
        %v1422 = vadd.f32 0.0, %v1421
        %1423 = vdwg.mxu0
        %1424 = vrot.lane.b32.xlu0 %v399, 56
        %v1425 = vpop.permute.xlu0 %1424
        %v1428 = vsel %vm404, %v1241, 0
        %1430 = vmatpush.msra.mxu0 0.0
        %1431 = vmatpush.msra.mxu0 0.0
        %1432 = vmatpush.msra.mxu0 0.0
        %1433 = vmatpush.msra.mxu0 0.0
        %1434 = vmatpush.msra.mxu0 0.0
        %1435 = vmatpush.msra.mxu0 0.0
        %1436 = vmatpush.msra.mxu0 0.0
        %1437 = vmatpush.msra.mxu0 0.0
        %1438 = vmatpush.msra.mxu0 0.0
        %1439 = vmatpush.msra.mxu0 0.0
        %1440 = vmatpush.msra.mxu0 0.0
        %1441 = vmatpush.msra.mxu0 0.0
        %1442 = vmatpush.msra.mxu0 0.0
        %1443 = vmatpush.msra.mxu0 0.0
        %1444 = vmatpush.msra.mxu0 0.0
        %1445 = vmatpush.msra.mxu0 %v1425
        %1446 = vmatmul.f32.gmra.mxu0 %v1428
        %v1447 = vpop.f32.mrf.mxu0
        %v1448 = vadd.f32 0.0, %v1447
        %1449 = vdwg.mxu0
        %1450 = vrot.lane.b32.xlu0 %v378, 112
        %v1451 = vpop.permute.xlu0 %1450
        %1452 = vrot.lane.b32.xlu0 %v378, 80
        %v1453 = vpop.permute.xlu0 %1452
        %v1454 = vsel %vm404, %v1451, 0
        %v1456 = vsel %vm404, %v1453, 0
        %1458 = vmatpush.xpose.msra.mxu0 0.0
        %1459 = vmatpush.xpose.msra.mxu0 0.0
        %1460 = vmatpush.xpose.msra.mxu0 0.0
        %1461 = vmatpush.xpose.msra.mxu0 0.0
        %1462 = vmatpush.xpose.msra.mxu0 0.0
        %1463 = vmatpush.xpose.msra.mxu0 0.0
        %1464 = vmatpush.xpose.msra.mxu0 0.0
        %1465 = vmatpush.xpose.msra.mxu0 0.0
        %1466 = vmatpush.xpose.msra.mxu0 0.0
        %1467 = vmatpush.xpose.msra.mxu0 0.0
        %1468 = vmatpush.xpose.msra.mxu0 0.0
        %1469 = vmatpush.xpose.msra.mxu0 0.0
        %1470 = vmatpush.xpose.msra.mxu0 0.0
        %1471 = vmatpush.xpose.msra.mxu0 0.0
        %1472 = vmatpush.xpose.msra.mxu0 0.0
        %1473 = vmatpush.xpose.msra.mxu0 %v1456
        %1474 = vmatmul.f32.gmra.mxu0 %v1454
        %v1475 = vpop.f32.mrf.mxu0
        %v1476 = vadd.f32 0.0, %v1475
        %1477 = vdwg.mxu0
        %1478 = vrot.lane.b32.xlu0 %v381, 112
        %v1479 = vpop.permute.xlu0 %1478
        %1480 = vrot.lane.b32.xlu0 %v381, 80
        %v1481 = vpop.permute.xlu0 %1480
        %v1482 = vsel %vm404, %v1479, 0
        %v1484 = vsel %vm404, %v1481, 0
        %1486 = vmatpush.xpose.msra.mxu0 0.0
        %1487 = vmatpush.xpose.msra.mxu0 0.0
        %1488 = vmatpush.xpose.msra.mxu0 0.0
        %1489 = vmatpush.xpose.msra.mxu0 0.0
        %1490 = vmatpush.xpose.msra.mxu0 0.0
        %1491 = vmatpush.xpose.msra.mxu0 0.0
        %1492 = vmatpush.xpose.msra.mxu0 0.0
        %1493 = vmatpush.xpose.msra.mxu0 0.0
        %1494 = vmatpush.xpose.msra.mxu0 0.0
        %1495 = vmatpush.xpose.msra.mxu0 0.0
        %1496 = vmatpush.xpose.msra.mxu0 0.0
        %1497 = vmatpush.xpose.msra.mxu0 0.0
        %1498 = vmatpush.xpose.msra.mxu0 0.0
        %1499 = vmatpush.xpose.msra.mxu0 0.0
        %1500 = vmatpush.xpose.msra.mxu0 0.0
        %1501 = vmatpush.xpose.msra.mxu0 %v1484
        %1502 = vmatmul.f32.gmra.mxu0 %v1482
        %v1503 = vpop.f32.mrf.mxu0
        %v1504 = vadd.f32 0.0, %v1503
        %1505 = vdwg.mxu0
        %1506 = vrot.lane.b32.xlu0 %v384, 112
        %v1507 = vpop.permute.xlu0 %1506
        %1508 = vrot.lane.b32.xlu0 %v384, 80
        %v1509 = vpop.permute.xlu0 %1508
        %v1510 = vsel %vm404, %v1507, 0
        %v1512 = vsel %vm404, %v1509, 0
        %1514 = vmatpush.xpose.msra.mxu0 0.0
        %1515 = vmatpush.xpose.msra.mxu0 0.0
        %1516 = vmatpush.xpose.msra.mxu0 0.0
        %1517 = vmatpush.xpose.msra.mxu0 0.0
        %1518 = vmatpush.xpose.msra.mxu0 0.0
        %1519 = vmatpush.xpose.msra.mxu0 0.0
        %1520 = vmatpush.xpose.msra.mxu0 0.0
        %1521 = vmatpush.xpose.msra.mxu0 0.0
        %1522 = vmatpush.xpose.msra.mxu0 0.0
        %1523 = vmatpush.xpose.msra.mxu0 0.0
        %1524 = vmatpush.xpose.msra.mxu0 0.0
        %1525 = vmatpush.xpose.msra.mxu0 0.0
        %1526 = vmatpush.xpose.msra.mxu0 0.0
        %1527 = vmatpush.xpose.msra.mxu0 0.0
        %1528 = vmatpush.xpose.msra.mxu0 0.0
        %1529 = vmatpush.xpose.msra.mxu0 %v1512
        %1530 = vmatmul.f32.gmra.mxu0 %v1510
        %v1531 = vpop.f32.mrf.mxu0
        %v1532 = vadd.f32 0.0, %v1531
        %1533 = vdwg.mxu0
        %1534 = vrot.lane.b32.xlu0 %v387, 112
        %v1535 = vpop.permute.xlu0 %1534
        %1536 = vrot.lane.b32.xlu0 %v387, 80
        %v1537 = vpop.permute.xlu0 %1536
        %v1538 = vsel %vm404, %v1535, 0
        %v1540 = vsel %vm404, %v1537, 0
        %1542 = vmatpush.xpose.msra.mxu0 0.0
        %1543 = vmatpush.xpose.msra.mxu0 0.0
        %1544 = vmatpush.xpose.msra.mxu0 0.0
        %1545 = vmatpush.xpose.msra.mxu0 0.0
        %1546 = vmatpush.xpose.msra.mxu0 0.0
        %1547 = vmatpush.xpose.msra.mxu0 0.0
        %1548 = vmatpush.xpose.msra.mxu0 0.0
        %1549 = vmatpush.xpose.msra.mxu0 0.0
        %1550 = vmatpush.xpose.msra.mxu0 0.0
        %1551 = vmatpush.xpose.msra.mxu0 0.0
        %1552 = vmatpush.xpose.msra.mxu0 0.0
        %1553 = vmatpush.xpose.msra.mxu0 0.0
        %1554 = vmatpush.xpose.msra.mxu0 0.0
        %1555 = vmatpush.xpose.msra.mxu0 0.0
        %1556 = vmatpush.xpose.msra.mxu0 0.0
        %1557 = vmatpush.xpose.msra.mxu0 %v1540
        %1558 = vmatmul.f32.gmra.mxu0 %v1538
        %v1559 = vpop.f32.mrf.mxu0
        %v1560 = vadd.f32 0.0, %v1559
        %1561 = vdwg.mxu0
        %1562 = vrot.lane.b32.xlu0 %v390, 112
        %v1563 = vpop.permute.xlu0 %1562
        %1564 = vrot.lane.b32.xlu0 %v390, 80
        %v1565 = vpop.permute.xlu0 %1564
        %v1566 = vsel %vm404, %v1563, 0
        %v1568 = vsel %vm404, %v1565, 0
        %1570 = vmatpush.xpose.msra.mxu0 0.0
        %1571 = vmatpush.xpose.msra.mxu0 0.0
        %1572 = vmatpush.xpose.msra.mxu0 0.0
        %1573 = vmatpush.xpose.msra.mxu0 0.0
        %1574 = vmatpush.xpose.msra.mxu0 0.0
        %1575 = vmatpush.xpose.msra.mxu0 0.0
        %1576 = vmatpush.xpose.msra.mxu0 0.0
        %1577 = vmatpush.xpose.msra.mxu0 0.0
        %1578 = vmatpush.xpose.msra.mxu0 0.0
        %1579 = vmatpush.xpose.msra.mxu0 0.0
        %1580 = vmatpush.xpose.msra.mxu0 0.0
        %1581 = vmatpush.xpose.msra.mxu0 0.0
        %1582 = vmatpush.xpose.msra.mxu0 0.0
        %1583 = vmatpush.xpose.msra.mxu0 0.0
        %1584 = vmatpush.xpose.msra.mxu0 0.0
        %1585 = vmatpush.xpose.msra.mxu0 %v1568
        %1586 = vmatmul.f32.gmra.mxu0 %v1566
        %v1587 = vpop.f32.mrf.mxu0
        %v1588 = vadd.f32 0.0, %v1587
        %1589 = vdwg.mxu0
        %1590 = vrot.lane.b32.xlu0 %v393, 112
        %v1591 = vpop.permute.xlu0 %1590
        %1592 = vrot.lane.b32.xlu0 %v393, 80
        %v1593 = vpop.permute.xlu0 %1592
        %v1594 = vsel %vm404, %v1591, 0
        %v1596 = vsel %vm404, %v1593, 0
        %1598 = vmatpush.xpose.msra.mxu0 0.0
        %1599 = vmatpush.xpose.msra.mxu0 0.0
        %1600 = vmatpush.xpose.msra.mxu0 0.0
        %1601 = vmatpush.xpose.msra.mxu0 0.0
        %1602 = vmatpush.xpose.msra.mxu0 0.0
        %1603 = vmatpush.xpose.msra.mxu0 0.0
        %1604 = vmatpush.xpose.msra.mxu0 0.0
        %1605 = vmatpush.xpose.msra.mxu0 0.0
        %1606 = vmatpush.xpose.msra.mxu0 0.0
        %1607 = vmatpush.xpose.msra.mxu0 0.0
        %1608 = vmatpush.xpose.msra.mxu0 0.0
        %1609 = vmatpush.xpose.msra.mxu0 0.0
        %1610 = vmatpush.xpose.msra.mxu0 0.0
        %1611 = vmatpush.xpose.msra.mxu0 0.0
        %1612 = vmatpush.xpose.msra.mxu0 0.0
        %1613 = vmatpush.xpose.msra.mxu0 %v1596
        %1614 = vmatmul.f32.gmra.mxu0 %v1594
        %v1615 = vpop.f32.mrf.mxu0
        %v1616 = vadd.f32 0.0, %v1615
        %1617 = vdwg.mxu0
        %1618 = vrot.lane.b32.xlu0 %v396, 112
        %v1619 = vpop.permute.xlu0 %1618
        %1620 = vrot.lane.b32.xlu0 %v396, 80
        %v1621 = vpop.permute.xlu0 %1620
        %v1622 = vsel %vm404, %v1619, 0
        %v1624 = vsel %vm404, %v1621, 0
        %1626 = vmatpush.xpose.msra.mxu0 0.0
        %1627 = vmatpush.xpose.msra.mxu0 0.0
        %1628 = vmatpush.xpose.msra.mxu0 0.0
        %1629 = vmatpush.xpose.msra.mxu0 0.0
        %1630 = vmatpush.xpose.msra.mxu0 0.0
        %1631 = vmatpush.xpose.msra.mxu0 0.0
        %1632 = vmatpush.xpose.msra.mxu0 0.0
        %1633 = vmatpush.xpose.msra.mxu0 0.0
        %1634 = vmatpush.xpose.msra.mxu0 0.0
        %1635 = vmatpush.xpose.msra.mxu0 0.0
        %1636 = vmatpush.xpose.msra.mxu0 0.0
        %1637 = vmatpush.xpose.msra.mxu0 0.0
        %1638 = vmatpush.xpose.msra.mxu0 0.0
        %1639 = vmatpush.xpose.msra.mxu0 0.0
        %1640 = vmatpush.xpose.msra.mxu0 0.0
        %1641 = vmatpush.xpose.msra.mxu0 %v1624
        %1642 = vmatmul.f32.gmra.mxu0 %v1622
        %v1643 = vpop.f32.mrf.mxu0
        %v1644 = vadd.f32 0.0, %v1643
        %1645 = vdwg.mxu0
        %1646 = vrot.lane.b32.xlu0 %v399, 112
        %v1647 = vpop.permute.xlu0 %1646
        %1648 = vrot.lane.b32.xlu0 %v399, 80
        %v1649 = vpop.permute.xlu0 %1648
        %v1650 = vsel %vm404, %v1647, 0
        %v1652 = vsel %vm404, %v1649, 0
        %1654 = vmatpush.xpose.msra.mxu0 0.0
        %1655 = vmatpush.xpose.msra.mxu0 0.0
        %1656 = vmatpush.xpose.msra.mxu0 0.0
        %1657 = vmatpush.xpose.msra.mxu0 0.0
        %1658 = vmatpush.xpose.msra.mxu0 0.0
        %1659 = vmatpush.xpose.msra.mxu0 0.0
        %1660 = vmatpush.xpose.msra.mxu0 0.0
        %1661 = vmatpush.xpose.msra.mxu0 0.0
        %1662 = vmatpush.xpose.msra.mxu0 0.0
        %1663 = vmatpush.xpose.msra.mxu0 0.0
        %1664 = vmatpush.xpose.msra.mxu0 0.0
        %1665 = vmatpush.xpose.msra.mxu0 0.0
        %1666 = vmatpush.xpose.msra.mxu0 0.0
        %1667 = vmatpush.xpose.msra.mxu0 0.0
        %1668 = vmatpush.xpose.msra.mxu0 0.0
        %1669 = vmatpush.xpose.msra.mxu0 %v1652
        %1670 = vmatmul.f32.gmra.mxu0 %v1650
        %v1671 = vpop.f32.mrf.mxu0
        %v1672 = vadd.f32 0.0, %v1671
        %1673 = vdwg.mxu0
        %v1674 = vmul.f32 %v1476, 0.35355338
        %v1675 = vmul.f32 %v1504, 0.35355338
        %v1676 = vmul.f32 %v1532, 0.35355338
        %v1677 = vmul.f32 %v1560, 0.35355338
        %v1678 = vmul.f32 %v1588, 0.35355338
        %v1679 = vmul.f32 %v1616, 0.35355338
        %v1680 = vmul.f32 %v1644, 0.35355338
        %v1681 = vmul.f32 %v1672, 0.35355338
        %v1682 = vsel %vm404, %v1674, -inf
        %1683 = vmax.xlane.f32.xlu0 %v1682
        %v1684 = vpop.xlane.xlu0 %1683
        %v1685 = vsel %vm404, %v1675, -inf
        %1686 = vmax.xlane.f32.xlu0 %v1685
        %v1687 = vpop.xlane.xlu0 %1686
        %v1688 = vsel %vm404, %v1676, -inf
        %1689 = vmax.xlane.f32.xlu0 %v1688
        %v1690 = vpop.xlane.xlu0 %1689
        %v1691 = vsel %vm404, %v1677, -inf
        %1692 = vmax.xlane.f32.xlu0 %v1691
        %v1693 = vpop.xlane.xlu0 %1692
        %v1694 = vsel %vm404, %v1678, -inf
        %1695 = vmax.xlane.f32.xlu0 %v1694
        %v1696 = vpop.xlane.xlu0 %1695
        %v1697 = vsel %vm404, %v1679, -inf
        %1698 = vmax.xlane.f32.xlu0 %v1697
        %v1699 = vpop.xlane.xlu0 %1698
        %v1700 = vsel %vm404, %v1680, -inf
        %1701 = vmax.xlane.f32.xlu0 %v1700
        %v1702 = vpop.xlane.xlu0 %1701
        %v1703 = vsel %vm404, %v1681, -inf
        %1704 = vmax.xlane.f32.xlu0 %v1703
        %v1705 = vpop.xlane.xlu0 %1704
        %v1706 = vsub.f32 %v1674, %v1684
        %v1707 = vsub.f32 %v1675, %v1687
        %v1708 = vsub.f32 %v1676, %v1690
        %v1709 = vsub.f32 %v1677, %v1693
        %v1710 = vsub.f32 %v1678, %v1696
        %v1711 = vsub.f32 %v1679, %v1699
        %v1712 = vsub.f32 %v1680, %v1702
        %v1713 = vsub.f32 %v1681, %v1705
        %v1714 = vmul.f32 %v1706, 1.442695
        %v1715 = vpow.pop %v1714
        %v1716 = vmul.f32 %v1707, 1.442695
        %v1717 = vpow.pop %v1716
        %v1718 = vmul.f32 %v1708, 1.442695
        %v1719 = vpow.pop %v1718
        %v1720 = vmul.f32 %v1709, 1.442695
        %v1721 = vpow.pop %v1720
        %v1722 = vmul.f32 %v1710, 1.442695
        %v1723 = vpow.pop %v1722
        %v1724 = vmul.f32 %v1711, 1.442695
        %v1725 = vpow.pop %v1724
        %v1726 = vmul.f32 %v1712, 1.442695
        %v1727 = vpow.pop %v1726
        %v1728 = vmul.f32 %v1713, 1.442695
        %v1729 = vpow.pop %v1728
        %v1730 = vsel %vm404, %v1715, 0.0
        %1731 = vadd.xlane.f32.xlu0 %v1730
        %v1732 = vpop.xlane.xlu0 %1731
        %v1733 = vsel %vm404, %v1717, 0.0
        %1734 = vadd.xlane.f32.xlu0 %v1733
        %v1735 = vpop.xlane.xlu0 %1734
        %v1736 = vsel %vm404, %v1719, 0.0
        %1737 = vadd.xlane.f32.xlu0 %v1736
        %v1738 = vpop.xlane.xlu0 %1737
        %v1739 = vsel %vm404, %v1721, 0.0
        %1740 = vadd.xlane.f32.xlu0 %v1739
        %v1741 = vpop.xlane.xlu0 %1740
        %v1742 = vsel %vm404, %v1723, 0.0
        %1743 = vadd.xlane.f32.xlu0 %v1742
        %v1744 = vpop.xlane.xlu0 %1743
        %v1745 = vsel %vm404, %v1725, 0.0
        %1746 = vadd.xlane.f32.xlu0 %v1745
        %v1747 = vpop.xlane.xlu0 %1746
        %v1748 = vsel %vm404, %v1727, 0.0
        %1749 = vadd.xlane.f32.xlu0 %v1748
        %v1750 = vpop.xlane.xlu0 %1749
        %v1751 = vsel %vm404, %v1729, 0.0
        %1752 = vadd.xlane.f32.xlu0 %v1751
        %v1753 = vpop.xlane.xlu0 %1752
        %v1754 = vrcp.pop %v1732
        %v1755 = vrcp.pop %v1735
        %v1756 = vrcp.pop %v1738
        %v1757 = vrcp.pop %v1741
        %v1758 = vrcp.pop %v1744
        %v1759 = vrcp.pop %v1747
        %v1760 = vrcp.pop %v1750
        %v1761 = vrcp.pop %v1753
        %v1762 = vmul.f32 %v1715, %v1754
        %v1763 = vmul.f32 %v1717, %v1755
        %v1764 = vmul.f32 %v1719, %v1756
        %v1765 = vmul.f32 %v1721, %v1757
        %v1766 = vmul.f32 %v1723, %v1758
        %v1767 = vmul.f32 %v1725, %v1759
        %v1768 = vmul.f32 %v1727, %v1760
        %v1769 = vmul.f32 %v1729, %v1761
        %1770 = vrot.lane.b32.xlu0 %v378, 48
        %v1771 = vpop.permute.xlu0 %1770
        %v1774 = vsel %vm404, %v1762, 0
        %1776 = vmatpush.msra.mxu0 0.0
        %1777 = vmatpush.msra.mxu0 0.0
        %1778 = vmatpush.msra.mxu0 0.0
        %1779 = vmatpush.msra.mxu0 0.0
        %1780 = vmatpush.msra.mxu0 0.0
        %1781 = vmatpush.msra.mxu0 0.0
        %1782 = vmatpush.msra.mxu0 0.0
        %1783 = vmatpush.msra.mxu0 0.0
        %1784 = vmatpush.msra.mxu0 0.0
        %1785 = vmatpush.msra.mxu0 0.0
        %1786 = vmatpush.msra.mxu0 0.0
        %1787 = vmatpush.msra.mxu0 0.0
        %1788 = vmatpush.msra.mxu0 0.0
        %1789 = vmatpush.msra.mxu0 0.0
        %1790 = vmatpush.msra.mxu0 0.0
        %1791 = vmatpush.msra.mxu0 %v1771
        %1792 = vmatmul.f32.gmra.mxu0 %v1774
        %v1793 = vpop.f32.mrf.mxu0
        %v1794 = vadd.f32 0.0, %v1793
        %1795 = vdwg.mxu0
        %1796 = vrot.lane.b32.xlu0 %v381, 48
        %v1797 = vpop.permute.xlu0 %1796
        %v1800 = vsel %vm404, %v1763, 0
        %1802 = vmatpush.msra.mxu0 0.0
        %1803 = vmatpush.msra.mxu0 0.0
        %1804 = vmatpush.msra.mxu0 0.0
        %1805 = vmatpush.msra.mxu0 0.0
        %1806 = vmatpush.msra.mxu0 0.0
        %1807 = vmatpush.msra.mxu0 0.0
        %1808 = vmatpush.msra.mxu0 0.0
        %1809 = vmatpush.msra.mxu0 0.0
        %1810 = vmatpush.msra.mxu0 0.0
        %1811 = vmatpush.msra.mxu0 0.0
        %1812 = vmatpush.msra.mxu0 0.0
        %1813 = vmatpush.msra.mxu0 0.0
        %1814 = vmatpush.msra.mxu0 0.0
        %1815 = vmatpush.msra.mxu0 0.0
        %1816 = vmatpush.msra.mxu0 0.0
        %1817 = vmatpush.msra.mxu0 %v1797
        %1818 = vmatmul.f32.gmra.mxu0 %v1800
        %v1819 = vpop.f32.mrf.mxu0
        %v1820 = vadd.f32 0.0, %v1819
        %1821 = vdwg.mxu0
        %1822 = vrot.lane.b32.xlu0 %v384, 48
        %v1823 = vpop.permute.xlu0 %1822
        %v1826 = vsel %vm404, %v1764, 0
        %1828 = vmatpush.msra.mxu0 0.0
        %1829 = vmatpush.msra.mxu0 0.0
        %1830 = vmatpush.msra.mxu0 0.0
        %1831 = vmatpush.msra.mxu0 0.0
        %1832 = vmatpush.msra.mxu0 0.0
        %1833 = vmatpush.msra.mxu0 0.0
        %1834 = vmatpush.msra.mxu0 0.0
        %1835 = vmatpush.msra.mxu0 0.0
        %1836 = vmatpush.msra.mxu0 0.0
        %1837 = vmatpush.msra.mxu0 0.0
        %1838 = vmatpush.msra.mxu0 0.0
        %1839 = vmatpush.msra.mxu0 0.0
        %1840 = vmatpush.msra.mxu0 0.0
        %1841 = vmatpush.msra.mxu0 0.0
        %1842 = vmatpush.msra.mxu0 0.0
        %1843 = vmatpush.msra.mxu0 %v1823
        %1844 = vmatmul.f32.gmra.mxu0 %v1826
        %v1845 = vpop.f32.mrf.mxu0
        %v1846 = vadd.f32 0.0, %v1845
        %1847 = vdwg.mxu0
        %1848 = vrot.lane.b32.xlu0 %v387, 48
        %v1849 = vpop.permute.xlu0 %1848
        %v1852 = vsel %vm404, %v1765, 0
        %1854 = vmatpush.msra.mxu0 0.0
        %1855 = vmatpush.msra.mxu0 0.0
        %1856 = vmatpush.msra.mxu0 0.0
        %1857 = vmatpush.msra.mxu0 0.0
        %1858 = vmatpush.msra.mxu0 0.0
        %1859 = vmatpush.msra.mxu0 0.0
        %1860 = vmatpush.msra.mxu0 0.0
        %1861 = vmatpush.msra.mxu0 0.0
        %1862 = vmatpush.msra.mxu0 0.0
        %1863 = vmatpush.msra.mxu0 0.0
        %1864 = vmatpush.msra.mxu0 0.0
        %1865 = vmatpush.msra.mxu0 0.0
        %1866 = vmatpush.msra.mxu0 0.0
        %1867 = vmatpush.msra.mxu0 0.0
        %1868 = vmatpush.msra.mxu0 0.0
        %1869 = vmatpush.msra.mxu0 %v1849
        %1870 = vmatmul.f32.gmra.mxu0 %v1852
        %v1871 = vpop.f32.mrf.mxu0
        %v1872 = vadd.f32 0.0, %v1871
        %1873 = vdwg.mxu0
        %1874 = vrot.lane.b32.xlu0 %v390, 48
        %v1875 = vpop.permute.xlu0 %1874
        %v1878 = vsel %vm404, %v1766, 0
        %1880 = vmatpush.msra.mxu0 0.0
        %1881 = vmatpush.msra.mxu0 0.0
        %1882 = vmatpush.msra.mxu0 0.0
        %1883 = vmatpush.msra.mxu0 0.0
        %1884 = vmatpush.msra.mxu0 0.0
        %1885 = vmatpush.msra.mxu0 0.0
        %1886 = vmatpush.msra.mxu0 0.0
        %1887 = vmatpush.msra.mxu0 0.0
        %1888 = vmatpush.msra.mxu0 0.0
        %1889 = vmatpush.msra.mxu0 0.0
        %1890 = vmatpush.msra.mxu0 0.0
        %1891 = vmatpush.msra.mxu0 0.0
        %1892 = vmatpush.msra.mxu0 0.0
        %1893 = vmatpush.msra.mxu0 0.0
        %1894 = vmatpush.msra.mxu0 0.0
        %1895 = vmatpush.msra.mxu0 %v1875
        %1896 = vmatmul.f32.gmra.mxu0 %v1878
        %v1897 = vpop.f32.mrf.mxu0
        %v1898 = vadd.f32 0.0, %v1897
        %1899 = vdwg.mxu0
        %1900 = vrot.lane.b32.xlu0 %v393, 48
        %v1901 = vpop.permute.xlu0 %1900
        %v1904 = vsel %vm404, %v1767, 0
        %1906 = vmatpush.msra.mxu0 0.0
        %1907 = vmatpush.msra.mxu0 0.0
        %1908 = vmatpush.msra.mxu0 0.0
        %1909 = vmatpush.msra.mxu0 0.0
        %1910 = vmatpush.msra.mxu0 0.0
        %1911 = vmatpush.msra.mxu0 0.0
        %1912 = vmatpush.msra.mxu0 0.0
        %1913 = vmatpush.msra.mxu0 0.0
        %1914 = vmatpush.msra.mxu0 0.0
        %1915 = vmatpush.msra.mxu0 0.0
        %1916 = vmatpush.msra.mxu0 0.0
        %1917 = vmatpush.msra.mxu0 0.0
        %1918 = vmatpush.msra.mxu0 0.0
        %1919 = vmatpush.msra.mxu0 0.0
        %1920 = vmatpush.msra.mxu0 0.0
        %1921 = vmatpush.msra.mxu0 %v1901
        %1922 = vmatmul.f32.gmra.mxu0 %v1904
        %v1923 = vpop.f32.mrf.mxu0
        %v1924 = vadd.f32 0.0, %v1923
        %1925 = vdwg.mxu0
        %1926 = vrot.lane.b32.xlu0 %v396, 48
        %v1927 = vpop.permute.xlu0 %1926
        %v1930 = vsel %vm404, %v1768, 0
        %1932 = vmatpush.msra.mxu0 0.0
        %1933 = vmatpush.msra.mxu0 0.0
        %1934 = vmatpush.msra.mxu0 0.0
        %1935 = vmatpush.msra.mxu0 0.0
        %1936 = vmatpush.msra.mxu0 0.0
        %1937 = vmatpush.msra.mxu0 0.0
        %1938 = vmatpush.msra.mxu0 0.0
        %1939 = vmatpush.msra.mxu0 0.0
        %1940 = vmatpush.msra.mxu0 0.0
        %1941 = vmatpush.msra.mxu0 0.0
        %1942 = vmatpush.msra.mxu0 0.0
        %1943 = vmatpush.msra.mxu0 0.0
        %1944 = vmatpush.msra.mxu0 0.0
        %1945 = vmatpush.msra.mxu0 0.0
        %1946 = vmatpush.msra.mxu0 0.0
        %1947 = vmatpush.msra.mxu0 %v1927
        %1948 = vmatmul.f32.gmra.mxu0 %v1930
        %v1949 = vpop.f32.mrf.mxu0
        %v1950 = vadd.f32 0.0, %v1949
        %1951 = vdwg.mxu0
        %1952 = vrot.lane.b32.xlu0 %v399, 48
        %v1953 = vpop.permute.xlu0 %1952
        %v1956 = vsel %vm404, %v1769, 0
        %1958 = vmatpush.msra.mxu0 0.0
        %1959 = vmatpush.msra.mxu0 0.0
        %1960 = vmatpush.msra.mxu0 0.0
        %1961 = vmatpush.msra.mxu0 0.0
        %1962 = vmatpush.msra.mxu0 0.0
        %1963 = vmatpush.msra.mxu0 0.0
        %1964 = vmatpush.msra.mxu0 0.0
        %1965 = vmatpush.msra.mxu0 0.0
        %1966 = vmatpush.msra.mxu0 0.0
        %1967 = vmatpush.msra.mxu0 0.0
        %1968 = vmatpush.msra.mxu0 0.0
        %1969 = vmatpush.msra.mxu0 0.0
        %1970 = vmatpush.msra.mxu0 0.0
        %1971 = vmatpush.msra.mxu0 0.0
        %1972 = vmatpush.msra.mxu0 0.0
        %1973 = vmatpush.msra.mxu0 %v1953
        %1974 = vmatmul.f32.gmra.mxu0 %v1956
        %v1975 = vpop.f32.mrf.mxu0
        %v1976 = vadd.f32 0.0, %v1975
        %1977 = vdwg.mxu0
        %1978 = vrot.lane.b32.xlu0 %v378, 104
        %v1979 = vpop.permute.xlu0 %1978
        %1980 = vrot.lane.b32.xlu0 %v378, 72
        %v1981 = vpop.permute.xlu0 %1980
        %v1982 = vsel %vm404, %v1979, 0
        %v1984 = vsel %vm404, %v1981, 0
        %1986 = vmatpush.xpose.msra.mxu0 0.0
        %1987 = vmatpush.xpose.msra.mxu0 0.0
        %1988 = vmatpush.xpose.msra.mxu0 0.0
        %1989 = vmatpush.xpose.msra.mxu0 0.0
        %1990 = vmatpush.xpose.msra.mxu0 0.0
        %1991 = vmatpush.xpose.msra.mxu0 0.0
        %1992 = vmatpush.xpose.msra.mxu0 0.0
        %1993 = vmatpush.xpose.msra.mxu0 0.0
        %1994 = vmatpush.xpose.msra.mxu0 0.0
        %1995 = vmatpush.xpose.msra.mxu0 0.0
        %1996 = vmatpush.xpose.msra.mxu0 0.0
        %1997 = vmatpush.xpose.msra.mxu0 0.0
        %1998 = vmatpush.xpose.msra.mxu0 0.0
        %1999 = vmatpush.xpose.msra.mxu0 0.0
        %2000 = vmatpush.xpose.msra.mxu0 0.0
        %2001 = vmatpush.xpose.msra.mxu0 %v1984
        %2002 = vmatmul.f32.gmra.mxu0 %v1982
        %v2003 = vpop.f32.mrf.mxu0
        %v2004 = vadd.f32 0.0, %v2003
        %2005 = vdwg.mxu0
        %2006 = vrot.lane.b32.xlu0 %v381, 104
        %v2007 = vpop.permute.xlu0 %2006
        %2008 = vrot.lane.b32.xlu0 %v381, 72
        %v2009 = vpop.permute.xlu0 %2008
        %v2010 = vsel %vm404, %v2007, 0
        %v2012 = vsel %vm404, %v2009, 0
        %2014 = vmatpush.xpose.msra.mxu0 0.0
        %2015 = vmatpush.xpose.msra.mxu0 0.0
        %2016 = vmatpush.xpose.msra.mxu0 0.0
        %2017 = vmatpush.xpose.msra.mxu0 0.0
        %2018 = vmatpush.xpose.msra.mxu0 0.0
        %2019 = vmatpush.xpose.msra.mxu0 0.0
        %2020 = vmatpush.xpose.msra.mxu0 0.0
        %2021 = vmatpush.xpose.msra.mxu0 0.0
        %2022 = vmatpush.xpose.msra.mxu0 0.0
        %2023 = vmatpush.xpose.msra.mxu0 0.0
        %2024 = vmatpush.xpose.msra.mxu0 0.0
        %2025 = vmatpush.xpose.msra.mxu0 0.0
        %2026 = vmatpush.xpose.msra.mxu0 0.0
        %2027 = vmatpush.xpose.msra.mxu0 0.0
        %2028 = vmatpush.xpose.msra.mxu0 0.0
        %2029 = vmatpush.xpose.msra.mxu0 %v2012
        %2030 = vmatmul.f32.gmra.mxu0 %v2010
        %v2031 = vpop.f32.mrf.mxu0
        %v2032 = vadd.f32 0.0, %v2031
        %2033 = vdwg.mxu0
        %2034 = vrot.lane.b32.xlu0 %v384, 104
        %v2035 = vpop.permute.xlu0 %2034
        %2036 = vrot.lane.b32.xlu0 %v384, 72
        %v2037 = vpop.permute.xlu0 %2036
        %v2038 = vsel %vm404, %v2035, 0
        %v2040 = vsel %vm404, %v2037, 0
        %2042 = vmatpush.xpose.msra.mxu0 0.0
        %2043 = vmatpush.xpose.msra.mxu0 0.0
        %2044 = vmatpush.xpose.msra.mxu0 0.0
        %2045 = vmatpush.xpose.msra.mxu0 0.0
        %2046 = vmatpush.xpose.msra.mxu0 0.0
        %2047 = vmatpush.xpose.msra.mxu0 0.0
        %2048 = vmatpush.xpose.msra.mxu0 0.0
        %2049 = vmatpush.xpose.msra.mxu0 0.0
        %2050 = vmatpush.xpose.msra.mxu0 0.0
        %2051 = vmatpush.xpose.msra.mxu0 0.0
        %2052 = vmatpush.xpose.msra.mxu0 0.0
        %2053 = vmatpush.xpose.msra.mxu0 0.0
        %2054 = vmatpush.xpose.msra.mxu0 0.0
        %2055 = vmatpush.xpose.msra.mxu0 0.0
        %2056 = vmatpush.xpose.msra.mxu0 0.0
        %2057 = vmatpush.xpose.msra.mxu0 %v2040
        %2058 = vmatmul.f32.gmra.mxu0 %v2038
        %v2059 = vpop.f32.mrf.mxu0
        %v2060 = vadd.f32 0.0, %v2059
        %2061 = vdwg.mxu0
        %2062 = vrot.lane.b32.xlu0 %v387, 104
        %v2063 = vpop.permute.xlu0 %2062
        %2064 = vrot.lane.b32.xlu0 %v387, 72
        %v2065 = vpop.permute.xlu0 %2064
        %v2066 = vsel %vm404, %v2063, 0
        %v2068 = vsel %vm404, %v2065, 0
        %2070 = vmatpush.xpose.msra.mxu0 0.0
        %2071 = vmatpush.xpose.msra.mxu0 0.0
        %2072 = vmatpush.xpose.msra.mxu0 0.0
        %2073 = vmatpush.xpose.msra.mxu0 0.0
        %2074 = vmatpush.xpose.msra.mxu0 0.0
        %2075 = vmatpush.xpose.msra.mxu0 0.0
        %2076 = vmatpush.xpose.msra.mxu0 0.0
        %2077 = vmatpush.xpose.msra.mxu0 0.0
        %2078 = vmatpush.xpose.msra.mxu0 0.0
        %2079 = vmatpush.xpose.msra.mxu0 0.0
        %2080 = vmatpush.xpose.msra.mxu0 0.0
        %2081 = vmatpush.xpose.msra.mxu0 0.0
        %2082 = vmatpush.xpose.msra.mxu0 0.0
        %2083 = vmatpush.xpose.msra.mxu0 0.0
        %2084 = vmatpush.xpose.msra.mxu0 0.0
        %2085 = vmatpush.xpose.msra.mxu0 %v2068
        %2086 = vmatmul.f32.gmra.mxu0 %v2066
        %v2087 = vpop.f32.mrf.mxu0
        %v2088 = vadd.f32 0.0, %v2087
        %2089 = vdwg.mxu0
        %2090 = vrot.lane.b32.xlu0 %v390, 104
        %v2091 = vpop.permute.xlu0 %2090
        %2092 = vrot.lane.b32.xlu0 %v390, 72
        %v2093 = vpop.permute.xlu0 %2092
        %v2094 = vsel %vm404, %v2091, 0
        %v2096 = vsel %vm404, %v2093, 0
        %2098 = vmatpush.xpose.msra.mxu0 0.0
        %2099 = vmatpush.xpose.msra.mxu0 0.0
        %2100 = vmatpush.xpose.msra.mxu0 0.0
        %2101 = vmatpush.xpose.msra.mxu0 0.0
        %2102 = vmatpush.xpose.msra.mxu0 0.0
        %2103 = vmatpush.xpose.msra.mxu0 0.0
        %2104 = vmatpush.xpose.msra.mxu0 0.0
        %2105 = vmatpush.xpose.msra.mxu0 0.0
        %2106 = vmatpush.xpose.msra.mxu0 0.0
        %2107 = vmatpush.xpose.msra.mxu0 0.0
        %2108 = vmatpush.xpose.msra.mxu0 0.0
        %2109 = vmatpush.xpose.msra.mxu0 0.0
        %2110 = vmatpush.xpose.msra.mxu0 0.0
        %2111 = vmatpush.xpose.msra.mxu0 0.0
        %2112 = vmatpush.xpose.msra.mxu0 0.0
        %2113 = vmatpush.xpose.msra.mxu0 %v2096
        %2114 = vmatmul.f32.gmra.mxu0 %v2094
        %v2115 = vpop.f32.mrf.mxu0
        %v2116 = vadd.f32 0.0, %v2115
        %2117 = vdwg.mxu0
        %2118 = vrot.lane.b32.xlu0 %v393, 104
        %v2119 = vpop.permute.xlu0 %2118
        %2120 = vrot.lane.b32.xlu0 %v393, 72
        %v2121 = vpop.permute.xlu0 %2120
        %v2122 = vsel %vm404, %v2119, 0
        %v2124 = vsel %vm404, %v2121, 0
        %2126 = vmatpush.xpose.msra.mxu0 0.0
        %2127 = vmatpush.xpose.msra.mxu0 0.0
        %2128 = vmatpush.xpose.msra.mxu0 0.0
        %2129 = vmatpush.xpose.msra.mxu0 0.0
        %2130 = vmatpush.xpose.msra.mxu0 0.0
        %2131 = vmatpush.xpose.msra.mxu0 0.0
        %2132 = vmatpush.xpose.msra.mxu0 0.0
        %2133 = vmatpush.xpose.msra.mxu0 0.0
        %2134 = vmatpush.xpose.msra.mxu0 0.0
        %2135 = vmatpush.xpose.msra.mxu0 0.0
        %2136 = vmatpush.xpose.msra.mxu0 0.0
        %2137 = vmatpush.xpose.msra.mxu0 0.0
        %2138 = vmatpush.xpose.msra.mxu0 0.0
        %2139 = vmatpush.xpose.msra.mxu0 0.0
        %2140 = vmatpush.xpose.msra.mxu0 0.0
        %2141 = vmatpush.xpose.msra.mxu0 %v2124
        %2142 = vmatmul.f32.gmra.mxu0 %v2122
        %v2143 = vpop.f32.mrf.mxu0
        %v2144 = vadd.f32 0.0, %v2143
        %2145 = vdwg.mxu0
        %2146 = vrot.lane.b32.xlu0 %v396, 104
        %v2147 = vpop.permute.xlu0 %2146
        %2148 = vrot.lane.b32.xlu0 %v396, 72
        %v2149 = vpop.permute.xlu0 %2148
        %v2150 = vsel %vm404, %v2147, 0
        %v2152 = vsel %vm404, %v2149, 0
        %2154 = vmatpush.xpose.msra.mxu0 0.0
        %2155 = vmatpush.xpose.msra.mxu0 0.0
        %2156 = vmatpush.xpose.msra.mxu0 0.0
        %2157 = vmatpush.xpose.msra.mxu0 0.0
        %2158 = vmatpush.xpose.msra.mxu0 0.0
        %2159 = vmatpush.xpose.msra.mxu0 0.0
        %2160 = vmatpush.xpose.msra.mxu0 0.0
        %2161 = vmatpush.xpose.msra.mxu0 0.0
        %2162 = vmatpush.xpose.msra.mxu0 0.0
        %2163 = vmatpush.xpose.msra.mxu0 0.0
        %2164 = vmatpush.xpose.msra.mxu0 0.0
        %2165 = vmatpush.xpose.msra.mxu0 0.0
        %2166 = vmatpush.xpose.msra.mxu0 0.0
        %2167 = vmatpush.xpose.msra.mxu0 0.0
        %2168 = vmatpush.xpose.msra.mxu0 0.0
        %2169 = vmatpush.xpose.msra.mxu0 %v2152
        %2170 = vmatmul.f32.gmra.mxu0 %v2150
        %v2171 = vpop.f32.mrf.mxu0
        %v2172 = vadd.f32 0.0, %v2171
        %2173 = vdwg.mxu0
        %2174 = vrot.lane.b32.xlu0 %v399, 104
        %v2175 = vpop.permute.xlu0 %2174
        %2176 = vrot.lane.b32.xlu0 %v399, 72
        %v2177 = vpop.permute.xlu0 %2176
        %v2178 = vsel %vm404, %v2175, 0
        %v2180 = vsel %vm404, %v2177, 0
        %2182 = vmatpush.xpose.msra.mxu0 0.0
        %2183 = vmatpush.xpose.msra.mxu0 0.0
        %2184 = vmatpush.xpose.msra.mxu0 0.0
        %2185 = vmatpush.xpose.msra.mxu0 0.0
        %2186 = vmatpush.xpose.msra.mxu0 0.0
        %2187 = vmatpush.xpose.msra.mxu0 0.0
        %2188 = vmatpush.xpose.msra.mxu0 0.0
        %2189 = vmatpush.xpose.msra.mxu0 0.0
        %2190 = vmatpush.xpose.msra.mxu0 0.0
        %2191 = vmatpush.xpose.msra.mxu0 0.0
        %2192 = vmatpush.xpose.msra.mxu0 0.0
        %2193 = vmatpush.xpose.msra.mxu0 0.0
        %2194 = vmatpush.xpose.msra.mxu0 0.0
        %2195 = vmatpush.xpose.msra.mxu0 0.0
        %2196 = vmatpush.xpose.msra.mxu0 0.0
        %2197 = vmatpush.xpose.msra.mxu0 %v2180
        %2198 = vmatmul.f32.gmra.mxu0 %v2178
        %v2199 = vpop.f32.mrf.mxu0
        %v2200 = vadd.f32 0.0, %v2199
        %2201 = vdwg.mxu0
        %v2202 = vmul.f32 %v2004, 0.35355338
        %v2203 = vmul.f32 %v2032, 0.35355338
        %v2204 = vmul.f32 %v2060, 0.35355338
        %v2205 = vmul.f32 %v2088, 0.35355338
        %v2206 = vmul.f32 %v2116, 0.35355338
        %v2207 = vmul.f32 %v2144, 0.35355338
        %v2208 = vmul.f32 %v2172, 0.35355338
        %v2209 = vmul.f32 %v2200, 0.35355338
        %v2210 = vsel %vm404, %v2202, -inf
        %2211 = vmax.xlane.f32.xlu0 %v2210
        %v2212 = vpop.xlane.xlu0 %2211
        %v2213 = vsel %vm404, %v2203, -inf
        %2214 = vmax.xlane.f32.xlu0 %v2213
        %v2215 = vpop.xlane.xlu0 %2214
        %v2216 = vsel %vm404, %v2204, -inf
        %2217 = vmax.xlane.f32.xlu0 %v2216
        %v2218 = vpop.xlane.xlu0 %2217
        %v2219 = vsel %vm404, %v2205, -inf
        %2220 = vmax.xlane.f32.xlu0 %v2219
        %v2221 = vpop.xlane.xlu0 %2220
        %v2222 = vsel %vm404, %v2206, -inf
        %2223 = vmax.xlane.f32.xlu0 %v2222
        %v2224 = vpop.xlane.xlu0 %2223
        %v2225 = vsel %vm404, %v2207, -inf
        %2226 = vmax.xlane.f32.xlu0 %v2225
        %v2227 = vpop.xlane.xlu0 %2226
        %v2228 = vsel %vm404, %v2208, -inf
        %2229 = vmax.xlane.f32.xlu0 %v2228
        %v2230 = vpop.xlane.xlu0 %2229
        %v2231 = vsel %vm404, %v2209, -inf
        %2232 = vmax.xlane.f32.xlu0 %v2231
        %v2233 = vpop.xlane.xlu0 %2232
        %v2234 = vsub.f32 %v2202, %v2212
        %v2235 = vsub.f32 %v2203, %v2215
        %v2236 = vsub.f32 %v2204, %v2218
        %v2237 = vsub.f32 %v2205, %v2221
        %v2238 = vsub.f32 %v2206, %v2224
        %v2239 = vsub.f32 %v2207, %v2227
        %v2240 = vsub.f32 %v2208, %v2230
        %v2241 = vsub.f32 %v2209, %v2233
        %v2242 = vmul.f32 %v2234, 1.442695
        %v2243 = vpow.pop %v2242
        %v2244 = vmul.f32 %v2235, 1.442695
        %v2245 = vpow.pop %v2244
        %v2246 = vmul.f32 %v2236, 1.442695
        %v2247 = vpow.pop %v2246
        %v2248 = vmul.f32 %v2237, 1.442695
        %v2249 = vpow.pop %v2248
        %v2250 = vmul.f32 %v2238, 1.442695
        %v2251 = vpow.pop %v2250
        %v2252 = vmul.f32 %v2239, 1.442695
        %v2253 = vpow.pop %v2252
        %v2254 = vmul.f32 %v2240, 1.442695
        %v2255 = vpow.pop %v2254
        %v2256 = vmul.f32 %v2241, 1.442695
        %v2257 = vpow.pop %v2256
        %v2258 = vsel %vm404, %v2243, 0.0
        %2259 = vadd.xlane.f32.xlu0 %v2258
        %v2260 = vpop.xlane.xlu0 %2259
        %v2261 = vsel %vm404, %v2245, 0.0
        %2262 = vadd.xlane.f32.xlu0 %v2261
        %v2263 = vpop.xlane.xlu0 %2262
        %v2264 = vsel %vm404, %v2247, 0.0
        %2265 = vadd.xlane.f32.xlu0 %v2264
        %v2266 = vpop.xlane.xlu0 %2265
        %v2267 = vsel %vm404, %v2249, 0.0
        %2268 = vadd.xlane.f32.xlu0 %v2267
        %v2269 = vpop.xlane.xlu0 %2268
        %v2270 = vsel %vm404, %v2251, 0.0
        %2271 = vadd.xlane.f32.xlu0 %v2270
        %v2272 = vpop.xlane.xlu0 %2271
        %v2273 = vsel %vm404, %v2253, 0.0
        %2274 = vadd.xlane.f32.xlu0 %v2273
        %v2275 = vpop.xlane.xlu0 %2274
        %v2276 = vsel %vm404, %v2255, 0.0
        %2277 = vadd.xlane.f32.xlu0 %v2276
        %v2278 = vpop.xlane.xlu0 %2277
        %v2279 = vsel %vm404, %v2257, 0.0
        %2280 = vadd.xlane.f32.xlu0 %v2279
        %v2281 = vpop.xlane.xlu0 %2280
        %v2282 = vrcp.pop %v2260
        %v2283 = vrcp.pop %v2263
        %v2284 = vrcp.pop %v2266
        %v2285 = vrcp.pop %v2269
        %v2286 = vrcp.pop %v2272
        %v2287 = vrcp.pop %v2275
        %v2288 = vrcp.pop %v2278
        %v2289 = vrcp.pop %v2281
        %v2290 = vmul.f32 %v2243, %v2282
        %v2291 = vmul.f32 %v2245, %v2283
        %v2292 = vmul.f32 %v2247, %v2284
        %v2293 = vmul.f32 %v2249, %v2285
        %v2294 = vmul.f32 %v2251, %v2286
        %v2295 = vmul.f32 %v2253, %v2287
        %v2296 = vmul.f32 %v2255, %v2288
        %v2297 = vmul.f32 %v2257, %v2289
        %2298 = vrot.lane.b32.xlu0 %v378, 40
        %v2299 = vpop.permute.xlu0 %2298
        %v2302 = vsel %vm404, %v2290, 0
        %2304 = vmatpush.msra.mxu0 0.0
        %2305 = vmatpush.msra.mxu0 0.0
        %2306 = vmatpush.msra.mxu0 0.0
        %2307 = vmatpush.msra.mxu0 0.0
        %2308 = vmatpush.msra.mxu0 0.0
        %2309 = vmatpush.msra.mxu0 0.0
        %2310 = vmatpush.msra.mxu0 0.0
        %2311 = vmatpush.msra.mxu0 0.0
        %2312 = vmatpush.msra.mxu0 0.0
        %2313 = vmatpush.msra.mxu0 0.0
        %2314 = vmatpush.msra.mxu0 0.0
        %2315 = vmatpush.msra.mxu0 0.0
        %2316 = vmatpush.msra.mxu0 0.0
        %2317 = vmatpush.msra.mxu0 0.0
        %2318 = vmatpush.msra.mxu0 0.0
        %2319 = vmatpush.msra.mxu0 %v2299
        %2320 = vmatmul.f32.gmra.mxu0 %v2302
        %v2321 = vpop.f32.mrf.mxu0
        %v2322 = vadd.f32 0.0, %v2321
        %2323 = vdwg.mxu0
        %2324 = vrot.lane.b32.xlu0 %v381, 40
        %v2325 = vpop.permute.xlu0 %2324
        %v2328 = vsel %vm404, %v2291, 0
        %2330 = vmatpush.msra.mxu0 0.0
        %2331 = vmatpush.msra.mxu0 0.0
        %2332 = vmatpush.msra.mxu0 0.0
        %2333 = vmatpush.msra.mxu0 0.0
        %2334 = vmatpush.msra.mxu0 0.0
        %2335 = vmatpush.msra.mxu0 0.0
        %2336 = vmatpush.msra.mxu0 0.0
        %2337 = vmatpush.msra.mxu0 0.0
        %2338 = vmatpush.msra.mxu0 0.0
        %2339 = vmatpush.msra.mxu0 0.0
        %2340 = vmatpush.msra.mxu0 0.0
        %2341 = vmatpush.msra.mxu0 0.0
        %2342 = vmatpush.msra.mxu0 0.0
        %2343 = vmatpush.msra.mxu0 0.0
        %2344 = vmatpush.msra.mxu0 0.0
        %2345 = vmatpush.msra.mxu0 %v2325
        %2346 = vmatmul.f32.gmra.mxu0 %v2328
        %v2347 = vpop.f32.mrf.mxu0
        %v2348 = vadd.f32 0.0, %v2347
        %2349 = vdwg.mxu0
        %2350 = vrot.lane.b32.xlu0 %v384, 40
        %v2351 = vpop.permute.xlu0 %2350
        %v2354 = vsel %vm404, %v2292, 0
        %2356 = vmatpush.msra.mxu0 0.0
        %2357 = vmatpush.msra.mxu0 0.0
        %2358 = vmatpush.msra.mxu0 0.0
        %2359 = vmatpush.msra.mxu0 0.0
        %2360 = vmatpush.msra.mxu0 0.0
        %2361 = vmatpush.msra.mxu0 0.0
        %2362 = vmatpush.msra.mxu0 0.0
        %2363 = vmatpush.msra.mxu0 0.0
        %2364 = vmatpush.msra.mxu0 0.0
        %2365 = vmatpush.msra.mxu0 0.0
        %2366 = vmatpush.msra.mxu0 0.0
        %2367 = vmatpush.msra.mxu0 0.0
        %2368 = vmatpush.msra.mxu0 0.0
        %2369 = vmatpush.msra.mxu0 0.0
        %2370 = vmatpush.msra.mxu0 0.0
        %2371 = vmatpush.msra.mxu0 %v2351
        %2372 = vmatmul.f32.gmra.mxu0 %v2354
        %v2373 = vpop.f32.mrf.mxu0
        %v2374 = vadd.f32 0.0, %v2373
        %2375 = vdwg.mxu0
        %2376 = vrot.lane.b32.xlu0 %v387, 40
        %v2377 = vpop.permute.xlu0 %2376
        %v2380 = vsel %vm404, %v2293, 0
        %2382 = vmatpush.msra.mxu0 0.0
        %2383 = vmatpush.msra.mxu0 0.0
        %2384 = vmatpush.msra.mxu0 0.0
        %2385 = vmatpush.msra.mxu0 0.0
        %2386 = vmatpush.msra.mxu0 0.0
        %2387 = vmatpush.msra.mxu0 0.0
        %2388 = vmatpush.msra.mxu0 0.0
        %2389 = vmatpush.msra.mxu0 0.0
        %2390 = vmatpush.msra.mxu0 0.0
        %2391 = vmatpush.msra.mxu0 0.0
        %2392 = vmatpush.msra.mxu0 0.0
        %2393 = vmatpush.msra.mxu0 0.0
        %2394 = vmatpush.msra.mxu0 0.0
        %2395 = vmatpush.msra.mxu0 0.0
        %2396 = vmatpush.msra.mxu0 0.0
        %2397 = vmatpush.msra.mxu0 %v2377
        %2398 = vmatmul.f32.gmra.mxu0 %v2380
        %v2399 = vpop.f32.mrf.mxu0
        %v2400 = vadd.f32 0.0, %v2399
        %2401 = vdwg.mxu0
        %2402 = vrot.lane.b32.xlu0 %v390, 40
        %v2403 = vpop.permute.xlu0 %2402
        %v2406 = vsel %vm404, %v2294, 0
        %2408 = vmatpush.msra.mxu0 0.0
        %2409 = vmatpush.msra.mxu0 0.0
        %2410 = vmatpush.msra.mxu0 0.0
        %2411 = vmatpush.msra.mxu0 0.0
        %2412 = vmatpush.msra.mxu0 0.0
        %2413 = vmatpush.msra.mxu0 0.0
        %2414 = vmatpush.msra.mxu0 0.0
        %2415 = vmatpush.msra.mxu0 0.0
        %2416 = vmatpush.msra.mxu0 0.0
        %2417 = vmatpush.msra.mxu0 0.0
        %2418 = vmatpush.msra.mxu0 0.0
        %2419 = vmatpush.msra.mxu0 0.0
        %2420 = vmatpush.msra.mxu0 0.0
        %2421 = vmatpush.msra.mxu0 0.0
        %2422 = vmatpush.msra.mxu0 0.0
        %2423 = vmatpush.msra.mxu0 %v2403
        %2424 = vmatmul.f32.gmra.mxu0 %v2406
        %v2425 = vpop.f32.mrf.mxu0
        %v2426 = vadd.f32 0.0, %v2425
        %2427 = vdwg.mxu0
        %2428 = vrot.lane.b32.xlu0 %v393, 40
        %v2429 = vpop.permute.xlu0 %2428
        %v2432 = vsel %vm404, %v2295, 0
        %2434 = vmatpush.msra.mxu0 0.0
        %2435 = vmatpush.msra.mxu0 0.0
        %2436 = vmatpush.msra.mxu0 0.0
        %2437 = vmatpush.msra.mxu0 0.0
        %2438 = vmatpush.msra.mxu0 0.0
        %2439 = vmatpush.msra.mxu0 0.0
        %2440 = vmatpush.msra.mxu0 0.0
        %2441 = vmatpush.msra.mxu0 0.0
        %2442 = vmatpush.msra.mxu0 0.0
        %2443 = vmatpush.msra.mxu0 0.0
        %2444 = vmatpush.msra.mxu0 0.0
        %2445 = vmatpush.msra.mxu0 0.0
        %2446 = vmatpush.msra.mxu0 0.0
        %2447 = vmatpush.msra.mxu0 0.0
        %2448 = vmatpush.msra.mxu0 0.0
        %2449 = vmatpush.msra.mxu0 %v2429
        %2450 = vmatmul.f32.gmra.mxu0 %v2432
        %v2451 = vpop.f32.mrf.mxu0
        %v2452 = vadd.f32 0.0, %v2451
        %2453 = vdwg.mxu0
        %2454 = vrot.lane.b32.xlu0 %v396, 40
        %v2455 = vpop.permute.xlu0 %2454
        %v2458 = vsel %vm404, %v2296, 0
        %2460 = vmatpush.msra.mxu0 0.0
        %2461 = vmatpush.msra.mxu0 0.0
        %2462 = vmatpush.msra.mxu0 0.0
        %2463 = vmatpush.msra.mxu0 0.0
        %2464 = vmatpush.msra.mxu0 0.0
        %2465 = vmatpush.msra.mxu0 0.0
        %2466 = vmatpush.msra.mxu0 0.0
        %2467 = vmatpush.msra.mxu0 0.0
        %2468 = vmatpush.msra.mxu0 0.0
        %2469 = vmatpush.msra.mxu0 0.0
        %2470 = vmatpush.msra.mxu0 0.0
        %2471 = vmatpush.msra.mxu0 0.0
        %2472 = vmatpush.msra.mxu0 0.0
        %2473 = vmatpush.msra.mxu0 0.0
        %2474 = vmatpush.msra.mxu0 0.0
        %2475 = vmatpush.msra.mxu0 %v2455
        %2476 = vmatmul.f32.gmra.mxu0 %v2458
        %v2477 = vpop.f32.mrf.mxu0
        %v2478 = vadd.f32 0.0, %v2477
        %2479 = vdwg.mxu0
        %2480 = vrot.lane.b32.xlu0 %v399, 40
        %v2481 = vpop.permute.xlu0 %2480
        %v2484 = vsel %vm404, %v2297, 0
        %2486 = vmatpush.msra.mxu0 0.0
        %2487 = vmatpush.msra.mxu0 0.0
        %2488 = vmatpush.msra.mxu0 0.0
        %2489 = vmatpush.msra.mxu0 0.0
        %2490 = vmatpush.msra.mxu0 0.0
        %2491 = vmatpush.msra.mxu0 0.0
        %2492 = vmatpush.msra.mxu0 0.0
        %2493 = vmatpush.msra.mxu0 0.0
        %2494 = vmatpush.msra.mxu0 0.0
        %2495 = vmatpush.msra.mxu0 0.0
        %2496 = vmatpush.msra.mxu0 0.0
        %2497 = vmatpush.msra.mxu0 0.0
        %2498 = vmatpush.msra.mxu0 0.0
        %2499 = vmatpush.msra.mxu0 0.0
        %2500 = vmatpush.msra.mxu0 0.0
        %2501 = vmatpush.msra.mxu0 %v2481
        %2502 = vmatmul.f32.gmra.mxu0 %v2484
        %v2503 = vpop.f32.mrf.mxu0
        %v2504 = vadd.f32 0.0, %v2503
        %2505 = vdwg.mxu0
        %2514 = vrot.lane.b32.xlu0 %v1266, 8
        %v2515 = vpop.permute.xlu0 %2514
        %2516 = vrot.lane.b32.xlu0 %v1292, 8
        %v2517 = vpop.permute.xlu0 %2516
        %2518 = vrot.lane.b32.xlu0 %v1318, 8
        %v2519 = vpop.permute.xlu0 %2518
        %2520 = vrot.lane.b32.xlu0 %v1344, 8
        %v2521 = vpop.permute.xlu0 %2520
        %2522 = vrot.lane.b32.xlu0 %v1370, 8
        %v2523 = vpop.permute.xlu0 %2522
        %2524 = vrot.lane.b32.xlu0 %v1396, 8
        %v2525 = vpop.permute.xlu0 %2524
        %2526 = vrot.lane.b32.xlu0 %v1422, 8
        %v2527 = vpop.permute.xlu0 %2526
        %2528 = vrot.lane.b32.xlu0 %v1448, 8
        %v2529 = vpop.permute.xlu0 %2528
        %2546 = vrot.lane.b32.xlu0 %v1794, 16
        %v2547 = vpop.permute.xlu0 %2546
        %2548 = vrot.lane.b32.xlu0 %v1820, 16
        %v2549 = vpop.permute.xlu0 %2548
        %2550 = vrot.lane.b32.xlu0 %v1846, 16
        %v2551 = vpop.permute.xlu0 %2550
        %2552 = vrot.lane.b32.xlu0 %v1872, 16
        %v2553 = vpop.permute.xlu0 %2552
        %2554 = vrot.lane.b32.xlu0 %v1898, 16
        %v2555 = vpop.permute.xlu0 %2554
        %2556 = vrot.lane.b32.xlu0 %v1924, 16
        %v2557 = vpop.permute.xlu0 %2556
        %2558 = vrot.lane.b32.xlu0 %v1950, 16
        %v2559 = vpop.permute.xlu0 %2558
        %2560 = vrot.lane.b32.xlu0 %v1976, 16
        %v2561 = vpop.permute.xlu0 %2560
        %2578 = vrot.lane.b32.xlu0 %v2322, 24
        %v2579 = vpop.permute.xlu0 %2578
        %2580 = vrot.lane.b32.xlu0 %v2348, 24
        %v2581 = vpop.permute.xlu0 %2580
        %2582 = vrot.lane.b32.xlu0 %v2374, 24
        %v2583 = vpop.permute.xlu0 %2582
        %2584 = vrot.lane.b32.xlu0 %v2400, 24
        %v2585 = vpop.permute.xlu0 %2584
        %2586 = vrot.lane.b32.xlu0 %v2426, 24
        %v2587 = vpop.permute.xlu0 %2586
        %2588 = vrot.lane.b32.xlu0 %v2452, 24
        %v2589 = vpop.permute.xlu0 %2588
        %2590 = vrot.lane.b32.xlu0 %v2478, 24
        %v2591 = vpop.permute.xlu0 %2590
        %2592 = vrot.lane.b32.xlu0 %v2504, 24
        %v2593 = vpop.permute.xlu0 %2592
        %v2602 = vsel %vm404, %v738, %v2515
        %v2603 = vsel %vm404, %v764, %v2517
        %v2604 = vsel %vm404, %v790, %v2519
        %v2605 = vsel %vm404, %v816, %v2521
        %v2606 = vsel %vm404, %v842, %v2523
        %v2607 = vsel %vm404, %v868, %v2525
        %v2608 = vsel %vm404, %v894, %v2527
        %v2609 = vsel %vm404, %v920, %v2529
        %vm2610 = vcmask 130048
        %v2611 = vsel %vm2610, %v2602, %v2547
        %v2612 = vsel %vm2610, %v2603, %v2549
        %v2613 = vsel %vm2610, %v2604, %v2551
        %v2614 = vsel %vm2610, %v2605, %v2553
        %v2615 = vsel %vm2610, %v2606, %v2555
        %v2616 = vsel %vm2610, %v2607, %v2557
        %v2617 = vsel %vm2610, %v2608, %v2559
        %v2618 = vsel %vm2610, %v2609, %v2561
        %vm2619 = vcmask 195584
        %v2620 = vsel %vm2619, %v2611, %v2579
        %v2621 = vsel %vm2619, %v2612, %v2581
        %v2622 = vsel %vm2619, %v2613, %v2583
        %v2623 = vsel %vm2619, %v2614, %v2585
        %v2624 = vsel %vm2619, %v2615, %v2587
        %v2625 = vsel %vm2619, %v2616, %v2589
        %v2626 = vsel %vm2619, %v2617, %v2591
        %v2627 = vsel %vm2619, %v2618, %v2593
        %v2628 = vld [vmem:[#allocation6] sm:$0xff]
        %v2629 = vld [vmem:[#allocation6 + $0x8] sm:$0xff]
        %v2630 = vld [vmem:[#allocation6 + $0x10] sm:$0xff]
        %v2631 = vld [vmem:[#allocation6 + $0x18] sm:$0xff]
        %v2632 = vld [vmem:[%s4] sm:$0x1]
        %v2634 = vperm.slane %v2632, 0
        %v2637 = vsel %vm335, %v2620, 0
        %v2640 = vsel %vm335, %v2621, 0
        %v2643 = vsel %vm335, %v2622, 0
        %v2646 = vsel %vm335, %v2623, 0
        %v2649 = vsel %vm335, %v2624, 0
        %v2652 = vsel %vm335, %v2625, 0
        %v2655 = vsel %vm335, %v2626, 0
        %v2658 = vsel %vm335, %v2627, 0
        %2660 = vmatpush.msra.mxu0 0.0
        %2661 = vmatpush.msra.mxu0 0.0
        %2662 = vmatpush.msra.mxu0 0.0
        %2663 = vmatpush.msra.mxu0 0.0
        %2664 = vmatpush.msra.mxu0 0.0
        %2665 = vmatpush.msra.mxu0 0.0
        %2666 = vmatpush.msra.mxu0 0.0
        %2667 = vmatpush.msra.mxu0 0.0
        %2668 = vmatpush.msra.mxu0 0.0
        %2669 = vmatpush.msra.mxu0 0.0
        %2670 = vmatpush.msra.mxu0 0.0
        %2671 = vmatpush.msra.mxu0 0.0
        %2672 = vmatpush.msra.mxu0 %v2631
        %2673 = vmatpush.msra.mxu0 %v2630
        %2674 = vmatpush.msra.mxu0 %v2629
        %2675 = vmatpush.msra.mxu0 %v2628
        %2676 = vmatmul.f32.gmra.mxu0 %v2637
        %v2677 = vpop.f32.mrf.mxu0
        %v2678 = vadd.f32 %v2634, %v2677
        %2679 = vmatmul.f32.gmra.mxu0 %v2640
        %v2680 = vpop.f32.mrf.mxu0
        %v2681 = vadd.f32 %v2634, %v2680
        %2682 = vmatmul.f32.gmra.mxu0 %v2643
        %v2683 = vpop.f32.mrf.mxu0
        %v2684 = vadd.f32 %v2634, %v2683
        %2685 = vmatmul.f32.gmra.mxu0 %v2646
        %v2686 = vpop.f32.mrf.mxu0
        %v2687 = vadd.f32 %v2634, %v2686
        %2688 = vmatmul.f32.gmra.mxu0 %v2649
        %v2689 = vpop.f32.mrf.mxu0
        %v2690 = vadd.f32 %v2634, %v2689
        %2691 = vmatmul.f32.gmra.mxu0 %v2652
        %v2692 = vpop.f32.mrf.mxu0
        %v2693 = vadd.f32 %v2634, %v2692
        %2694 = vmatmul.f32.gmra.mxu0 %v2655
        %v2695 = vpop.f32.mrf.mxu0
        %v2696 = vadd.f32 %v2634, %v2695
        %2697 = vmatmul.f32.gmra.mxu0 %v2658
        %v2698 = vpop.f32.mrf.mxu0
        %v2699 = vadd.f32 %v2634, %v2698
        %2700 = vdwg.mxu0
        %v2701 = vtanh.pop %v2678
        %v2702 = vtanh.pop %v2681
        %v2703 = vtanh.pop %v2684
        %v2704 = vtanh.pop %v2687
        %v2705 = vtanh.pop %v2690
        %v2706 = vtanh.pop %v2693
        %v2707 = vtanh.pop %v2696
        %v2708 = vtanh.pop %v2699
        %v2709 = vld [vmem:[%s5] sm:$0xff]
        %v2710 = vld [vmem:[%s5 + $0x8] sm:$0xff]
        %v2711 = vld [vmem:[%s5 + $0x10] sm:$0xff]
        %v2712 = vld [vmem:[%s5 + $0x18] sm:$0xff]
        %v2713 = vld [vmem:[#allocation2] sm:$0x1]
        %v2715 = vperm.slane %v2713, 0
        %v2718 = vsel %vm335, %v2701, 0
        %v2721 = vsel %vm335, %v2702, 0
        %v2724 = vsel %vm335, %v2703, 0
        %v2727 = vsel %vm335, %v2704, 0
        %v2730 = vsel %vm335, %v2705, 0
        %v2733 = vsel %vm335, %v2706, 0
        %v2736 = vsel %vm335, %v2707, 0
        %v2739 = vsel %vm335, %v2708, 0
        %2741 = vmatpush.msra.mxu0 0.0
        %2742 = vmatpush.msra.mxu0 0.0
        %2743 = vmatpush.msra.mxu0 0.0
        %2744 = vmatpush.msra.mxu0 0.0
        %2745 = vmatpush.msra.mxu0 0.0
        %2746 = vmatpush.msra.mxu0 0.0
        %2747 = vmatpush.msra.mxu0 0.0
        %2748 = vmatpush.msra.mxu0 0.0
        %2749 = vmatpush.msra.mxu0 0.0
        %2750 = vmatpush.msra.mxu0 0.0
        %2751 = vmatpush.msra.mxu0 0.0
        %2752 = vmatpush.msra.mxu0 0.0
        %2753 = vmatpush.msra.mxu0 %v2712
        %2754 = vmatpush.msra.mxu0 %v2711
        %2755 = vmatpush.msra.mxu0 %v2710
        %2756 = vmatpush.msra.mxu0 %v2709
        %2757 = vmatmul.f32.gmra.mxu0 %v2718
        %v2758 = vpop.f32.mrf.mxu0
        %v2759 = vadd.f32 %v2715, %v2758
        %2760 = vmatmul.f32.gmra.mxu0 %v2721
        %v2761 = vpop.f32.mrf.mxu0
        %v2762 = vadd.f32 %v2715, %v2761
        %2763 = vmatmul.f32.gmra.mxu0 %v2724
        %v2764 = vpop.f32.mrf.mxu0
        %v2765 = vadd.f32 %v2715, %v2764
        %2766 = vmatmul.f32.gmra.mxu0 %v2727
        %v2767 = vpop.f32.mrf.mxu0
        %v2768 = vadd.f32 %v2715, %v2767
        %2769 = vmatmul.f32.gmra.mxu0 %v2730
        %v2770 = vpop.f32.mrf.mxu0
        %v2771 = vadd.f32 %v2715, %v2770
        %2772 = vmatmul.f32.gmra.mxu0 %v2733
        %v2773 = vpop.f32.mrf.mxu0
        %v2774 = vadd.f32 %v2715, %v2773
        %2775 = vmatmul.f32.gmra.mxu0 %v2736
        %v2776 = vpop.f32.mrf.mxu0
        %v2777 = vadd.f32 %v2715, %v2776
        %2778 = vmatmul.f32.gmra.mxu0 %v2739
        %v2779 = vpop.f32.mrf.mxu0
        %v2780 = vadd.f32 %v2715, %v2779
        %2781 = vdwg.mxu0
        %vm2782 = vcmask 7168
        %v2783 = vsel %vm2782, %v2759, -inf
        %v2784 = vrot.slane %v2783, 4
        %v2785 = vmax.f32 %v2783, %v2784
        %v2786 = vrot.slane %v2785, 2
        %v2787 = vmax.f32 %v2785, %v2786
        %v2788 = vrot.slane %v2787, 1
        %v2789 = vmax.f32 %v2787, %v2788
        %v2790 = vsel %vm2782, %v2762, -inf
        %v2791 = vrot.slane %v2790, 4
        %v2792 = vmax.f32 %v2790, %v2791
        %v2793 = vrot.slane %v2792, 2
        %v2794 = vmax.f32 %v2792, %v2793
        %v2795 = vrot.slane %v2794, 1
        %v2796 = vmax.f32 %v2794, %v2795
        %v2797 = vsel %vm2782, %v2765, -inf
        %v2798 = vrot.slane %v2797, 4
        %v2799 = vmax.f32 %v2797, %v2798
        %v2800 = vrot.slane %v2799, 2
        %v2801 = vmax.f32 %v2799, %v2800
        %v2802 = vrot.slane %v2801, 1
        %v2803 = vmax.f32 %v2801, %v2802
        %v2804 = vsel %vm2782, %v2768, -inf
        %v2805 = vrot.slane %v2804, 4
        %v2806 = vmax.f32 %v2804, %v2805
        %v2807 = vrot.slane %v2806, 2
        %v2808 = vmax.f32 %v2806, %v2807
        %v2809 = vrot.slane %v2808, 1
        %v2810 = vmax.f32 %v2808, %v2809
        %v2811 = vsel %vm2782, %v2771, -inf
        %v2812 = vrot.slane %v2811, 4
        %v2813 = vmax.f32 %v2811, %v2812
        %v2814 = vrot.slane %v2813, 2
        %v2815 = vmax.f32 %v2813, %v2814
        %v2816 = vrot.slane %v2815, 1
        %v2817 = vmax.f32 %v2815, %v2816
        %v2818 = vsel %vm2782, %v2774, -inf
        %v2819 = vrot.slane %v2818, 4
        %v2820 = vmax.f32 %v2818, %v2819
        %v2821 = vrot.slane %v2820, 2
        %v2822 = vmax.f32 %v2820, %v2821
        %v2823 = vrot.slane %v2822, 1
        %v2824 = vmax.f32 %v2822, %v2823
        %v2825 = vsel %vm2782, %v2777, -inf
        %v2826 = vrot.slane %v2825, 4
        %v2827 = vmax.f32 %v2825, %v2826
        %v2828 = vrot.slane %v2827, 2
        %v2829 = vmax.f32 %v2827, %v2828
        %v2830 = vrot.slane %v2829, 1
        %v2831 = vmax.f32 %v2829, %v2830
        %v2832 = vsel %vm2782, %v2780, -inf
        %v2833 = vrot.slane %v2832, 4
        %v2834 = vmax.f32 %v2832, %v2833
        %v2835 = vrot.slane %v2834, 2
        %v2836 = vmax.f32 %v2834, %v2835
        %v2837 = vrot.slane %v2836, 1
        %v2838 = vmax.f32 %v2836, %v2837
        %v2839 = vsub.f32 %v2759, %v2789
        %v2840 = vsub.f32 %v2762, %v2796
        %v2841 = vsub.f32 %v2765, %v2803
        %v2842 = vsub.f32 %v2768, %v2810
        %v2843 = vsub.f32 %v2771, %v2817
        %v2844 = vsub.f32 %v2774, %v2824
        %v2845 = vsub.f32 %v2777, %v2831
        %v2846 = vsub.f32 %v2780, %v2838
        %v2847 = vmul.f32 %v2839, 1.442695
        %v2848 = vpow.pop %v2847
        %v2849 = vmul.f32 %v2840, 1.442695
        %v2850 = vpow.pop %v2849
        %v2851 = vmul.f32 %v2841, 1.442695
        %v2852 = vpow.pop %v2851
        %v2853 = vmul.f32 %v2842, 1.442695
        %v2854 = vpow.pop %v2853
        %v2855 = vmul.f32 %v2843, 1.442695
        %v2856 = vpow.pop %v2855
        %v2857 = vmul.f32 %v2844, 1.442695
        %v2858 = vpow.pop %v2857
        %v2859 = vmul.f32 %v2845, 1.442695
        %v2860 = vpow.pop %v2859
        %v2861 = vmul.f32 %v2846, 1.442695
        %v2862 = vpow.pop %v2861
        %v2863 = vsel %vm2782, %v2848, 0.0
        %v2864 = vrot.slane %v2863, 4
        %v2865 = vadd.f32 %v2863, %v2864
        %v2866 = vrot.slane %v2865, 2
        %v2867 = vadd.f32 %v2865, %v2866
        %v2868 = vrot.slane %v2867, 1
        %v2869 = vadd.f32 %v2867, %v2868
        %v2870 = vsel %vm2782, %v2850, 0.0
        %v2871 = vrot.slane %v2870, 4
        %v2872 = vadd.f32 %v2870, %v2871
        %v2873 = vrot.slane %v2872, 2
        %v2874 = vadd.f32 %v2872, %v2873
        %v2875 = vrot.slane %v2874, 1
        %v2876 = vadd.f32 %v2874, %v2875
        %v2877 = vsel %vm2782, %v2852, 0.0
        %v2878 = vrot.slane %v2877, 4
        %v2879 = vadd.f32 %v2877, %v2878
        %v2880 = vrot.slane %v2879, 2
        %v2881 = vadd.f32 %v2879, %v2880
        %v2882 = vrot.slane %v2881, 1
        %v2883 = vadd.f32 %v2881, %v2882
        %v2884 = vsel %vm2782, %v2854, 0.0
        %v2885 = vrot.slane %v2884, 4
        %v2886 = vadd.f32 %v2884, %v2885
        %v2887 = vrot.slane %v2886, 2
        %v2888 = vadd.f32 %v2886, %v2887
        %v2889 = vrot.slane %v2888, 1
        %v2890 = vadd.f32 %v2888, %v2889
        %v2891 = vsel %vm2782, %v2856, 0.0
        %v2892 = vrot.slane %v2891, 4
        %v2893 = vadd.f32 %v2891, %v2892
        %v2894 = vrot.slane %v2893, 2
        %v2895 = vadd.f32 %v2893, %v2894
        %v2896 = vrot.slane %v2895, 1
        %v2897 = vadd.f32 %v2895, %v2896
        %v2898 = vsel %vm2782, %v2858, 0.0
        %v2899 = vrot.slane %v2898, 4
        %v2900 = vadd.f32 %v2898, %v2899
        %v2901 = vrot.slane %v2900, 2
        %v2902 = vadd.f32 %v2900, %v2901
        %v2903 = vrot.slane %v2902, 1
        %v2904 = vadd.f32 %v2902, %v2903
        %v2905 = vsel %vm2782, %v2860, 0.0
        %v2906 = vrot.slane %v2905, 4
        %v2907 = vadd.f32 %v2905, %v2906
        %v2908 = vrot.slane %v2907, 2
        %v2909 = vadd.f32 %v2907, %v2908
        %v2910 = vrot.slane %v2909, 1
        %v2911 = vadd.f32 %v2909, %v2910
        %v2912 = vsel %vm2782, %v2862, 0.0
        %v2913 = vrot.slane %v2912, 4
        %v2914 = vadd.f32 %v2912, %v2913
        %v2915 = vrot.slane %v2914, 2
        %v2916 = vadd.f32 %v2914, %v2915
        %v2917 = vrot.slane %v2916, 1
        %v2918 = vadd.f32 %v2916, %v2917
        %v2919 = vrcp.pop %v2869
        %v2920 = vrcp.pop %v2876
        %v2921 = vrcp.pop %v2883
        %v2922 = vrcp.pop %v2890
        %v2923 = vrcp.pop %v2897
        %v2924 = vrcp.pop %v2904
        %v2925 = vrcp.pop %v2911
        %v2926 = vrcp.pop %v2918
        %v2927 = vmul.f32 %v2848, %v2919
        %v2928 = vmul.f32 %v2850, %v2920
        %v2929 = vmul.f32 %v2852, %v2921
        %v2930 = vmul.f32 %v2854, %v2922
        %v2931 = vmul.f32 %v2856, %v2923
        %v2932 = vmul.f32 %v2858, %v2924
        %v2933 = vmul.f32 %v2860, %v2925
        %v2934 = vmul.f32 %v2862, %v2926
        %2936 = vset.pattern.permute.xlu0 0
        %2937 = vperm.xlu0 %2936, %v2927
        %v2938 = vpop.permute.xlu0 %2937
        %2941 = vset.pattern.permute.xlu0 0
        %2942 = vperm.xlu0 %2941, %v2928
        %v2943 = vpop.permute.xlu0 %2942
        %2946 = vset.pattern.permute.xlu0 0
        %2947 = vperm.xlu0 %2946, %v2929
        %v2948 = vpop.permute.xlu0 %2947
        %2951 = vset.pattern.permute.xlu0 0
        %2952 = vperm.xlu0 %2951, %v2930
        %v2953 = vpop.permute.xlu0 %2952
        %2956 = vset.pattern.permute.xlu0 0
        %2957 = vperm.xlu0 %2956, %v2931
        %v2958 = vpop.permute.xlu0 %2957
        %2961 = vset.pattern.permute.xlu0 0
        %2962 = vperm.xlu0 %2961, %v2932
        %v2963 = vpop.permute.xlu0 %2962
        %2966 = vset.pattern.permute.xlu0 0
        %2967 = vperm.xlu0 %2966, %v2933
        %v2968 = vpop.permute.xlu0 %2967
        %2971 = vset.pattern.permute.xlu0 0
        %2972 = vperm.xlu0 %2971, %v2934
        %v2973 = vpop.permute.xlu0 %2972
        %v2975 = vmul.f32 %v2938, %v2620
        %v2976 = vmul.f32 %v2943, %v2621
        %v2977 = vmul.f32 %v2948, %v2622
        %v2978 = vmul.f32 %v2953, %v2623
        %v2979 = vmul.f32 %v2958, %v2624
        %v2980 = vmul.f32 %v2963, %v2625
        %v2981 = vmul.f32 %v2968, %v2626
        %v2982 = vmul.f32 %v2973, %v2627
        %v2983 = vsel %vm335, %v2975, 0.0
        %v2984 = vrot.slane %v2983, 4
        %v2985 = vadd.f32 %v2983, %v2984
        %v2986 = vrot.slane %v2985, 2
        %v2987 = vadd.f32 %v2985, %v2986
        %v2988 = vrot.slane %v2987, 1
        %v2989 = vadd.f32 %v2987, %v2988
        %v2990 = vsel %vm335, %v2976, 0.0
        %v2991 = vrot.slane %v2990, 4
        %v2992 = vadd.f32 %v2990, %v2991
        %v2993 = vrot.slane %v2992, 2
        %v2994 = vadd.f32 %v2992, %v2993
        %v2995 = vrot.slane %v2994, 1
        %v2996 = vadd.f32 %v2994, %v2995
        %v2997 = vsel %vm335, %v2977, 0.0
        %v2998 = vrot.slane %v2997, 4
        %v2999 = vadd.f32 %v2997, %v2998
        %v3000 = vrot.slane %v2999, 2
        %v3001 = vadd.f32 %v2999, %v3000
        %v3002 = vrot.slane %v3001, 1
        %v3003 = vadd.f32 %v3001, %v3002
        %v3004 = vsel %vm335, %v2978, 0.0
        %v3005 = vrot.slane %v3004, 4
        %v3006 = vadd.f32 %v3004, %v3005
        %v3007 = vrot.slane %v3006, 2
        %v3008 = vadd.f32 %v3006, %v3007
        %v3009 = vrot.slane %v3008, 1
        %v3010 = vadd.f32 %v3008, %v3009
        %v3011 = vsel %vm335, %v2979, 0.0
        %v3012 = vrot.slane %v3011, 4
        %v3013 = vadd.f32 %v3011, %v3012
        %v3014 = vrot.slane %v3013, 2
        %v3015 = vadd.f32 %v3013, %v3014
        %v3016 = vrot.slane %v3015, 1
        %v3017 = vadd.f32 %v3015, %v3016
        %v3018 = vsel %vm335, %v2980, 0.0
        %v3019 = vrot.slane %v3018, 4
        %v3020 = vadd.f32 %v3018, %v3019
        %v3021 = vrot.slane %v3020, 2
        %v3022 = vadd.f32 %v3020, %v3021
        %v3023 = vrot.slane %v3022, 1
        %v3024 = vadd.f32 %v3022, %v3023
        %v3025 = vsel %vm335, %v2981, 0.0
        %v3026 = vrot.slane %v3025, 4
        %v3027 = vadd.f32 %v3025, %v3026
        %v3028 = vrot.slane %v3027, 2
        %v3029 = vadd.f32 %v3027, %v3028
        %v3030 = vrot.slane %v3029, 1
        %v3031 = vadd.f32 %v3029, %v3030
        %v3032 = vsel %vm335, %v2982, 0.0
        %v3033 = vrot.slane %v3032, 4
        %v3034 = vadd.f32 %v3032, %v3033
        %v3035 = vrot.slane %v3034, 2
        %v3036 = vadd.f32 %v3034, %v3035
        %v3037 = vrot.slane %v3036, 1
        %v3038 = vadd.f32 %v3036, %v3037
        %vm3047 = vcmask 1041409
        %v3048 = vsel %vm3047, %v2996, %v2989
        %vm3049 = vcmask 1042434
        %v3050 = vsel %vm3049, %v3003, %v3048
        %vm3051 = vcmask 1043459
        %v3052 = vsel %vm3051, %v3010, %v3050
        %vm3053 = vcmask 1044484
        %v3054 = vsel %vm3053, %v3017, %v3052
        %vm3055 = vcmask 1045509
        %v3056 = vsel %vm3055, %v3024, %v3054
        %vm3057 = vcmask 1046534
        %v3058 = vsel %vm3057, %v3031, %v3056
        %vm3059 = vcmask 1047559
        %v3060 = vsel %vm3059, %v3038, %v3058
        %3062 = vst.msk [vmem:[%s317] sm:$0xff] %vm335, %v3060
        %s3063 = sand.u32 %s187, 1
        %s3064 = scalar_lea.sflag [#allocation5], %s3063
        %s3065 = sand.u32 %s187, 1
        %s3066 = smul.addr %s3065, 8
        %s3067 = scalar_lea.vmem [#allocation8], %s3066
        // Predicated region
        $region57: #{tpu_custom_call.1} parent=47 // pred_check
          %p3068 = pneg %p197
        $region58: #{tpu_custom_call.1} parent=47 // pred_check_branch
          %3070 = sbr.rel (%p3068) target = $region60
        $region59: #{tpu_custom_call.1} parent=47 // pred_region
          %3072 = vsyncadd %s3064, 0
          %s3073 = smul.addr %s27, 8
          %s3074 = scalar_lea.hbm %s7, %s3073
          %s3076 = sshll.u32 %s3067, 4
          %s3077 = int_to_ptr.vmem [resolvable:$true] %s3076
          %s3078 = sshll.u32 %s3074, 4
          %s3079 = int_to_ptr.hbm [resolvable:$true] %s3078
          %3081 = dma.vmem_to_hbm [thread:$0]  %s3077, 128, %s3079, %s3064
        $region60: #{tpu_custom_call.1} parent=47 // pred_fallthru
          _
      $region48: #{tpu_custom_call.1} parent=5 // pred_fallthru
        _
      %p3082 = scmp.le.s32.totalorder 2, %s22
      // Predicated region
      $region61: #{tpu_custom_call.1} parent=5 // pred_check
        %p3083 = pneg %p3082
      $region62: #{tpu_custom_call.1} parent=5 // pred_check_branch
        %3085 = sbr.rel (%p3083) target = $region64
      $region63: #{tpu_custom_call.1} parent=5 // pred_region
        %s3086 = ssub.s32 %s22, 2
        // Predicated region
        $region65: #{tpu_custom_call.1} parent=63 // pred_check
          %p3087 = pneg %p203
        $region66: #{tpu_custom_call.1} parent=63 // pred_check_branch
          %3089 = sbr.rel (%p3087) target = $region68
        $region67: #{tpu_custom_call.1} parent=63 // pred_region
          %s3090 = sand.u32 %s188, 1
          %s3091 = scalar_lea.sflag [#allocation5], %s3090
          %s3092 = sand.u32 %s188, 1
          %s3093 = smul.addr %s3092, 8
          %s3094 = scalar_lea.vmem [#allocation8], %s3093
          %3096 = dma.done %s3091, 128
        $region68: #{tpu_custom_call.1} parent=63 // pred_fallthru
          _
      $region64: #{tpu_custom_call.1} parent=5 // pred_fallthru
        _
    $region6: #{tpu_custom_call.1} parent=1 // loop_footer
      %s26 = sadd.s32 1, %s22
    $region7: #{tpu_custom_call.1} parent=1 // loop_footer_branch
      %21 = sbr.rel target = $region3
    $region8: #{tpu_custom_call.1} parent=1 // loop_exit
      _
    %3097 = vsyncpa [#allocation4], 1
    %s3098 = scalar_lea.sflag [#allocation4], 1
    %3099 = vsyncpa %s3098, 1
    %3100 = vsyncpa [#allocation7], 1
    %3101 = vsyncpa [#allocation5], 1
    %s3102 = scalar_lea.sflag [#allocation5], 1
    %3103 = vsyncpa %s3102, 1

</llo_original>
